<compile_context>
chip_gen: v7x
topology: tpu7x:2x2x1
jax: 0.10.0
libtpu: 0.0.40
codegen_flags: <defaults>
</compile_context>

<pallas_src>
import math

import jax
import jax.numpy as jnp
from jax.experimental import pallas as pl
from jax.experimental.pallas import tpu as pltpu


def _round_up(x, m):
    return ((x + m - 1) // m) * m


def _cdiv(a, b):
    return -(-a // b)


def _make_kernel(n_layers, in_channels):
    def kernel(x_ref, wt_ref, b_ref, *out_refs):
        # x_ref : (TN, C)             batch tile of coordinates (natural layout)
        # wt_ref: (n_layers, C, ic)   per-chunk weight, pre-transposed (resident)
        # b_ref : (n_layers, 1, ic)   per-chunk bias (resident)
        # out   : n_layers x (TN, ic) natural-layout chunk tiles
        x = x_ref[...]
        for l in range(n_layers):
            w_l = wt_ref[l]                                   # (C, ic)
            # Fold bias into the first FMA; (TN,1)*(1,ic) broadcasts on VPU.
            acc = x[:, 0:1] * w_l[0:1, :] + b_ref[l]
            for c in range(1, in_channels):
                acc = acc + x[:, c:c + 1] * w_l[c:c + 1, :]
            out_refs[l][...] = jnp.sin(acc).astype(out_refs[l].dtype)
    return kernel


def fourier_injection(x, w, b, n_layers, *, tile_n=2048, out_dtype=jnp.float32):
    """Forward of FourierInjection.

    x: (N, C) float32 coordinates, w: (O, C) Linear weight (PyTorch layout),
    b: (O,) bias, with O == interm_channels * n_layers.
    Returns a tuple of n_layers arrays, each (N, O // n_layers) in out_dtype.
    """
    N, C = x.shape
    O, Cw = w.shape
    assert C == Cw and O % n_layers == 0
    ic = O // n_layers

    # Batch tile: big enough to amortize the ~0.35us per-grid-step overhead,
    # but small enough that the grid has >= 4 roughly equal steps when the
    # batch allows it (v7x megacore balance across 2 TensorCores).
    n128 = _round_up(max(N, 1), 128)
    tile = max(128, min(tile_n, _round_up(_cdiv(n128, 4), 128)))
    n_pad = _round_up(N, tile)

    x_in = x if n_pad == N else jnp.pad(x, ((0, n_pad - N), (0, 0)))
    wt = jnp.transpose(w.reshape(n_layers, ic, C), (0, 2, 1))     # (L, C, ic)
    b3 = b.reshape(n_layers, 1, ic)                               # (L, 1, ic)

    out_bytes = N * O * jnp.dtype(out_dtype).itemsize
    cost = pl.CostEstimate(
        flops=2 * N * O * C,
        transcendentals=N * O,
        bytes_accessed=4 * N * C + 4 * O * C + 4 * O + out_bytes)

    grid = n_pad // tile
    outs = pl.pallas_call(
        _make_kernel(n_layers, C),
        out_shape=tuple(jax.ShapeDtypeStruct((n_pad, ic), out_dtype)
                        for _ in range(n_layers)),
        grid_spec=pltpu.PrefetchScalarGridSpec(
            num_scalar_prefetch=0,
            grid=(grid,),
            in_specs=[
                pl.BlockSpec((tile, C), lambda i: (i, 0)),             # coords tile
                pl.BlockSpec((n_layers, C, ic), lambda i: (0, 0, 0)),  # weights (resident)
                pl.BlockSpec((n_layers, 1, ic), lambda i: (0, 0, 0)),  # bias (resident)
            ],
            out_specs=tuple(pl.BlockSpec((tile, ic), lambda i: (i, 0))
                            for _ in range(n_layers)),
        ),
        compiler_params=pltpu.CompilerParams(
            dimension_semantics=("parallel",)),
        cost_estimate=cost,
    )(x_in, wt, b3)

    if n_pad != N:
        outs = tuple(o[:N] for o in outs)
    return tuple(outs)


def fourier_injection_ref(x, w, b, n_layers):
    out = jnp.sin(x @ w.T + b)
    return tuple(jnp.split(out, n_layers, axis=-1))


if __name__ == "__main__":
    key = jax.random.PRNGKey(0)
    k_x, k_w, k_b = jax.random.split(key, 3)

    # Module config: in_channels=2 coordinates, interm_channels=32, n_layers=2
    # -> x_map = nn.Linear(2, 64), scale = 1.0.
    in_channels = 2
    interm_channels = 32
    n_layers = 2
    scale = 1.0
    O = interm_channels * n_layers                  # 64
    N = 512                                         # batch of coordinate points

    x = jax.random.normal(k_x, (N, in_channels), dtype=jnp.float32)

    # nn.Linear(C, O) default init: W ~ U(-1/sqrt(C), 1/sqrt(C)), then W *= scale
    # and bias ~ U(-pi, pi), per the module's __init__.
    bound = 1.0 / math.sqrt(in_channels)
    w = jax.random.uniform(k_w, (O, in_channels), jnp.float32, -bound, bound) * scale
    b = jax.random.uniform(k_b, (O,), jnp.float32, -math.pi, math.pi)

    refs = fourier_injection_ref(x, w, b, n_layers)

    # 1) f32 output path (matches the PyTorch module's numerics)
    outs = jax.block_until_ready(fourier_injection(x, w, b, n_layers))
    for o, r in zip(outs, refs):
        assert o.shape == (N, interm_channels), o.shape
        assert jnp.allclose(o, r, atol=1e-5, rtol=1e-5), float(jnp.max(jnp.abs(o - r)))

    # 2) bf16 output path (halved HBM writeback; accuracy trade-off for the DEQ solver)
    outs_bf16 = jax.block_until_ready(
        fourier_injection(x, w, b, n_layers, out_dtype=jnp.bfloat16))
    for o, r in zip(outs_bf16, refs):
        assert o.dtype == jnp.bfloat16
        err = float(jnp.max(jnp.abs(o.astype(jnp.float32) - r)))
        assert err < 2e-2, err

    # 3) ragged batch (exercises the pad + slice path)
    N2 = 500
    x2 = x[:N2]
    refs2 = fourier_injection_ref(x2, w, b, n_layers)
    outs2 = jax.block_until_ready(fourier_injection(x2, w, b, n_layers))
    for o, r in zip(outs2, refs2):
        assert o.shape == (N2, interm_channels), o.shape
        assert jnp.allclose(o, r, atol=1e-5, rtol=1e-5), float(jnp.max(jnp.abs(o - r)))

    print("KERNEL_OK")
</pallas_src>

<mosaic_0001>
module attributes {stable_mosaic.version = 11 : i64} {
  func.func @kernel(%arg0: i32, %arg1: memref<128x2xf32, #tpu.memory_space<vmem>>, %arg2: memref<2x2x32xf32, #tpu.memory_space<vmem>>, %arg3: memref<2x1x32xf32, #tpu.memory_space<vmem>>, %arg4: memref<128x32xf32, #tpu.memory_space<vmem>>, %arg5: memref<128x32xf32, #tpu.memory_space<vmem>>) attributes {dimension_semantics = [#tpu.dimension_semantics<parallel>], iteration_bounds = array<i64: 4>, scalar_prefetch = 0 : i64, scratch_operands = 0 : i64, tpu.core_type = #tpu.core_type<tc>, window_params = [{transform_indices = @transform_0, window_bounds = array<i64: 128, 2>}, {pipeline_mode = #tpu.pipeline_mode<synchronous>, transform_indices = @transform_1, window_bounds = array<i64: 2, 2, 32>}, {pipeline_mode = #tpu.pipeline_mode<synchronous>, transform_indices = @transform_2, window_bounds = array<i64: 2, 1, 32>}, {transform_indices = @transform_3, window_bounds = array<i64: 128, 32>}, {transform_indices = @transform_4, window_bounds = array<i64: 128, 32>}]} {
    %c0 = arith.constant 0 : index
    %c0_0 = arith.constant 0 : index
    %0 = vector.load %arg1[%c0, %c0_0] : memref<128x2xf32, #tpu.memory_space<vmem>>, vector<128x2xf32>
    %c0_1 = arith.constant 0 : index
    %c0_2 = arith.constant 0 : index
    %c0_3 = arith.constant 0 : index
    %1 = vector.load %arg2[%c0_1, %c0_2, %c0_3] : memref<2x2x32xf32, #tpu.memory_space<vmem>>, vector<1x2x32xf32>
    %2 = vector.shape_cast %1 : vector<1x2x32xf32> to vector<2x32xf32>
    %3 = vector.extract_strided_slice %0 {offsets = [0, 0], sizes = [128, 1], strides = [1, 1]} : vector<128x2xf32> to vector<128x1xf32>
    %4 = vector.extract_strided_slice %2 {offsets = [0, 0], sizes = [1, 32], strides = [1, 1]} : vector<2x32xf32> to vector<1x32xf32>
    %5 = vector.broadcast %3 : vector<128x1xf32> to vector<128x32xf32>
    %6 = vector.broadcast %4 : vector<1x32xf32> to vector<128x32xf32>
    %7 = arith.mulf %5, %6 : vector<128x32xf32>
    %c0_4 = arith.constant 0 : index
    %c0_5 = arith.constant 0 : index
    %c0_6 = arith.constant 0 : index
    %8 = vector.load %arg3[%c0_4, %c0_5, %c0_6] : memref<2x1x32xf32, #tpu.memory_space<vmem>>, vector<1x1x32xf32>
    %9 = vector.shape_cast %8 : vector<1x1x32xf32> to vector<1x32xf32>
    %10 = vector.broadcast %9 : vector<1x32xf32> to vector<128x32xf32>
    %11 = arith.addf %7, %10 : vector<128x32xf32>
    %12 = vector.extract_strided_slice %0 {offsets = [0, 1], sizes = [128, 1], strides = [1, 1]} : vector<128x2xf32> to vector<128x1xf32>
    %13 = vector.extract_strided_slice %2 {offsets = [1, 0], sizes = [1, 32], strides = [1, 1]} : vector<2x32xf32> to vector<1x32xf32>
    %14 = vector.broadcast %12 : vector<128x1xf32> to vector<128x32xf32>
    %15 = vector.broadcast %13 : vector<1x32xf32> to vector<128x32xf32>
    %16 = arith.mulf %14, %15 : vector<128x32xf32>
    %17 = arith.addf %11, %16 : vector<128x32xf32>
    %18 = math.sin %17 : vector<128x32xf32>
    %c0_7 = arith.constant 0 : index
    %c0_8 = arith.constant 0 : index
    %19 = vector.load %arg4[%c0_7, %c0_8] : memref<128x32xf32, #tpu.memory_space<vmem>>, vector<128x32xf32>
    tpu.vector_store %arg4[%c0_7, %c0_8], %18 {strides = array<i32>} : memref<128x32xf32, #tpu.memory_space<vmem>>, vector<128x32xf32>,
    %c1 = arith.constant 1 : index
    %c0_9 = arith.constant 0 : index
    %c0_10 = arith.constant 0 : index
    %20 = vector.load %arg2[%c1, %c0_9, %c0_10] : memref<2x2x32xf32, #tpu.memory_space<vmem>>, vector<1x2x32xf32>
    %21 = vector.shape_cast %20 : vector<1x2x32xf32> to vector<2x32xf32>
    %22 = vector.extract_strided_slice %0 {offsets = [0, 0], sizes = [128, 1], strides = [1, 1]} : vector<128x2xf32> to vector<128x1xf32>
    %23 = vector.extract_strided_slice %21 {offsets = [0, 0], sizes = [1, 32], strides = [1, 1]} : vector<2x32xf32> to vector<1x32xf32>
    %24 = vector.broadcast %22 : vector<128x1xf32> to vector<128x32xf32>
    %25 = vector.broadcast %23 : vector<1x32xf32> to vector<128x32xf32>
    %26 = arith.mulf %24, %25 : vector<128x32xf32>
    %c1_11 = arith.constant 1 : index
    %c0_12 = arith.constant 0 : index
    %c0_13 = arith.constant 0 : index
    %27 = vector.load %arg3[%c1_11, %c0_12, %c0_13] : memref<2x1x32xf32, #tpu.memory_space<vmem>>, vector<1x1x32xf32>
    %28 = vector.shape_cast %27 : vector<1x1x32xf32> to vector<1x32xf32>
    %29 = vector.broadcast %28 : vector<1x32xf32> to vector<128x32xf32>
    %30 = arith.addf %26, %29 : vector<128x32xf32>
    %31 = vector.extract_strided_slice %0 {offsets = [0, 1], sizes = [128, 1], strides = [1, 1]} : vector<128x2xf32> to vector<128x1xf32>
    %32 = vector.extract_strided_slice %21 {offsets = [1, 0], sizes = [1, 32], strides = [1, 1]} : vector<2x32xf32> to vector<1x32xf32>
    %33 = vector.broadcast %31 : vector<128x1xf32> to vector<128x32xf32>
    %34 = vector.broadcast %32 : vector<1x32xf32> to vector<128x32xf32>
    %35 = arith.mulf %33, %34 : vector<128x32xf32>
    %36 = arith.addf %30, %35 : vector<128x32xf32>
    %37 = math.sin %36 : vector<128x32xf32>
    %c0_14 = arith.constant 0 : index
    %c0_15 = arith.constant 0 : index
    %38 = vector.load %arg5[%c0_14, %c0_15] : memref<128x32xf32, #tpu.memory_space<vmem>>, vector<128x32xf32>
    tpu.vector_store %arg5[%c0_14, %c0_15], %37 {strides = array<i32>} : memref<128x32xf32, #tpu.memory_space<vmem>>, vector<128x32xf32>,
    return
  }
  func.func @transform_0(%arg0: i32) -> (i32, i32) {
    %c0_i32 = arith.constant 0 : i32
    %c0_i32_0 = arith.constant 0 : i32
    return %arg0, %c0_i32 : i32, i32
  }
  func.func @transform_1(%arg0: i32) -> (i32, i32, i32) {
    %c0_i32 = arith.constant 0 : i32
    %c0_i32_0 = arith.constant 0 : i32
    %c0_i32_1 = arith.constant 0 : i32
    %c0_i32_2 = arith.constant 0 : i32
    return %c0_i32, %c0_i32_0, %c0_i32_1 : i32, i32, i32
  }
  func.func @transform_2(%arg0: i32) -> (i32, i32, i32) {
    %c0_i32 = arith.constant 0 : i32
    %c0_i32_0 = arith.constant 0 : i32
    %c0_i32_1 = arith.constant 0 : i32
    %c0_i32_2 = arith.constant 0 : i32
    return %c0_i32, %c0_i32_0, %c0_i32_1 : i32, i32, i32
  }
  func.func @transform_3(%arg0: i32) -> (i32, i32) {
    %c0_i32 = arith.constant 0 : i32
    %c0_i32_0 = arith.constant 0 : i32
    return %arg0, %c0_i32 : i32, i32
  }
  func.func @transform_4(%arg0: i32) -> (i32, i32) {
    %c0_i32 = arith.constant 0 : i32
    %c0_i32_0 = arith.constant 0 : i32
    return %arg0, %c0_i32 : i32, i32
  }
}

</mosaic_0001>

<llo_original>
// kernel: tpu_custom_call.1
$region0: #{tpu_custom_call.1}
  #allocation0 [shape = 'u32[]', space=smem, size = 0x4, offset = 0x4, fixed_abs, tag = 'smem constant byte address 0x4 - core index']
  #allocation1 [shape = 'u32[144,128]{1,0:T(1,128)}', space=vmem, size = 0x12000, scoped, tag = 'internal scratch']
  %s0 = inlined_call_operand.vmem [shape: f32[512,2], index: 0, kind: input, shape index: {}]
  %s1 = inlined_call_operand.vmem [shape: f32[2,2,32], index: 1, kind: input, shape index: {}]
  %s2 = inlined_call_operand.vmem [shape: f32[2,1,32], index: 2, kind: input, shape index: {}]
  %s3 = inlined_call_operand.vmem [shape: f32[512,32], index: 3, kind: output, shape index: {0}]
  %s4 = inlined_call_operand.vmem [shape: f32[512,32], index: 4, kind: output, shape index: {1}]
  %5 = xla_tuple %s3, %s4
  %s6 = sld [smem:[#allocation0]]
  $region53: #{tpu_custom_call.1} parent=0
    _
  %s8 = ssub.s32 1, %s6
  %s9 = scalar_select 0, %s8, %s6
  loop: start=0, step=1, limit=6
  $region2: #{tpu_custom_call.1} parent=0 // loop_pre_header
    _
  $region3: #{tpu_custom_call.1} parent=0 // loop_header
    %s11 = sphi 0, %s15
    %p12 = scmp.ge.s32.totalorder %s11, 6
    %s21 = sphi 0, %s23
    %s24 = sphi 0, %s21
    %s25 = sphi 0, %s24
    %s41 = sphi 0, %s25
    %s45 = sphi 0, %s45
    %s47 = sphi 0, %s45
    %s48 = sphi 0, %s47
    %s62 = sphi 0, %s48
    %s66 = sphi 0, %s66
    %s68 = sphi 0, %s66
    %s69 = sphi 0, %s68
    %s83 = sphi 0, %s69
    %s89 = sphi 0, %s91
    %s92 = sphi 0, %s89
    %s93 = sphi 0, %s92
    %s109 = sphi 0, %s93
    %s115 = sphi 0, %s117
    %s118 = sphi 0, %s115
    %s119 = sphi 0, %s118
    %s135 = sphi 0, %s119
  $region4: #{tpu_custom_call.1} parent=0 // loop_header_branch
    %14 = sbr.rel (%p12) target = $region8
  $region5: #{tpu_custom_call.1} parent=0 // loop_body
    %s16 = ssub.s32 %s11, 1
    %s17 = ssub.s32 %s11, 2
    %s18 = sadd.s32 %s11, 1
    %s19 = ssub.s32 %s11, %s18
    %p20 = scmp.eq.s32.totalorder %s19, 0
    %s22 = sadd.s32 %s21, 1
    %s23 = scalar_select %p20, %s21, %s22
    %p26 = pneg %p20
    %p27 = scmp.eq.s32.totalorder %s11, 3
    %p28 = por %p26, %p27
    %p29 = scmp.ne.s32.totalorder %s21, %s24
    %p30 = scmp.eq.s32.totalorder %s11, 0
    %p31 = por %p29, %p30
    %p32 = scmp.ne.s32.totalorder %s21, %s24
    %p33 = scmp.eq.s32.totalorder %s16, 3
    %p34 = por %p32, %p33
    %p35 = scmp.ne.s32.totalorder %s24, %s25
    %p36 = scmp.eq.s32.totalorder %s16, 0
    %p37 = por %p35, %p36
    %p38 = scmp.ne.s32.totalorder %s24, %s25
    %p39 = scmp.eq.s32.totalorder %s17, 3
    %p40 = por %p38, %p39
    %p42 = scmp.ne.s32.totalorder %s25, %s41
    %p43 = scmp.eq.s32.totalorder %s17, 0
    %p44 = por %p42, %p43
    %s46 = sadd.s32 %s45, 1
    %p49 = scmp.eq.s32.totalorder %s11, 3
    %p50 = scmp.ne.s32.totalorder %s45, %s47
    %p51 = scmp.eq.s32.totalorder %s11, 0
    %p52 = por %p50, %p51
    %p53 = scmp.ne.s32.totalorder %s45, %s47
    %p54 = scmp.eq.s32.totalorder %s16, 3
    %p55 = por %p53, %p54
    %p56 = scmp.ne.s32.totalorder %s47, %s48
    %p57 = scmp.eq.s32.totalorder %s16, 0
    %p58 = por %p56, %p57
    %p59 = scmp.ne.s32.totalorder %s47, %s48
    %p60 = scmp.eq.s32.totalorder %s17, 3
    %p61 = por %p59, %p60
    %p63 = scmp.ne.s32.totalorder %s48, %s62
    %p64 = scmp.eq.s32.totalorder %s17, 0
    %p65 = por %p63, %p64
    %s67 = sadd.s32 %s66, 1
    %p70 = scmp.eq.s32.totalorder %s11, 3
    %p71 = scmp.ne.s32.totalorder %s66, %s68
    %p72 = scmp.eq.s32.totalorder %s11, 0
    %p73 = por %p71, %p72
    %p74 = scmp.ne.s32.totalorder %s66, %s68
    %p75 = scmp.eq.s32.totalorder %s16, 3
    %p76 = por %p74, %p75
    %p77 = scmp.ne.s32.totalorder %s68, %s69
    %p78 = scmp.eq.s32.totalorder %s16, 0
    %p79 = por %p77, %p78
    %p80 = scmp.ne.s32.totalorder %s68, %s69
    %p81 = scmp.eq.s32.totalorder %s17, 3
    %p82 = por %p80, %p81
    %p84 = scmp.ne.s32.totalorder %s69, %s83
    %p85 = scmp.eq.s32.totalorder %s17, 0
    %p86 = por %p84, %p85
    %s87 = ssub.s32 %s11, %s18
    %p88 = scmp.eq.s32.totalorder %s87, 0
    %s90 = sadd.s32 %s89, 1
    %s91 = scalar_select %p88, %s89, %s90
    %p94 = pneg %p88
    %p95 = scmp.eq.s32.totalorder %s11, 3
    %p96 = por %p94, %p95
    %p97 = scmp.ne.s32.totalorder %s89, %s92
    %p98 = scmp.eq.s32.totalorder %s11, 0
    %p99 = por %p97, %p98
    %p100 = scmp.ne.s32.totalorder %s89, %s92
    %p101 = scmp.eq.s32.totalorder %s16, 3
    %p102 = por %p100, %p101
    %p103 = scmp.ne.s32.totalorder %s92, %s93
    %p104 = scmp.eq.s32.totalorder %s16, 0
    %p105 = por %p103, %p104
    %p106 = scmp.ne.s32.totalorder %s92, %s93
    %p107 = scmp.eq.s32.totalorder %s17, 3
    %p108 = por %p106, %p107
    %p110 = scmp.ne.s32.totalorder %s93, %s109
    %p111 = scmp.eq.s32.totalorder %s17, 0
    %p112 = por %p110, %p111
    %s113 = ssub.s32 %s11, %s18
    %p114 = scmp.eq.s32.totalorder %s113, 0
    %s116 = sadd.s32 %s115, 1
    %s117 = scalar_select %p114, %s115, %s116
    %p120 = pneg %p114
    %p121 = scmp.eq.s32.totalorder %s11, 3
    %p122 = por %p120, %p121
    %p123 = scmp.ne.s32.totalorder %s115, %s118
    %p124 = scmp.eq.s32.totalorder %s11, 0
    %p125 = por %p123, %p124
    %p126 = scmp.ne.s32.totalorder %s115, %s118
    %p127 = scmp.eq.s32.totalorder %s16, 3
    %p128 = por %p126, %p127
    %p129 = scmp.ne.s32.totalorder %s118, %s119
    %p130 = scmp.eq.s32.totalorder %s16, 0
    %p131 = por %p129, %p130
    %p132 = scmp.ne.s32.totalorder %s118, %s119
    %p133 = scmp.eq.s32.totalorder %s17, 3
    %p134 = por %p132, %p133
    %p136 = scmp.ne.s32.totalorder %s119, %s135
    %p137 = scmp.eq.s32.totalorder %s17, 0
    %p138 = por %p136, %p137
    %p139 = scmp.le.s32.totalorder 1, %s11
    %p140 = scmp.lt.s32.totalorder %s11, 5
    %p141 = pnand %p139, %p140
    %p142 = pneg %p141
    // Predicated region
    $region9: #{tpu_custom_call.1} parent=5 // pred_check
      _
    $region10: #{tpu_custom_call.1} parent=5 // pred_check_branch
      %144 = sbr.rel (%p141) target = $region12
    $region11: #{tpu_custom_call.1} parent=5 // pred_region
      %s145 = ssub.s32 %s11, 1
      // Predicated region
      $region13: #{tpu_custom_call.1} parent=11 // pred_check
        %p146 = pneg %p58
      $region14: #{tpu_custom_call.1} parent=11 // pred_check_branch
        %148 = sbr.rel (%p146) target = $region16
      $region15: #{tpu_custom_call.1} parent=11 // pred_region
        _
      $region16: #{tpu_custom_call.1} parent=11 // pred_fallthru
        _
      // Predicated region
      $region17: #{tpu_custom_call.1} parent=11 // pred_check
        %p149 = pneg %p79
      $region18: #{tpu_custom_call.1} parent=11 // pred_check_branch
        %151 = sbr.rel (%p149) target = $region20
      $region19: #{tpu_custom_call.1} parent=11 // pred_region
        _
      $region20: #{tpu_custom_call.1} parent=11 // pred_fallthru
        _
    $region12: #{tpu_custom_call.1} parent=5 // pred_fallthru
      _
    %p152 = scmp.lt.s32.totalorder %s11, 4
    // Predicated region
    $region21: #{tpu_custom_call.1} parent=5 // pred_check
      %p153 = pneg %p152
    $region22: #{tpu_custom_call.1} parent=5 // pred_check_branch
      %155 = sbr.rel (%p153) target = $region24
    $region23: #{tpu_custom_call.1} parent=5 // pred_region
      // Predicated region
      $region25: #{tpu_custom_call.1} parent=23 // pred_check
        %p156 = pneg %p31
      $region26: #{tpu_custom_call.1} parent=23 // pred_check_branch
        %158 = sbr.rel (%p156) target = $region28
      $region27: #{tpu_custom_call.1} parent=23 // pred_region
        %s159 = smul.u32 16, %s11
        %p160 = scmp.lt.s32.totalorder %s159, 63
        %s161 = scalar_select %p160, %s159, 63
        %s162 = smul.addr %s161, 8
        %s163 = scalar_lea.vmem %s0, %s162
        %s164 = smul.u32 16, %s11
      $region28: #{tpu_custom_call.1} parent=23 // pred_fallthru
        _
    $region24: #{tpu_custom_call.1} parent=5 // pred_fallthru
      _
    %p165 = scmp.le.s32.totalorder 1, %s11
    %p166 = scmp.lt.s32.totalorder %s11, 5
    %p167 = pnand %p165, %p166
    %p168 = pneg %p167
    // Predicated region
    $region29: #{tpu_custom_call.1} parent=5 // pred_check
      _
    $region30: #{tpu_custom_call.1} parent=5 // pred_check_branch
      %170 = sbr.rel (%p167) target = $region32
    $region31: #{tpu_custom_call.1} parent=5 // pred_region
      %s171 = ssub.s32 %s11, 1
      %s172 = smul.u32 16, %s16
      %p173 = scmp.lt.s32.totalorder %s172, 63
      %s174 = scalar_select %p173, %s172, 63
      %s175 = smul.addr %s174, 8
      %s176 = scalar_lea.vmem %s0, %s175
      %p177 = pneg %p37
      %p178 = pneg %p34
      %p179 = pneg %p58
      %p180 = pneg %p55
      %p181 = pneg %p79
      %p182 = pneg %p76
      %p183 = pneg %p105
      %p184 = pneg %p102
      %s185 = smul.u32 16, %s16
      %p186 = scmp.lt.s32.totalorder %s185, 63
      %s187 = scalar_select %p186, %s185, 63
      %s188 = smul.addr %s187, 8
      %s189 = scalar_lea.vmem %s3, %s188
      %p190 = pneg %p131
      %p191 = pneg %p128
      %s192 = smul.u32 16, %s16
      %p193 = scmp.lt.s32.totalorder %s192, 63
      %s194 = scalar_select %p193, %s192, 63
      %s195 = smul.addr %s194, 8
      %s196 = scalar_lea.vmem %s4, %s195
      %s197 = smul.u32 16, %s16
      %p198 = scmp.lt.s32.totalorder %s197, 63
      %s199 = scalar_select %p198, %s197, 63
      %s200 = smul.addr %s199, 8
      %s201 = scalar_lea.vmem %s0, %s200
      %s202 = smul.u32 16, %s16
      %s203 = smul.u32 16, %s16
      %p204 = scmp.lt.s32.totalorder %s203, 63
      %s205 = scalar_select %p204, %s203, 63
      %s206 = smul.addr %s205, 8
      %s207 = scalar_lea.vmem %s3, %s206
      %s208 = smul.u32 16, %s16
      %s209 = smul.u32 16, %s16
      %p210 = scmp.lt.s32.totalorder %s209, 63
      %s211 = scalar_select %p210, %s209, 63
      %s212 = smul.addr %s211, 8
      %s213 = scalar_lea.vmem %s4, %s212
      %s214 = smul.u32 16, %s16
      %v215 = vld [vmem:[%s201] sm:$0xff]
      %v216 = vld [vmem:[%s201 + $0x8] sm:$0xff]
      %v217 = vld [vmem:[%s201 + $0x10] sm:$0xff]
      %v218 = vld [vmem:[%s201 + $0x18] sm:$0xff]
      %v219 = vld [vmem:[%s201 + $0x20] sm:$0xff]
      %v220 = vld [vmem:[%s201 + $0x28] sm:$0xff]
      %v221 = vld [vmem:[%s201 + $0x30] sm:$0xff]
      %v222 = vld [vmem:[%s201 + $0x38] sm:$0xff]
      %v223 = vld [vmem:[%s201 + $0x40] sm:$0xff]
      %v224 = vld [vmem:[%s201 + $0x48] sm:$0xff]
      %v225 = vld [vmem:[%s201 + $0x50] sm:$0xff]
      %v226 = vld [vmem:[%s201 + $0x58] sm:$0xff]
      %v227 = vld [vmem:[%s201 + $0x60] sm:$0xff]
      %v228 = vld [vmem:[%s201 + $0x68] sm:$0xff]
      %v229 = vld [vmem:[%s201 + $0x70] sm:$0xff]
      %v230 = vld [vmem:[%s201 + $0x78] sm:$0xff]
      %v231 = vld [vmem:[%s1] sm:$0x3]
      %233 = vset.pattern.permute.xlu0 0
      %234 = vperm.xlu0 %233, %v215
      %v235 = vpop.permute.xlu0 %234
      %238 = vset.pattern.permute.xlu0 0
      %239 = vperm.xlu0 %238, %v216
      %v240 = vpop.permute.xlu0 %239
      %243 = vset.pattern.permute.xlu0 0
      %244 = vperm.xlu0 %243, %v217
      %v245 = vpop.permute.xlu0 %244
      %248 = vset.pattern.permute.xlu0 0
      %249 = vperm.xlu0 %248, %v218
      %v250 = vpop.permute.xlu0 %249
      %253 = vset.pattern.permute.xlu0 0
      %254 = vperm.xlu0 %253, %v219
      %v255 = vpop.permute.xlu0 %254
      %258 = vset.pattern.permute.xlu0 0
      %259 = vperm.xlu0 %258, %v220
      %v260 = vpop.permute.xlu0 %259
      %263 = vset.pattern.permute.xlu0 0
      %264 = vperm.xlu0 %263, %v221
      %v265 = vpop.permute.xlu0 %264
      %268 = vset.pattern.permute.xlu0 0
      %269 = vperm.xlu0 %268, %v222
      %v270 = vpop.permute.xlu0 %269
      %273 = vset.pattern.permute.xlu0 0
      %274 = vperm.xlu0 %273, %v223
      %v275 = vpop.permute.xlu0 %274
      %278 = vset.pattern.permute.xlu0 0
      %279 = vperm.xlu0 %278, %v224
      %v280 = vpop.permute.xlu0 %279
      %283 = vset.pattern.permute.xlu0 0
      %284 = vperm.xlu0 %283, %v225
      %v285 = vpop.permute.xlu0 %284
      %288 = vset.pattern.permute.xlu0 0
      %289 = vperm.xlu0 %288, %v226
      %v290 = vpop.permute.xlu0 %289
      %293 = vset.pattern.permute.xlu0 0
      %294 = vperm.xlu0 %293, %v227
      %v295 = vpop.permute.xlu0 %294
      %298 = vset.pattern.permute.xlu0 0
      %299 = vperm.xlu0 %298, %v228
      %v300 = vpop.permute.xlu0 %299
      %303 = vset.pattern.permute.xlu0 0
      %304 = vperm.xlu0 %303, %v229
      %v305 = vpop.permute.xlu0 %304
      %308 = vset.pattern.permute.xlu0 0
      %309 = vperm.xlu0 %308, %v230
      %v310 = vpop.permute.xlu0 %309
      %v312 = vlaneseq
      %v313 = vshrl.u32 %v312, 7
      %v314 = vsub.s32 0, %v313
      %v315 = vrot.slane %v231, %v314
      %v316 = vmul.f32 %v235, %v315
      %v317 = vmul.f32 %v240, %v315
      %v318 = vmul.f32 %v245, %v315
      %v319 = vmul.f32 %v250, %v315
      %v320 = vmul.f32 %v255, %v315
      %v321 = vmul.f32 %v260, %v315
      %v322 = vmul.f32 %v265, %v315
      %v323 = vmul.f32 %v270, %v315
      %v324 = vmul.f32 %v275, %v315
      %v325 = vmul.f32 %v280, %v315
      %v326 = vmul.f32 %v285, %v315
      %v327 = vmul.f32 %v290, %v315
      %v328 = vmul.f32 %v295, %v315
      %v329 = vmul.f32 %v300, %v315
      %v330 = vmul.f32 %v305, %v315
      %v331 = vmul.f32 %v310, %v315
      %v332 = vld [vmem:[%s2] sm:$0x1]
      %v334 = vlaneseq
      %v335 = vshrl.u32 %v334, 7
      %v336 = vsub.s32 0, %v335
      %v337 = vrot.slane %v332, %v336
      %v339 = vadd.f32 %v316, %v337
      %v340 = vadd.f32 %v317, %v337
      %v341 = vadd.f32 %v318, %v337
      %v342 = vadd.f32 %v319, %v337
      %v343 = vadd.f32 %v320, %v337
      %v344 = vadd.f32 %v321, %v337
      %v345 = vadd.f32 %v322, %v337
      %v346 = vadd.f32 %v323, %v337
      %v347 = vadd.f32 %v324, %v337
      %v348 = vadd.f32 %v325, %v337
      %v349 = vadd.f32 %v326, %v337
      %v350 = vadd.f32 %v327, %v337
      %v351 = vadd.f32 %v328, %v337
      %v352 = vadd.f32 %v329, %v337
      %v353 = vadd.f32 %v330, %v337
      %v354 = vadd.f32 %v331, %v337
      %355 = vset.pattern.permute.xlu0 1
      %356 = vperm.xlu0 %355, %v215
      %v357 = vpop.permute.xlu0 %356
      %359 = vset.pattern.permute.xlu0 1
      %360 = vperm.xlu0 %359, %v216
      %v361 = vpop.permute.xlu0 %360
      %363 = vset.pattern.permute.xlu0 1
      %364 = vperm.xlu0 %363, %v217
      %v365 = vpop.permute.xlu0 %364
      %367 = vset.pattern.permute.xlu0 1
      %368 = vperm.xlu0 %367, %v218
      %v369 = vpop.permute.xlu0 %368
      %371 = vset.pattern.permute.xlu0 1
      %372 = vperm.xlu0 %371, %v219
      %v373 = vpop.permute.xlu0 %372
      %375 = vset.pattern.permute.xlu0 1
      %376 = vperm.xlu0 %375, %v220
      %v377 = vpop.permute.xlu0 %376
      %379 = vset.pattern.permute.xlu0 1
      %380 = vperm.xlu0 %379, %v221
      %v381 = vpop.permute.xlu0 %380
      %383 = vset.pattern.permute.xlu0 1
      %384 = vperm.xlu0 %383, %v222
      %v385 = vpop.permute.xlu0 %384
      %387 = vset.pattern.permute.xlu0 1
      %388 = vperm.xlu0 %387, %v223
      %v389 = vpop.permute.xlu0 %388
      %391 = vset.pattern.permute.xlu0 1
      %392 = vperm.xlu0 %391, %v224
      %v393 = vpop.permute.xlu0 %392
      %395 = vset.pattern.permute.xlu0 1
      %396 = vperm.xlu0 %395, %v225
      %v397 = vpop.permute.xlu0 %396
      %399 = vset.pattern.permute.xlu0 1
      %400 = vperm.xlu0 %399, %v226
      %v401 = vpop.permute.xlu0 %400
      %403 = vset.pattern.permute.xlu0 1
      %404 = vperm.xlu0 %403, %v227
      %v405 = vpop.permute.xlu0 %404
      %407 = vset.pattern.permute.xlu0 1
      %408 = vperm.xlu0 %407, %v228
      %v409 = vpop.permute.xlu0 %408
      %411 = vset.pattern.permute.xlu0 1
      %412 = vperm.xlu0 %411, %v229
      %v413 = vpop.permute.xlu0 %412
      %415 = vset.pattern.permute.xlu0 1
      %416 = vperm.xlu0 %415, %v230
      %v417 = vpop.permute.xlu0 %416
      %v419 = vlaneseq
      %v420 = vshrl.u32 %v419, 7
      %v421 = vsub.s32 1, %v420
      %v422 = vrot.slane %v231, %v421
      %v423 = vmul.f32 %v357, %v422
      %v424 = vmul.f32 %v361, %v422
      %v425 = vmul.f32 %v365, %v422
      %v426 = vmul.f32 %v369, %v422
      %v427 = vmul.f32 %v373, %v422
      %v428 = vmul.f32 %v377, %v422
      %v429 = vmul.f32 %v381, %v422
      %v430 = vmul.f32 %v385, %v422
      %v431 = vmul.f32 %v389, %v422
      %v432 = vmul.f32 %v393, %v422
      %v433 = vmul.f32 %v397, %v422
      %v434 = vmul.f32 %v401, %v422
      %v435 = vmul.f32 %v405, %v422
      %v436 = vmul.f32 %v409, %v422
      %v437 = vmul.f32 %v413, %v422
      %v438 = vmul.f32 %v417, %v422
      %v439 = vadd.f32 %v339, %v423
      %v440 = vadd.f32 %v340, %v424
      %v441 = vadd.f32 %v341, %v425
      %v442 = vadd.f32 %v342, %v426
      %v443 = vadd.f32 %v343, %v427
      %v444 = vadd.f32 %v344, %v428
      %v445 = vadd.f32 %v345, %v429
      %v446 = vadd.f32 %v346, %v430
      %v447 = vadd.f32 %v347, %v431
      %v448 = vadd.f32 %v348, %v432
      %v449 = vadd.f32 %v349, %v433
      %v450 = vadd.f32 %v350, %v434
      %v451 = vadd.f32 %v351, %v435
      %v452 = vadd.f32 %v352, %v436
      %v453 = vadd.f32 %v353, %v437
      %v454 = vadd.f32 %v354, %v438
      %v455 = vand.u32 2147483647, %v439
      %vm456 = vcmp.le.f32.partialorder %v455, 0.7853982
      %vm457 = vcmp.lt.s32.totalorder %v439, 0
      %v458 = vand.u32 %v439, 2139095040
      %v459 = vshrl.u32 %v458, 23
      %v460 = vsub.s32 %v459, 127
      %v461 = vand.u32 2147483647, %v439
      %v462 = vand.u32 %v461, 8388607
      %v463 = vor.u32 %v462, 8388608
      %v464 = vsub.s32 0, %v463
      %v465 = vadd.s32 %v460, 1
      %vm466 = vcmp.gt.s32.totalorder %v465, 0
      %v467 = vsel %vm466, %v465, 0
      %v468 = vshrl.u32 %v467, 5
      %v469 = vand.u32 %v467, 31
      %v470 = vsub.s32 32, %v469
      %v471 = vshrl.u32 683565275, %v470
      %v472 = vshll.u32 683565275, %v469
      %v473 = vshrl.u32 2475754826, %v470
      %v474 = vor.u32 %v472, %v473
      %v475 = vshll.u32 2475754826, %v469
      %v476 = vshrl.u32 2131351028, %v470
      %v477 = vor.u32 %v475, %v476
      %v478 = vshll.u32 2131351028, %v469
      %v479 = vshrl.u32 2102212464, %v470
      %v480 = vor.u32 %v478, %v479
      %v481 = vshll.u32 2102212464, %v469
      %v482 = vshrl.u32 920167782, %v470
      %v483 = vor.u32 %v481, %v482
      %v484 = vshll.u32 920167782, %v469
      %v485 = vshrl.u32 1326507024, %v470
      %v486 = vor.u32 %v484, %v485
      %vm487 = vcmp.lt.s32.totalorder %v468, 1
      %vm488 = vcmp.lt.s32.totalorder %v468, 2
      %vm489 = vcmp.lt.s32.totalorder %v468, 3
      %vm490 = vcmp.lt.s32.totalorder %v468, 4
      %v491 = vsel %vm487, %v471, %v474
      %v492 = vsel %vm490, %v480, 2102212464
      %v493 = vsel %vm489, %v477, %v492
      %v494 = vsel %vm488, %v491, %v493
      %v495 = vsel %vm487, %v474, %v477
      %v496 = vsel %vm490, %v483, 920167782
      %v497 = vsel %vm489, %v480, %v496
      %v498 = vsel %vm488, %v495, %v497
      %v499 = vsel %vm487, %v477, %v480
      %v500 = vsel %vm490, %v486, 1326507024
      %v501 = vsel %vm489, %v483, %v500
      %v502 = vsel %vm488, %v499, %v501
      %v503 = vshll.u32 %v463, 8
      %v504 = vmul.u32.u64.compose %v503, %v502
      %v505 = vextract.low.u32 %v504
      %v506 = vextract.high.u32 %v504
      %v507 = vmul.u32.u64.compose %v503, %v498
      %v508 = vextract.low.u32 %v507
      %v509 = vextract.high.u32 %v507
      %v510 = vmul.u32 %v503, %v494
      %v511 = vadd.s32 %v506, %v508
      %vm512 = vc.u32 %v506, %v508
      %v513 = vadd.s32 %v509, 1
      %v514 = vsel %vm512, %v513, %v509
      %v515 = vadd.s32 %v510, %v514
      %v516 = vadd.s32 %v515, 536870912
      %v517 = vshrl.u32 %v516, 30
      %v518 = vshll.u32 %v517, 30
      %v519 = vsub.s32 %v515, %v518
      %vm520 = vcmp.lt.s32.totalorder %v519, 0
      %v521 = vsub.s32 0, %v519
      %v522 = vsel %vm520, %v521, %v519
      %v523 = vclz %v522
      %v524 = vsub.s32 %v523, 2
      %vm525 = vcmp.gt.s32.totalorder 0, %v524
      %v526 = vsel %vm525, 0, %v524
      %v527 = vsub.s32 32, %v526
      %v528 = vshll.u32 %v519, %v526
      %v529 = vshrl.u32 %v511, %v527
      %v530 = vor.u32 %v528, %v529
      %v531 = vsub.s32 4294967266, %v526
      %v532 = vadd.s32 %v531, 127
      %v533 = vshll.u32 %v532, 23
      %v534 = vor.u32 4788187, %v533
      %v535 = vand.u32 2147483647, %v534
      %v537 = vcvt.s32.f32 %v530
      %v538 = vmul.f32 %v537, %v535
      %v539 = vxor.u32 %v538, 2147483648
      %v540 = vsel %vm457, %v539, %v538
      %v541 = vsub.s32 4, %v517
      %v542 = vsel %vm457, %v541, %v517
      %v543 = vsel %vm456, %v439, %v540
      %v544 = vsel %vm456, 0, %v542
      %v545 = vcosq.f32.pop %v543
      %v546 = vsinq.f32.pop %v543
      %vm547 = vweird.f32 %v439
      %v548 = vadd.s32 %v544, 3
      %v549 = vand.u32 %v548, 3
      %vm550 = vcmp.lt.s32.totalorder %v549, 2
      %vm551 = vcmp.eq.s32.totalorder %v549, 0
      %v552 = vxor.u32 %v546, 2147483648
      %v553 = vsel %vm551, %v545, %v552
      %vm554 = vcmp.eq.s32.totalorder %v549, 2
      %v555 = vxor.u32 %v545, 2147483648
      %v556 = vsel %vm554, %v555, %v546
      %v557 = vsel %vm550, %v553, %v556
      %v558 = vsel %vm547, nan, %v557
      %v559 = vand.u32 2147483647, %v440
      %vm560 = vcmp.le.f32.partialorder %v559, 0.7853982
      %vm561 = vcmp.lt.s32.totalorder %v440, 0
      %v562 = vand.u32 %v440, 2139095040
      %v563 = vshrl.u32 %v562, 23
      %v564 = vsub.s32 %v563, 127
      %v565 = vand.u32 2147483647, %v440
      %v566 = vand.u32 %v565, 8388607
      %v567 = vor.u32 %v566, 8388608
      %v568 = vsub.s32 0, %v567
      %v569 = vadd.s32 %v564, 1
      %vm570 = vcmp.gt.s32.totalorder %v569, 0
      %v571 = vsel %vm570, %v569, 0
      %v572 = vshrl.u32 %v571, 5
      %v573 = vand.u32 %v571, 31
      %v574 = vsub.s32 32, %v573
      %v575 = vshrl.u32 683565275, %v574
      %v576 = vshll.u32 683565275, %v573
      %v577 = vshrl.u32 2475754826, %v574
      %v578 = vor.u32 %v576, %v577
      %v579 = vshll.u32 2475754826, %v573
      %v580 = vshrl.u32 2131351028, %v574
      %v581 = vor.u32 %v579, %v580
      %v582 = vshll.u32 2131351028, %v573
      %v583 = vshrl.u32 2102212464, %v574
      %v584 = vor.u32 %v582, %v583
      %v585 = vshll.u32 2102212464, %v573
      %v586 = vshrl.u32 920167782, %v574
      %v587 = vor.u32 %v585, %v586
      %v588 = vshll.u32 920167782, %v573
      %v589 = vshrl.u32 1326507024, %v574
      %v590 = vor.u32 %v588, %v589
      %vm591 = vcmp.lt.s32.totalorder %v572, 1
      %vm592 = vcmp.lt.s32.totalorder %v572, 2
      %vm593 = vcmp.lt.s32.totalorder %v572, 3
      %vm594 = vcmp.lt.s32.totalorder %v572, 4
      %v595 = vsel %vm591, %v575, %v578
      %v596 = vsel %vm594, %v584, 2102212464
      %v597 = vsel %vm593, %v581, %v596
      %v598 = vsel %vm592, %v595, %v597
      %v599 = vsel %vm591, %v578, %v581
      %v600 = vsel %vm594, %v587, 920167782
      %v601 = vsel %vm593, %v584, %v600
      %v602 = vsel %vm592, %v599, %v601
      %v603 = vsel %vm591, %v581, %v584
      %v604 = vsel %vm594, %v590, 1326507024
      %v605 = vsel %vm593, %v587, %v604
      %v606 = vsel %vm592, %v603, %v605
      %v607 = vshll.u32 %v567, 8
      %v608 = vmul.u32.u64.compose %v607, %v606
      %v609 = vextract.low.u32 %v608
      %v610 = vextract.high.u32 %v608
      %v611 = vmul.u32.u64.compose %v607, %v602
      %v612 = vextract.low.u32 %v611
      %v613 = vextract.high.u32 %v611
      %v614 = vmul.u32 %v607, %v598
      %v615 = vadd.s32 %v610, %v612
      %vm616 = vc.u32 %v610, %v612
      %v617 = vadd.s32 %v613, 1
      %v618 = vsel %vm616, %v617, %v613
      %v619 = vadd.s32 %v614, %v618
      %v620 = vadd.s32 %v619, 536870912
      %v621 = vshrl.u32 %v620, 30
      %v622 = vshll.u32 %v621, 30
      %v623 = vsub.s32 %v619, %v622
      %vm624 = vcmp.lt.s32.totalorder %v623, 0
      %v625 = vsub.s32 0, %v623
      %v626 = vsel %vm624, %v625, %v623
      %v627 = vclz %v626
      %v628 = vsub.s32 %v627, 2
      %vm629 = vcmp.gt.s32.totalorder 0, %v628
      %v630 = vsel %vm629, 0, %v628
      %v631 = vsub.s32 32, %v630
      %v632 = vshll.u32 %v623, %v630
      %v633 = vshrl.u32 %v615, %v631
      %v634 = vor.u32 %v632, %v633
      %v635 = vsub.s32 4294967266, %v630
      %v636 = vadd.s32 %v635, 127
      %v637 = vshll.u32 %v636, 23
      %v638 = vor.u32 4788187, %v637
      %v639 = vand.u32 2147483647, %v638
      %v641 = vcvt.s32.f32 %v634
      %v642 = vmul.f32 %v641, %v639
      %v643 = vxor.u32 %v642, 2147483648
      %v644 = vsel %vm561, %v643, %v642
      %v645 = vsub.s32 4, %v621
      %v646 = vsel %vm561, %v645, %v621
      %v647 = vsel %vm560, %v440, %v644
      %v648 = vsel %vm560, 0, %v646
      %v649 = vcosq.f32.pop %v647
      %v650 = vsinq.f32.pop %v647
      %vm651 = vweird.f32 %v440
      %v652 = vadd.s32 %v648, 3
      %v653 = vand.u32 %v652, 3
      %vm654 = vcmp.lt.s32.totalorder %v653, 2
      %vm655 = vcmp.eq.s32.totalorder %v653, 0
      %v656 = vxor.u32 %v650, 2147483648
      %v657 = vsel %vm655, %v649, %v656
      %vm658 = vcmp.eq.s32.totalorder %v653, 2
      %v659 = vxor.u32 %v649, 2147483648
      %v660 = vsel %vm658, %v659, %v650
      %v661 = vsel %vm654, %v657, %v660
      %v662 = vsel %vm651, nan, %v661
      %v663 = vand.u32 2147483647, %v441
      %vm664 = vcmp.le.f32.partialorder %v663, 0.7853982
      %vm665 = vcmp.lt.s32.totalorder %v441, 0
      %v666 = vand.u32 %v441, 2139095040
      %v667 = vshrl.u32 %v666, 23
      %v668 = vsub.s32 %v667, 127
      %v669 = vand.u32 2147483647, %v441
      %v670 = vand.u32 %v669, 8388607
      %v671 = vor.u32 %v670, 8388608
      %v672 = vsub.s32 0, %v671
      %v673 = vadd.s32 %v668, 1
      %vm674 = vcmp.gt.s32.totalorder %v673, 0
      %v675 = vsel %vm674, %v673, 0
      %v676 = vshrl.u32 %v675, 5
      %v677 = vand.u32 %v675, 31
      %v678 = vsub.s32 32, %v677
      %v679 = vshrl.u32 683565275, %v678
      %v680 = vshll.u32 683565275, %v677
      %v681 = vshrl.u32 2475754826, %v678
      %v682 = vor.u32 %v680, %v681
      %v683 = vshll.u32 2475754826, %v677
      %v684 = vshrl.u32 2131351028, %v678
      %v685 = vor.u32 %v683, %v684
      %v686 = vshll.u32 2131351028, %v677
      %v687 = vshrl.u32 2102212464, %v678
      %v688 = vor.u32 %v686, %v687
      %v689 = vshll.u32 2102212464, %v677
      %v690 = vshrl.u32 920167782, %v678
      %v691 = vor.u32 %v689, %v690
      %v692 = vshll.u32 920167782, %v677
      %v693 = vshrl.u32 1326507024, %v678
      %v694 = vor.u32 %v692, %v693
      %vm695 = vcmp.lt.s32.totalorder %v676, 1
      %vm696 = vcmp.lt.s32.totalorder %v676, 2
      %vm697 = vcmp.lt.s32.totalorder %v676, 3
      %vm698 = vcmp.lt.s32.totalorder %v676, 4
      %v699 = vsel %vm695, %v679, %v682
      %v700 = vsel %vm698, %v688, 2102212464
      %v701 = vsel %vm697, %v685, %v700
      %v702 = vsel %vm696, %v699, %v701
      %v703 = vsel %vm695, %v682, %v685
      %v704 = vsel %vm698, %v691, 920167782
      %v705 = vsel %vm697, %v688, %v704
      %v706 = vsel %vm696, %v703, %v705
      %v707 = vsel %vm695, %v685, %v688
      %v708 = vsel %vm698, %v694, 1326507024
      %v709 = vsel %vm697, %v691, %v708
      %v710 = vsel %vm696, %v707, %v709
      %v711 = vshll.u32 %v671, 8
      %v712 = vmul.u32.u64.compose %v711, %v710
      %v713 = vextract.low.u32 %v712
      %v714 = vextract.high.u32 %v712
      %v715 = vmul.u32.u64.compose %v711, %v706
      %v716 = vextract.low.u32 %v715
      %v717 = vextract.high.u32 %v715
      %v718 = vmul.u32 %v711, %v702
      %v719 = vadd.s32 %v714, %v716
      %vm720 = vc.u32 %v714, %v716
      %v721 = vadd.s32 %v717, 1
      %v722 = vsel %vm720, %v721, %v717
      %v723 = vadd.s32 %v718, %v722
      %v724 = vadd.s32 %v723, 536870912
      %v725 = vshrl.u32 %v724, 30
      %v726 = vshll.u32 %v725, 30
      %v727 = vsub.s32 %v723, %v726
      %vm728 = vcmp.lt.s32.totalorder %v727, 0
      %v729 = vsub.s32 0, %v727
      %v730 = vsel %vm728, %v729, %v727
      %v731 = vclz %v730
      %v732 = vsub.s32 %v731, 2
      %vm733 = vcmp.gt.s32.totalorder 0, %v732
      %v734 = vsel %vm733, 0, %v732
      %v735 = vsub.s32 32, %v734
      %v736 = vshll.u32 %v727, %v734
      %v737 = vshrl.u32 %v719, %v735
      %v738 = vor.u32 %v736, %v737
      %v739 = vsub.s32 4294967266, %v734
      %v740 = vadd.s32 %v739, 127
      %v741 = vshll.u32 %v740, 23
      %v742 = vor.u32 4788187, %v741
      %v743 = vand.u32 2147483647, %v742
      %v745 = vcvt.s32.f32 %v738
      %v746 = vmul.f32 %v745, %v743
      %v747 = vxor.u32 %v746, 2147483648
      %v748 = vsel %vm665, %v747, %v746
      %v749 = vsub.s32 4, %v725
      %v750 = vsel %vm665, %v749, %v725
      %v751 = vsel %vm664, %v441, %v748
      %v752 = vsel %vm664, 0, %v750
      %v753 = vcosq.f32.pop %v751
      %v754 = vsinq.f32.pop %v751
      %vm755 = vweird.f32 %v441
      %v756 = vadd.s32 %v752, 3
      %v757 = vand.u32 %v756, 3
      %vm758 = vcmp.lt.s32.totalorder %v757, 2
      %vm759 = vcmp.eq.s32.totalorder %v757, 0
      %v760 = vxor.u32 %v754, 2147483648
      %v761 = vsel %vm759, %v753, %v760
      %vm762 = vcmp.eq.s32.totalorder %v757, 2
      %v763 = vxor.u32 %v753, 2147483648
      %v764 = vsel %vm762, %v763, %v754
      %v765 = vsel %vm758, %v761, %v764
      %v766 = vsel %vm755, nan, %v765
      %v767 = vand.u32 2147483647, %v442
      %vm768 = vcmp.le.f32.partialorder %v767, 0.7853982
      %vm769 = vcmp.lt.s32.totalorder %v442, 0
      %v770 = vand.u32 %v442, 2139095040
      %v771 = vshrl.u32 %v770, 23
      %v772 = vsub.s32 %v771, 127
      %v773 = vand.u32 2147483647, %v442
      %v774 = vand.u32 %v773, 8388607
      %v775 = vor.u32 %v774, 8388608
      %v776 = vsub.s32 0, %v775
      %v777 = vadd.s32 %v772, 1
      %vm778 = vcmp.gt.s32.totalorder %v777, 0
      %v779 = vsel %vm778, %v777, 0
      %v780 = vshrl.u32 %v779, 5
      %v781 = vand.u32 %v779, 31
      %v782 = vsub.s32 32, %v781
      %v783 = vshrl.u32 683565275, %v782
      %v784 = vshll.u32 683565275, %v781
      %v785 = vshrl.u32 2475754826, %v782
      %v786 = vor.u32 %v784, %v785
      %v787 = vshll.u32 2475754826, %v781
      %v788 = vshrl.u32 2131351028, %v782
      %v789 = vor.u32 %v787, %v788
      %v790 = vshll.u32 2131351028, %v781
      %v791 = vshrl.u32 2102212464, %v782
      %v792 = vor.u32 %v790, %v791
      %v793 = vshll.u32 2102212464, %v781
      %v794 = vshrl.u32 920167782, %v782
      %v795 = vor.u32 %v793, %v794
      %v796 = vshll.u32 920167782, %v781
      %v797 = vshrl.u32 1326507024, %v782
      %v798 = vor.u32 %v796, %v797
      %vm799 = vcmp.lt.s32.totalorder %v780, 1
      %vm800 = vcmp.lt.s32.totalorder %v780, 2
      %vm801 = vcmp.lt.s32.totalorder %v780, 3
      %vm802 = vcmp.lt.s32.totalorder %v780, 4
      %v803 = vsel %vm799, %v783, %v786
      %v804 = vsel %vm802, %v792, 2102212464
      %v805 = vsel %vm801, %v789, %v804
      %v806 = vsel %vm800, %v803, %v805
      %v807 = vsel %vm799, %v786, %v789
      %v808 = vsel %vm802, %v795, 920167782
      %v809 = vsel %vm801, %v792, %v808
      %v810 = vsel %vm800, %v807, %v809
      %v811 = vsel %vm799, %v789, %v792
      %v812 = vsel %vm802, %v798, 1326507024
      %v813 = vsel %vm801, %v795, %v812
      %v814 = vsel %vm800, %v811, %v813
      %v815 = vshll.u32 %v775, 8
      %v816 = vmul.u32.u64.compose %v815, %v814
      %v817 = vextract.low.u32 %v816
      %v818 = vextract.high.u32 %v816
      %v819 = vmul.u32.u64.compose %v815, %v810
      %v820 = vextract.low.u32 %v819
      %v821 = vextract.high.u32 %v819
      %v822 = vmul.u32 %v815, %v806
      %v823 = vadd.s32 %v818, %v820
      %vm824 = vc.u32 %v818, %v820
      %v825 = vadd.s32 %v821, 1
      %v826 = vsel %vm824, %v825, %v821
      %v827 = vadd.s32 %v822, %v826
      %v828 = vadd.s32 %v827, 536870912
      %v829 = vshrl.u32 %v828, 30
      %v830 = vshll.u32 %v829, 30
      %v831 = vsub.s32 %v827, %v830
      %vm832 = vcmp.lt.s32.totalorder %v831, 0
      %v833 = vsub.s32 0, %v831
      %v834 = vsel %vm832, %v833, %v831
      %v835 = vclz %v834
      %v836 = vsub.s32 %v835, 2
      %vm837 = vcmp.gt.s32.totalorder 0, %v836
      %v838 = vsel %vm837, 0, %v836
      %v839 = vsub.s32 32, %v838
      %v840 = vshll.u32 %v831, %v838
      %v841 = vshrl.u32 %v823, %v839
      %v842 = vor.u32 %v840, %v841
      %v843 = vsub.s32 4294967266, %v838
      %v844 = vadd.s32 %v843, 127
      %v845 = vshll.u32 %v844, 23
      %v846 = vor.u32 4788187, %v845
      %v847 = vand.u32 2147483647, %v846
      %v849 = vcvt.s32.f32 %v842
      %v850 = vmul.f32 %v849, %v847
      %v851 = vxor.u32 %v850, 2147483648
      %v852 = vsel %vm769, %v851, %v850
      %v853 = vsub.s32 4, %v829
      %v854 = vsel %vm769, %v853, %v829
      %v855 = vsel %vm768, %v442, %v852
      %v856 = vsel %vm768, 0, %v854
      %v857 = vcosq.f32.pop %v855
      %v858 = vsinq.f32.pop %v855
      %vm859 = vweird.f32 %v442
      %v860 = vadd.s32 %v856, 3
      %v861 = vand.u32 %v860, 3
      %vm862 = vcmp.lt.s32.totalorder %v861, 2
      %vm863 = vcmp.eq.s32.totalorder %v861, 0
      %v864 = vxor.u32 %v858, 2147483648
      %v865 = vsel %vm863, %v857, %v864
      %vm866 = vcmp.eq.s32.totalorder %v861, 2
      %v867 = vxor.u32 %v857, 2147483648
      %v868 = vsel %vm866, %v867, %v858
      %v869 = vsel %vm862, %v865, %v868
      %v870 = vsel %vm859, nan, %v869
      %v871 = vand.u32 2147483647, %v443
      %vm872 = vcmp.le.f32.partialorder %v871, 0.7853982
      %vm873 = vcmp.lt.s32.totalorder %v443, 0
      %v874 = vand.u32 %v443, 2139095040
      %v875 = vshrl.u32 %v874, 23
      %v876 = vsub.s32 %v875, 127
      %v877 = vand.u32 2147483647, %v443
      %v878 = vand.u32 %v877, 8388607
      %v879 = vor.u32 %v878, 8388608
      %v880 = vsub.s32 0, %v879
      %v881 = vadd.s32 %v876, 1
      %vm882 = vcmp.gt.s32.totalorder %v881, 0
      %v883 = vsel %vm882, %v881, 0
      %v884 = vshrl.u32 %v883, 5
      %v885 = vand.u32 %v883, 31
      %v886 = vsub.s32 32, %v885
      %v887 = vshrl.u32 683565275, %v886
      %v888 = vshll.u32 683565275, %v885
      %v889 = vshrl.u32 2475754826, %v886
      %v890 = vor.u32 %v888, %v889
      %v891 = vshll.u32 2475754826, %v885
      %v892 = vshrl.u32 2131351028, %v886
      %v893 = vor.u32 %v891, %v892
      %v894 = vshll.u32 2131351028, %v885
      %v895 = vshrl.u32 2102212464, %v886
      %v896 = vor.u32 %v894, %v895
      %v897 = vshll.u32 2102212464, %v885
      %v898 = vshrl.u32 920167782, %v886
      %v899 = vor.u32 %v897, %v898
      %v900 = vshll.u32 920167782, %v885
      %v901 = vshrl.u32 1326507024, %v886
      %v902 = vor.u32 %v900, %v901
      %vm903 = vcmp.lt.s32.totalorder %v884, 1
      %vm904 = vcmp.lt.s32.totalorder %v884, 2
      %vm905 = vcmp.lt.s32.totalorder %v884, 3
      %vm906 = vcmp.lt.s32.totalorder %v884, 4
      %v907 = vsel %vm903, %v887, %v890
      %v908 = vsel %vm906, %v896, 2102212464
      %v909 = vsel %vm905, %v893, %v908
      %v910 = vsel %vm904, %v907, %v909
      %v911 = vsel %vm903, %v890, %v893
      %v912 = vsel %vm906, %v899, 920167782
      %v913 = vsel %vm905, %v896, %v912
      %v914 = vsel %vm904, %v911, %v913
      %v915 = vsel %vm903, %v893, %v896
      %v916 = vsel %vm906, %v902, 1326507024
      %v917 = vsel %vm905, %v899, %v916
      %v918 = vsel %vm904, %v915, %v917
      %v919 = vshll.u32 %v879, 8
      %v920 = vmul.u32.u64.compose %v919, %v918
      %v921 = vextract.low.u32 %v920
      %v922 = vextract.high.u32 %v920
      %v923 = vmul.u32.u64.compose %v919, %v914
      %v924 = vextract.low.u32 %v923
      %v925 = vextract.high.u32 %v923
      %v926 = vmul.u32 %v919, %v910
      %v927 = vadd.s32 %v922, %v924
      %vm928 = vc.u32 %v922, %v924
      %v929 = vadd.s32 %v925, 1
      %v930 = vsel %vm928, %v929, %v925
      %v931 = vadd.s32 %v926, %v930
      %v932 = vadd.s32 %v931, 536870912
      %v933 = vshrl.u32 %v932, 30
      %v934 = vshll.u32 %v933, 30
      %v935 = vsub.s32 %v931, %v934
      %vm936 = vcmp.lt.s32.totalorder %v935, 0
      %v937 = vsub.s32 0, %v935
      %v938 = vsel %vm936, %v937, %v935
      %v939 = vclz %v938
      %v940 = vsub.s32 %v939, 2
      %vm941 = vcmp.gt.s32.totalorder 0, %v940
      %v942 = vsel %vm941, 0, %v940
      %v943 = vsub.s32 32, %v942
      %v944 = vshll.u32 %v935, %v942
      %v945 = vshrl.u32 %v927, %v943
      %v946 = vor.u32 %v944, %v945
      %v947 = vsub.s32 4294967266, %v942
      %v948 = vadd.s32 %v947, 127
      %v949 = vshll.u32 %v948, 23
      %v950 = vor.u32 4788187, %v949
      %v951 = vand.u32 2147483647, %v950
      %v953 = vcvt.s32.f32 %v946
      %v954 = vmul.f32 %v953, %v951
      %v955 = vxor.u32 %v954, 2147483648
      %v956 = vsel %vm873, %v955, %v954
      %v957 = vsub.s32 4, %v933
      %v958 = vsel %vm873, %v957, %v933
      %v959 = vsel %vm872, %v443, %v956
      %v960 = vsel %vm872, 0, %v958
      %v961 = vcosq.f32.pop %v959
      %v962 = vsinq.f32.pop %v959
      %vm963 = vweird.f32 %v443
      %v964 = vadd.s32 %v960, 3
      %v965 = vand.u32 %v964, 3
      %vm966 = vcmp.lt.s32.totalorder %v965, 2
      %vm967 = vcmp.eq.s32.totalorder %v965, 0
      %v968 = vxor.u32 %v962, 2147483648
      %v969 = vsel %vm967, %v961, %v968
      %vm970 = vcmp.eq.s32.totalorder %v965, 2
      %v971 = vxor.u32 %v961, 2147483648
      %v972 = vsel %vm970, %v971, %v962
      %v973 = vsel %vm966, %v969, %v972
      %v974 = vsel %vm963, nan, %v973
      %v975 = vand.u32 2147483647, %v444
      %vm976 = vcmp.le.f32.partialorder %v975, 0.7853982
      %vm977 = vcmp.lt.s32.totalorder %v444, 0
      %v978 = vand.u32 %v444, 2139095040
      %v979 = vshrl.u32 %v978, 23
      %v980 = vsub.s32 %v979, 127
      %v981 = vand.u32 2147483647, %v444
      %v982 = vand.u32 %v981, 8388607
      %v983 = vor.u32 %v982, 8388608
      %v984 = vsub.s32 0, %v983
      %v985 = vadd.s32 %v980, 1
      %vm986 = vcmp.gt.s32.totalorder %v985, 0
      %v987 = vsel %vm986, %v985, 0
      %v988 = vshrl.u32 %v987, 5
      %v989 = vand.u32 %v987, 31
      %v990 = vsub.s32 32, %v989
      %v991 = vshrl.u32 683565275, %v990
      %v992 = vshll.u32 683565275, %v989
      %v993 = vshrl.u32 2475754826, %v990
      %v994 = vor.u32 %v992, %v993
      %v995 = vshll.u32 2475754826, %v989
      %v996 = vshrl.u32 2131351028, %v990
      %v997 = vor.u32 %v995, %v996
      %v998 = vshll.u32 2131351028, %v989
      %v999 = vshrl.u32 2102212464, %v990
      %v1000 = vor.u32 %v998, %v999
      %v1001 = vshll.u32 2102212464, %v989
      %v1002 = vshrl.u32 920167782, %v990
      %v1003 = vor.u32 %v1001, %v1002
      %v1004 = vshll.u32 920167782, %v989
      %v1005 = vshrl.u32 1326507024, %v990
      %v1006 = vor.u32 %v1004, %v1005
      %vm1007 = vcmp.lt.s32.totalorder %v988, 1
      %vm1008 = vcmp.lt.s32.totalorder %v988, 2
      %vm1009 = vcmp.lt.s32.totalorder %v988, 3
      %vm1010 = vcmp.lt.s32.totalorder %v988, 4
      %v1011 = vsel %vm1007, %v991, %v994
      %v1012 = vsel %vm1010, %v1000, 2102212464
      %v1013 = vsel %vm1009, %v997, %v1012
      %v1014 = vsel %vm1008, %v1011, %v1013
      %v1015 = vsel %vm1007, %v994, %v997
      %v1016 = vsel %vm1010, %v1003, 920167782
      %v1017 = vsel %vm1009, %v1000, %v1016
      %v1018 = vsel %vm1008, %v1015, %v1017
      %v1019 = vsel %vm1007, %v997, %v1000
      %v1020 = vsel %vm1010, %v1006, 1326507024
      %v1021 = vsel %vm1009, %v1003, %v1020
      %v1022 = vsel %vm1008, %v1019, %v1021
      %v1023 = vshll.u32 %v983, 8
      %v1024 = vmul.u32.u64.compose %v1023, %v1022
      %v1025 = vextract.low.u32 %v1024
      %v1026 = vextract.high.u32 %v1024
      %v1027 = vmul.u32.u64.compose %v1023, %v1018
      %v1028 = vextract.low.u32 %v1027
      %v1029 = vextract.high.u32 %v1027
      %v1030 = vmul.u32 %v1023, %v1014
      %v1031 = vadd.s32 %v1026, %v1028
      %vm1032 = vc.u32 %v1026, %v1028
      %v1033 = vadd.s32 %v1029, 1
      %v1034 = vsel %vm1032, %v1033, %v1029
      %v1035 = vadd.s32 %v1030, %v1034
      %v1036 = vadd.s32 %v1035, 536870912
      %v1037 = vshrl.u32 %v1036, 30
      %v1038 = vshll.u32 %v1037, 30
      %v1039 = vsub.s32 %v1035, %v1038
      %vm1040 = vcmp.lt.s32.totalorder %v1039, 0
      %v1041 = vsub.s32 0, %v1039
      %v1042 = vsel %vm1040, %v1041, %v1039
      %v1043 = vclz %v1042
      %v1044 = vsub.s32 %v1043, 2
      %vm1045 = vcmp.gt.s32.totalorder 0, %v1044
      %v1046 = vsel %vm1045, 0, %v1044
      %v1047 = vsub.s32 32, %v1046
      %v1048 = vshll.u32 %v1039, %v1046
      %v1049 = vshrl.u32 %v1031, %v1047
      %v1050 = vor.u32 %v1048, %v1049
      %v1051 = vsub.s32 4294967266, %v1046
      %v1052 = vadd.s32 %v1051, 127
      %v1053 = vshll.u32 %v1052, 23
      %v1054 = vor.u32 4788187, %v1053
      %v1055 = vand.u32 2147483647, %v1054
      %v1057 = vcvt.s32.f32 %v1050
      %v1058 = vmul.f32 %v1057, %v1055
      %v1059 = vxor.u32 %v1058, 2147483648
      %v1060 = vsel %vm977, %v1059, %v1058
      %v1061 = vsub.s32 4, %v1037
      %v1062 = vsel %vm977, %v1061, %v1037
      %v1063 = vsel %vm976, %v444, %v1060
      %v1064 = vsel %vm976, 0, %v1062
      %v1065 = vcosq.f32.pop %v1063
      %v1066 = vsinq.f32.pop %v1063
      %vm1067 = vweird.f32 %v444
      %v1068 = vadd.s32 %v1064, 3
      %v1069 = vand.u32 %v1068, 3
      %vm1070 = vcmp.lt.s32.totalorder %v1069, 2
      %vm1071 = vcmp.eq.s32.totalorder %v1069, 0
      %v1072 = vxor.u32 %v1066, 2147483648
      %v1073 = vsel %vm1071, %v1065, %v1072
      %vm1074 = vcmp.eq.s32.totalorder %v1069, 2
      %v1075 = vxor.u32 %v1065, 2147483648
      %v1076 = vsel %vm1074, %v1075, %v1066
      %v1077 = vsel %vm1070, %v1073, %v1076
      %v1078 = vsel %vm1067, nan, %v1077
      %v1079 = vand.u32 2147483647, %v445
      %vm1080 = vcmp.le.f32.partialorder %v1079, 0.7853982
      %vm1081 = vcmp.lt.s32.totalorder %v445, 0
      %v1082 = vand.u32 %v445, 2139095040
      %v1083 = vshrl.u32 %v1082, 23
      %v1084 = vsub.s32 %v1083, 127
      %v1085 = vand.u32 2147483647, %v445
      %v1086 = vand.u32 %v1085, 8388607
      %v1087 = vor.u32 %v1086, 8388608
      %v1088 = vsub.s32 0, %v1087
      %v1089 = vadd.s32 %v1084, 1
      %vm1090 = vcmp.gt.s32.totalorder %v1089, 0
      %v1091 = vsel %vm1090, %v1089, 0
      %v1092 = vshrl.u32 %v1091, 5
      %v1093 = vand.u32 %v1091, 31
      %v1094 = vsub.s32 32, %v1093
      %v1095 = vshrl.u32 683565275, %v1094
      %v1096 = vshll.u32 683565275, %v1093
      %v1097 = vshrl.u32 2475754826, %v1094
      %v1098 = vor.u32 %v1096, %v1097
      %v1099 = vshll.u32 2475754826, %v1093
      %v1100 = vshrl.u32 2131351028, %v1094
      %v1101 = vor.u32 %v1099, %v1100
      %v1102 = vshll.u32 2131351028, %v1093
      %v1103 = vshrl.u32 2102212464, %v1094
      %v1104 = vor.u32 %v1102, %v1103
      %v1105 = vshll.u32 2102212464, %v1093
      %v1106 = vshrl.u32 920167782, %v1094
      %v1107 = vor.u32 %v1105, %v1106
      %v1108 = vshll.u32 920167782, %v1093
      %v1109 = vshrl.u32 1326507024, %v1094
      %v1110 = vor.u32 %v1108, %v1109
      %vm1111 = vcmp.lt.s32.totalorder %v1092, 1
      %vm1112 = vcmp.lt.s32.totalorder %v1092, 2
      %vm1113 = vcmp.lt.s32.totalorder %v1092, 3
      %vm1114 = vcmp.lt.s32.totalorder %v1092, 4
      %v1115 = vsel %vm1111, %v1095, %v1098
      %v1116 = vsel %vm1114, %v1104, 2102212464
      %v1117 = vsel %vm1113, %v1101, %v1116
      %v1118 = vsel %vm1112, %v1115, %v1117
      %v1119 = vsel %vm1111, %v1098, %v1101
      %v1120 = vsel %vm1114, %v1107, 920167782
      %v1121 = vsel %vm1113, %v1104, %v1120
      %v1122 = vsel %vm1112, %v1119, %v1121
      %v1123 = vsel %vm1111, %v1101, %v1104
      %v1124 = vsel %vm1114, %v1110, 1326507024
      %v1125 = vsel %vm1113, %v1107, %v1124
      %v1126 = vsel %vm1112, %v1123, %v1125
      %v1127 = vshll.u32 %v1087, 8
      %v1128 = vmul.u32.u64.compose %v1127, %v1126
      %v1129 = vextract.low.u32 %v1128
      %v1130 = vextract.high.u32 %v1128
      %v1131 = vmul.u32.u64.compose %v1127, %v1122
      %v1132 = vextract.low.u32 %v1131
      %v1133 = vextract.high.u32 %v1131
      %v1134 = vmul.u32 %v1127, %v1118
      %v1135 = vadd.s32 %v1130, %v1132
      %vm1136 = vc.u32 %v1130, %v1132
      %v1137 = vadd.s32 %v1133, 1
      %v1138 = vsel %vm1136, %v1137, %v1133
      %v1139 = vadd.s32 %v1134, %v1138
      %v1140 = vadd.s32 %v1139, 536870912
      %v1141 = vshrl.u32 %v1140, 30
      %v1142 = vshll.u32 %v1141, 30
      %v1143 = vsub.s32 %v1139, %v1142
      %vm1144 = vcmp.lt.s32.totalorder %v1143, 0
      %v1145 = vsub.s32 0, %v1143
      %v1146 = vsel %vm1144, %v1145, %v1143
      %v1147 = vclz %v1146
      %v1148 = vsub.s32 %v1147, 2
      %vm1149 = vcmp.gt.s32.totalorder 0, %v1148
      %v1150 = vsel %vm1149, 0, %v1148
      %v1151 = vsub.s32 32, %v1150
      %v1152 = vshll.u32 %v1143, %v1150
      %v1153 = vshrl.u32 %v1135, %v1151
      %v1154 = vor.u32 %v1152, %v1153
      %v1155 = vsub.s32 4294967266, %v1150
      %v1156 = vadd.s32 %v1155, 127
      %v1157 = vshll.u32 %v1156, 23
      %v1158 = vor.u32 4788187, %v1157
      %v1159 = vand.u32 2147483647, %v1158
      %v1161 = vcvt.s32.f32 %v1154
      %v1162 = vmul.f32 %v1161, %v1159
      %v1163 = vxor.u32 %v1162, 2147483648
      %v1164 = vsel %vm1081, %v1163, %v1162
      %v1165 = vsub.s32 4, %v1141
      %v1166 = vsel %vm1081, %v1165, %v1141
      %v1167 = vsel %vm1080, %v445, %v1164
      %v1168 = vsel %vm1080, 0, %v1166
      %v1169 = vcosq.f32.pop %v1167
      %v1170 = vsinq.f32.pop %v1167
      %vm1171 = vweird.f32 %v445
      %v1172 = vadd.s32 %v1168, 3
      %v1173 = vand.u32 %v1172, 3
      %vm1174 = vcmp.lt.s32.totalorder %v1173, 2
      %vm1175 = vcmp.eq.s32.totalorder %v1173, 0
      %v1176 = vxor.u32 %v1170, 2147483648
      %v1177 = vsel %vm1175, %v1169, %v1176
      %vm1178 = vcmp.eq.s32.totalorder %v1173, 2
      %v1179 = vxor.u32 %v1169, 2147483648
      %v1180 = vsel %vm1178, %v1179, %v1170
      %v1181 = vsel %vm1174, %v1177, %v1180
      %v1182 = vsel %vm1171, nan, %v1181
      %v1183 = vand.u32 2147483647, %v446
      %vm1184 = vcmp.le.f32.partialorder %v1183, 0.7853982
      %vm1185 = vcmp.lt.s32.totalorder %v446, 0
      %v1186 = vand.u32 %v446, 2139095040
      %v1187 = vshrl.u32 %v1186, 23
      %v1188 = vsub.s32 %v1187, 127
      %v1189 = vand.u32 2147483647, %v446
      %v1190 = vand.u32 %v1189, 8388607
      %v1191 = vor.u32 %v1190, 8388608
      %v1192 = vsub.s32 0, %v1191
      %v1193 = vadd.s32 %v1188, 1
      %vm1194 = vcmp.gt.s32.totalorder %v1193, 0
      %v1195 = vsel %vm1194, %v1193, 0
      %v1196 = vshrl.u32 %v1195, 5
      %v1197 = vand.u32 %v1195, 31
      %v1198 = vsub.s32 32, %v1197
      %v1199 = vshrl.u32 683565275, %v1198
      %v1200 = vshll.u32 683565275, %v1197
      %v1201 = vshrl.u32 2475754826, %v1198
      %v1202 = vor.u32 %v1200, %v1201
      %v1203 = vshll.u32 2475754826, %v1197
      %v1204 = vshrl.u32 2131351028, %v1198
      %v1205 = vor.u32 %v1203, %v1204
      %v1206 = vshll.u32 2131351028, %v1197
      %v1207 = vshrl.u32 2102212464, %v1198
      %v1208 = vor.u32 %v1206, %v1207
      %v1209 = vshll.u32 2102212464, %v1197
      %v1210 = vshrl.u32 920167782, %v1198
      %v1211 = vor.u32 %v1209, %v1210
      %v1212 = vshll.u32 920167782, %v1197
      %v1213 = vshrl.u32 1326507024, %v1198
      %v1214 = vor.u32 %v1212, %v1213
      %vm1215 = vcmp.lt.s32.totalorder %v1196, 1
      %vm1216 = vcmp.lt.s32.totalorder %v1196, 2
      %vm1217 = vcmp.lt.s32.totalorder %v1196, 3
      %vm1218 = vcmp.lt.s32.totalorder %v1196, 4
      %v1219 = vsel %vm1215, %v1199, %v1202
      %v1220 = vsel %vm1218, %v1208, 2102212464
      %v1221 = vsel %vm1217, %v1205, %v1220
      %v1222 = vsel %vm1216, %v1219, %v1221
      %v1223 = vsel %vm1215, %v1202, %v1205
      %v1224 = vsel %vm1218, %v1211, 920167782
      %v1225 = vsel %vm1217, %v1208, %v1224
      %v1226 = vsel %vm1216, %v1223, %v1225
      %v1227 = vsel %vm1215, %v1205, %v1208
      %v1228 = vsel %vm1218, %v1214, 1326507024
      %v1229 = vsel %vm1217, %v1211, %v1228
      %v1230 = vsel %vm1216, %v1227, %v1229
      %v1231 = vshll.u32 %v1191, 8
      %v1232 = vmul.u32.u64.compose %v1231, %v1230
      %v1233 = vextract.low.u32 %v1232
      %v1234 = vextract.high.u32 %v1232
      %v1235 = vmul.u32.u64.compose %v1231, %v1226
      %v1236 = vextract.low.u32 %v1235
      %v1237 = vextract.high.u32 %v1235
      %v1238 = vmul.u32 %v1231, %v1222
      %v1239 = vadd.s32 %v1234, %v1236
      %vm1240 = vc.u32 %v1234, %v1236
      %v1241 = vadd.s32 %v1237, 1
      %v1242 = vsel %vm1240, %v1241, %v1237
      %v1243 = vadd.s32 %v1238, %v1242
      %v1244 = vadd.s32 %v1243, 536870912
      %v1245 = vshrl.u32 %v1244, 30
      %v1246 = vshll.u32 %v1245, 30
      %v1247 = vsub.s32 %v1243, %v1246
      %vm1248 = vcmp.lt.s32.totalorder %v1247, 0
      %v1249 = vsub.s32 0, %v1247
      %v1250 = vsel %vm1248, %v1249, %v1247
      %v1251 = vclz %v1250
      %v1252 = vsub.s32 %v1251, 2
      %vm1253 = vcmp.gt.s32.totalorder 0, %v1252
      %v1254 = vsel %vm1253, 0, %v1252
      %v1255 = vsub.s32 32, %v1254
      %v1256 = vshll.u32 %v1247, %v1254
      %v1257 = vshrl.u32 %v1239, %v1255
      %v1258 = vor.u32 %v1256, %v1257
      %v1259 = vsub.s32 4294967266, %v1254
      %v1260 = vadd.s32 %v1259, 127
      %v1261 = vshll.u32 %v1260, 23
      %v1262 = vor.u32 4788187, %v1261
      %v1263 = vand.u32 2147483647, %v1262
      %v1265 = vcvt.s32.f32 %v1258
      %v1266 = vmul.f32 %v1265, %v1263
      %v1267 = vxor.u32 %v1266, 2147483648
      %v1268 = vsel %vm1185, %v1267, %v1266
      %v1269 = vsub.s32 4, %v1245
      %v1270 = vsel %vm1185, %v1269, %v1245
      %v1271 = vsel %vm1184, %v446, %v1268
      %v1272 = vsel %vm1184, 0, %v1270
      %v1273 = vcosq.f32.pop %v1271
      %v1274 = vsinq.f32.pop %v1271
      %vm1275 = vweird.f32 %v446
      %v1276 = vadd.s32 %v1272, 3
      %v1277 = vand.u32 %v1276, 3
      %vm1278 = vcmp.lt.s32.totalorder %v1277, 2
      %vm1279 = vcmp.eq.s32.totalorder %v1277, 0
      %v1280 = vxor.u32 %v1274, 2147483648
      %v1281 = vsel %vm1279, %v1273, %v1280
      %vm1282 = vcmp.eq.s32.totalorder %v1277, 2
      %v1283 = vxor.u32 %v1273, 2147483648
      %v1284 = vsel %vm1282, %v1283, %v1274
      %v1285 = vsel %vm1278, %v1281, %v1284
      %v1286 = vsel %vm1275, nan, %v1285
      %v1287 = vand.u32 2147483647, %v447
      %vm1288 = vcmp.le.f32.partialorder %v1287, 0.7853982
      %vm1289 = vcmp.lt.s32.totalorder %v447, 0
      %v1290 = vand.u32 %v447, 2139095040
      %v1291 = vshrl.u32 %v1290, 23
      %v1292 = vsub.s32 %v1291, 127
      %v1293 = vand.u32 2147483647, %v447
      %v1294 = vand.u32 %v1293, 8388607
      %v1295 = vor.u32 %v1294, 8388608
      %v1296 = vsub.s32 0, %v1295
      %v1297 = vadd.s32 %v1292, 1
      %vm1298 = vcmp.gt.s32.totalorder %v1297, 0
      %v1299 = vsel %vm1298, %v1297, 0
      %v1300 = vshrl.u32 %v1299, 5
      %v1301 = vand.u32 %v1299, 31
      %v1302 = vsub.s32 32, %v1301
      %v1303 = vshrl.u32 683565275, %v1302
      %v1304 = vshll.u32 683565275, %v1301
      %v1305 = vshrl.u32 2475754826, %v1302
      %v1306 = vor.u32 %v1304, %v1305
      %v1307 = vshll.u32 2475754826, %v1301
      %v1308 = vshrl.u32 2131351028, %v1302
      %v1309 = vor.u32 %v1307, %v1308
      %v1310 = vshll.u32 2131351028, %v1301
      %v1311 = vshrl.u32 2102212464, %v1302
      %v1312 = vor.u32 %v1310, %v1311
      %v1313 = vshll.u32 2102212464, %v1301
      %v1314 = vshrl.u32 920167782, %v1302
      %v1315 = vor.u32 %v1313, %v1314
      %v1316 = vshll.u32 920167782, %v1301
      %v1317 = vshrl.u32 1326507024, %v1302
      %v1318 = vor.u32 %v1316, %v1317
      %vm1319 = vcmp.lt.s32.totalorder %v1300, 1
      %vm1320 = vcmp.lt.s32.totalorder %v1300, 2
      %vm1321 = vcmp.lt.s32.totalorder %v1300, 3
      %vm1322 = vcmp.lt.s32.totalorder %v1300, 4
      %v1323 = vsel %vm1319, %v1303, %v1306
      %v1324 = vsel %vm1322, %v1312, 2102212464
      %v1325 = vsel %vm1321, %v1309, %v1324
      %v1326 = vsel %vm1320, %v1323, %v1325
      %v1327 = vsel %vm1319, %v1306, %v1309
      %v1328 = vsel %vm1322, %v1315, 920167782
      %v1329 = vsel %vm1321, %v1312, %v1328
      %v1330 = vsel %vm1320, %v1327, %v1329
      %v1331 = vsel %vm1319, %v1309, %v1312
      %v1332 = vsel %vm1322, %v1318, 1326507024
      %v1333 = vsel %vm1321, %v1315, %v1332
      %v1334 = vsel %vm1320, %v1331, %v1333
      %v1335 = vshll.u32 %v1295, 8
      %v1336 = vmul.u32.u64.compose %v1335, %v1334
      %v1337 = vextract.low.u32 %v1336
      %v1338 = vextract.high.u32 %v1336
      %v1339 = vmul.u32.u64.compose %v1335, %v1330
      %v1340 = vextract.low.u32 %v1339
      %v1341 = vextract.high.u32 %v1339
      %v1342 = vmul.u32 %v1335, %v1326
      %v1343 = vadd.s32 %v1338, %v1340
      %vm1344 = vc.u32 %v1338, %v1340
      %v1345 = vadd.s32 %v1341, 1
      %v1346 = vsel %vm1344, %v1345, %v1341
      %v1347 = vadd.s32 %v1342, %v1346
      %v1348 = vadd.s32 %v1347, 536870912
      %v1349 = vshrl.u32 %v1348, 30
      %v1350 = vshll.u32 %v1349, 30
      %v1351 = vsub.s32 %v1347, %v1350
      %vm1352 = vcmp.lt.s32.totalorder %v1351, 0
      %v1353 = vsub.s32 0, %v1351
      %v1354 = vsel %vm1352, %v1353, %v1351
      %v1355 = vclz %v1354
      %v1356 = vsub.s32 %v1355, 2
      %vm1357 = vcmp.gt.s32.totalorder 0, %v1356
      %v1358 = vsel %vm1357, 0, %v1356
      %v1359 = vsub.s32 32, %v1358
      %v1360 = vshll.u32 %v1351, %v1358
      %v1361 = vshrl.u32 %v1343, %v1359
      %v1362 = vor.u32 %v1360, %v1361
      %v1363 = vsub.s32 4294967266, %v1358
      %v1364 = vadd.s32 %v1363, 127
      %v1365 = vshll.u32 %v1364, 23
      %v1366 = vor.u32 4788187, %v1365
      %v1367 = vand.u32 2147483647, %v1366
      %v1369 = vcvt.s32.f32 %v1362
      %v1370 = vmul.f32 %v1369, %v1367
      %v1371 = vxor.u32 %v1370, 2147483648
      %v1372 = vsel %vm1289, %v1371, %v1370
      %v1373 = vsub.s32 4, %v1349
      %v1374 = vsel %vm1289, %v1373, %v1349
      %v1375 = vsel %vm1288, %v447, %v1372
      %v1376 = vsel %vm1288, 0, %v1374
      %v1377 = vcosq.f32.pop %v1375
      %v1378 = vsinq.f32.pop %v1375
      %vm1379 = vweird.f32 %v447
      %v1380 = vadd.s32 %v1376, 3
      %v1381 = vand.u32 %v1380, 3
      %vm1382 = vcmp.lt.s32.totalorder %v1381, 2
      %vm1383 = vcmp.eq.s32.totalorder %v1381, 0
      %v1384 = vxor.u32 %v1378, 2147483648
      %v1385 = vsel %vm1383, %v1377, %v1384
      %vm1386 = vcmp.eq.s32.totalorder %v1381, 2
      %v1387 = vxor.u32 %v1377, 2147483648
      %v1388 = vsel %vm1386, %v1387, %v1378
      %v1389 = vsel %vm1382, %v1385, %v1388
      %v1390 = vsel %vm1379, nan, %v1389
      %v1391 = vand.u32 2147483647, %v448
      %vm1392 = vcmp.le.f32.partialorder %v1391, 0.7853982
      %vm1393 = vcmp.lt.s32.totalorder %v448, 0
      %v1394 = vand.u32 %v448, 2139095040
      %v1395 = vshrl.u32 %v1394, 23
      %v1396 = vsub.s32 %v1395, 127
      %v1397 = vand.u32 2147483647, %v448
      %v1398 = vand.u32 %v1397, 8388607
      %v1399 = vor.u32 %v1398, 8388608
      %v1400 = vsub.s32 0, %v1399
      %v1401 = vadd.s32 %v1396, 1
      %vm1402 = vcmp.gt.s32.totalorder %v1401, 0
      %v1403 = vsel %vm1402, %v1401, 0
      %v1404 = vshrl.u32 %v1403, 5
      %v1405 = vand.u32 %v1403, 31
      %v1406 = vsub.s32 32, %v1405
      %v1407 = vshrl.u32 683565275, %v1406
      %v1408 = vshll.u32 683565275, %v1405
      %v1409 = vshrl.u32 2475754826, %v1406
      %v1410 = vor.u32 %v1408, %v1409
      %v1411 = vshll.u32 2475754826, %v1405
      %v1412 = vshrl.u32 2131351028, %v1406
      %v1413 = vor.u32 %v1411, %v1412
      %v1414 = vshll.u32 2131351028, %v1405
      %v1415 = vshrl.u32 2102212464, %v1406
      %v1416 = vor.u32 %v1414, %v1415
      %v1417 = vshll.u32 2102212464, %v1405
      %v1418 = vshrl.u32 920167782, %v1406
      %v1419 = vor.u32 %v1417, %v1418
      %v1420 = vshll.u32 920167782, %v1405
      %v1421 = vshrl.u32 1326507024, %v1406
      %v1422 = vor.u32 %v1420, %v1421
      %vm1423 = vcmp.lt.s32.totalorder %v1404, 1
      %vm1424 = vcmp.lt.s32.totalorder %v1404, 2
      %vm1425 = vcmp.lt.s32.totalorder %v1404, 3
      %vm1426 = vcmp.lt.s32.totalorder %v1404, 4
      %v1427 = vsel %vm1423, %v1407, %v1410
      %v1428 = vsel %vm1426, %v1416, 2102212464
      %v1429 = vsel %vm1425, %v1413, %v1428
      %v1430 = vsel %vm1424, %v1427, %v1429
      %v1431 = vsel %vm1423, %v1410, %v1413
      %v1432 = vsel %vm1426, %v1419, 920167782
      %v1433 = vsel %vm1425, %v1416, %v1432
      %v1434 = vsel %vm1424, %v1431, %v1433
      %v1435 = vsel %vm1423, %v1413, %v1416
      %v1436 = vsel %vm1426, %v1422, 1326507024
      %v1437 = vsel %vm1425, %v1419, %v1436
      %v1438 = vsel %vm1424, %v1435, %v1437
      %v1439 = vshll.u32 %v1399, 8
      %v1440 = vmul.u32.u64.compose %v1439, %v1438
      %v1441 = vextract.low.u32 %v1440
      %v1442 = vextract.high.u32 %v1440
      %v1443 = vmul.u32.u64.compose %v1439, %v1434
      %v1444 = vextract.low.u32 %v1443
      %v1445 = vextract.high.u32 %v1443
      %v1446 = vmul.u32 %v1439, %v1430
      %v1447 = vadd.s32 %v1442, %v1444
      %vm1448 = vc.u32 %v1442, %v1444
      %v1449 = vadd.s32 %v1445, 1
      %v1450 = vsel %vm1448, %v1449, %v1445
      %v1451 = vadd.s32 %v1446, %v1450
      %v1452 = vadd.s32 %v1451, 536870912
      %v1453 = vshrl.u32 %v1452, 30
      %v1454 = vshll.u32 %v1453, 30
      %v1455 = vsub.s32 %v1451, %v1454
      %vm1456 = vcmp.lt.s32.totalorder %v1455, 0
      %v1457 = vsub.s32 0, %v1455
      %v1458 = vsel %vm1456, %v1457, %v1455
      %v1459 = vclz %v1458
      %v1460 = vsub.s32 %v1459, 2
      %vm1461 = vcmp.gt.s32.totalorder 0, %v1460
      %v1462 = vsel %vm1461, 0, %v1460
      %v1463 = vsub.s32 32, %v1462
      %v1464 = vshll.u32 %v1455, %v1462
      %v1465 = vshrl.u32 %v1447, %v1463
      %v1466 = vor.u32 %v1464, %v1465
      %v1467 = vsub.s32 4294967266, %v1462
      %v1468 = vadd.s32 %v1467, 127
      %v1469 = vshll.u32 %v1468, 23
      %v1470 = vor.u32 4788187, %v1469
      %v1471 = vand.u32 2147483647, %v1470
      %v1473 = vcvt.s32.f32 %v1466
      %v1474 = vmul.f32 %v1473, %v1471
      %v1475 = vxor.u32 %v1474, 2147483648
      %v1476 = vsel %vm1393, %v1475, %v1474
      %v1477 = vsub.s32 4, %v1453
      %v1478 = vsel %vm1393, %v1477, %v1453
      %v1479 = vsel %vm1392, %v448, %v1476
      %v1480 = vsel %vm1392, 0, %v1478
      %v1481 = vcosq.f32.pop %v1479
      %v1482 = vsinq.f32.pop %v1479
      %vm1483 = vweird.f32 %v448
      %v1484 = vadd.s32 %v1480, 3
      %v1485 = vand.u32 %v1484, 3
      %vm1486 = vcmp.lt.s32.totalorder %v1485, 2
      %vm1487 = vcmp.eq.s32.totalorder %v1485, 0
      %v1488 = vxor.u32 %v1482, 2147483648
      %v1489 = vsel %vm1487, %v1481, %v1488
      %vm1490 = vcmp.eq.s32.totalorder %v1485, 2
      %v1491 = vxor.u32 %v1481, 2147483648
      %v1492 = vsel %vm1490, %v1491, %v1482
      %v1493 = vsel %vm1486, %v1489, %v1492
      %v1494 = vsel %vm1483, nan, %v1493
      %v1495 = vand.u32 2147483647, %v449
      %vm1496 = vcmp.le.f32.partialorder %v1495, 0.7853982
      %vm1497 = vcmp.lt.s32.totalorder %v449, 0
      %v1498 = vand.u32 %v449, 2139095040
      %v1499 = vshrl.u32 %v1498, 23
      %v1500 = vsub.s32 %v1499, 127
      %v1501 = vand.u32 2147483647, %v449
      %v1502 = vand.u32 %v1501, 8388607
      %v1503 = vor.u32 %v1502, 8388608
      %v1504 = vsub.s32 0, %v1503
      %v1505 = vadd.s32 %v1500, 1
      %vm1506 = vcmp.gt.s32.totalorder %v1505, 0
      %v1507 = vsel %vm1506, %v1505, 0
      %v1508 = vshrl.u32 %v1507, 5
      %v1509 = vand.u32 %v1507, 31
      %v1510 = vsub.s32 32, %v1509
      %v1511 = vshrl.u32 683565275, %v1510
      %v1512 = vshll.u32 683565275, %v1509
      %v1513 = vshrl.u32 2475754826, %v1510
      %v1514 = vor.u32 %v1512, %v1513
      %v1515 = vshll.u32 2475754826, %v1509
      %v1516 = vshrl.u32 2131351028, %v1510
      %v1517 = vor.u32 %v1515, %v1516
      %v1518 = vshll.u32 2131351028, %v1509
      %v1519 = vshrl.u32 2102212464, %v1510
      %v1520 = vor.u32 %v1518, %v1519
      %v1521 = vshll.u32 2102212464, %v1509
      %v1522 = vshrl.u32 920167782, %v1510
      %v1523 = vor.u32 %v1521, %v1522
      %v1524 = vshll.u32 920167782, %v1509
      %v1525 = vshrl.u32 1326507024, %v1510
      %v1526 = vor.u32 %v1524, %v1525
      %vm1527 = vcmp.lt.s32.totalorder %v1508, 1
      %vm1528 = vcmp.lt.s32.totalorder %v1508, 2
      %vm1529 = vcmp.lt.s32.totalorder %v1508, 3
      %vm1530 = vcmp.lt.s32.totalorder %v1508, 4
      %v1531 = vsel %vm1527, %v1511, %v1514
      %v1532 = vsel %vm1530, %v1520, 2102212464
      %v1533 = vsel %vm1529, %v1517, %v1532
      %v1534 = vsel %vm1528, %v1531, %v1533
      %v1535 = vsel %vm1527, %v1514, %v1517
      %v1536 = vsel %vm1530, %v1523, 920167782
      %v1537 = vsel %vm1529, %v1520, %v1536
      %v1538 = vsel %vm1528, %v1535, %v1537
      %v1539 = vsel %vm1527, %v1517, %v1520
      %v1540 = vsel %vm1530, %v1526, 1326507024
      %v1541 = vsel %vm1529, %v1523, %v1540
      %v1542 = vsel %vm1528, %v1539, %v1541
      %v1543 = vshll.u32 %v1503, 8
      %v1544 = vmul.u32.u64.compose %v1543, %v1542
      %v1545 = vextract.low.u32 %v1544
      %v1546 = vextract.high.u32 %v1544
      %v1547 = vmul.u32.u64.compose %v1543, %v1538
      %v1548 = vextract.low.u32 %v1547
      %v1549 = vextract.high.u32 %v1547
      %v1550 = vmul.u32 %v1543, %v1534
      %v1551 = vadd.s32 %v1546, %v1548
      %vm1552 = vc.u32 %v1546, %v1548
      %v1553 = vadd.s32 %v1549, 1
      %v1554 = vsel %vm1552, %v1553, %v1549
      %v1555 = vadd.s32 %v1550, %v1554
      %v1556 = vadd.s32 %v1555, 536870912
      %v1557 = vshrl.u32 %v1556, 30
      %v1558 = vshll.u32 %v1557, 30
      %v1559 = vsub.s32 %v1555, %v1558
      %vm1560 = vcmp.lt.s32.totalorder %v1559, 0
      %v1561 = vsub.s32 0, %v1559
      %v1562 = vsel %vm1560, %v1561, %v1559
      %v1563 = vclz %v1562
      %v1564 = vsub.s32 %v1563, 2
      %vm1565 = vcmp.gt.s32.totalorder 0, %v1564
      %v1566 = vsel %vm1565, 0, %v1564
      %v1567 = vsub.s32 32, %v1566
      %v1568 = vshll.u32 %v1559, %v1566
      %v1569 = vshrl.u32 %v1551, %v1567
      %v1570 = vor.u32 %v1568, %v1569
      %v1571 = vsub.s32 4294967266, %v1566
      %v1572 = vadd.s32 %v1571, 127
      %v1573 = vshll.u32 %v1572, 23
      %v1574 = vor.u32 4788187, %v1573
      %v1575 = vand.u32 2147483647, %v1574
      %v1577 = vcvt.s32.f32 %v1570
      %v1578 = vmul.f32 %v1577, %v1575
      %v1579 = vxor.u32 %v1578, 2147483648
      %v1580 = vsel %vm1497, %v1579, %v1578
      %v1581 = vsub.s32 4, %v1557
      %v1582 = vsel %vm1497, %v1581, %v1557
      %v1583 = vsel %vm1496, %v449, %v1580
      %v1584 = vsel %vm1496, 0, %v1582
      %v1585 = vcosq.f32.pop %v1583
      %v1586 = vsinq.f32.pop %v1583
      %vm1587 = vweird.f32 %v449
      %v1588 = vadd.s32 %v1584, 3
      %v1589 = vand.u32 %v1588, 3
      %vm1590 = vcmp.lt.s32.totalorder %v1589, 2
      %vm1591 = vcmp.eq.s32.totalorder %v1589, 0
      %v1592 = vxor.u32 %v1586, 2147483648
      %v1593 = vsel %vm1591, %v1585, %v1592
      %vm1594 = vcmp.eq.s32.totalorder %v1589, 2
      %v1595 = vxor.u32 %v1585, 2147483648
      %v1596 = vsel %vm1594, %v1595, %v1586
      %v1597 = vsel %vm1590, %v1593, %v1596
      %v1598 = vsel %vm1587, nan, %v1597
      %v1599 = vand.u32 2147483647, %v450
      %vm1600 = vcmp.le.f32.partialorder %v1599, 0.7853982
      %vm1601 = vcmp.lt.s32.totalorder %v450, 0
      %v1602 = vand.u32 %v450, 2139095040
      %v1603 = vshrl.u32 %v1602, 23
      %v1604 = vsub.s32 %v1603, 127
      %v1605 = vand.u32 2147483647, %v450
      %v1606 = vand.u32 %v1605, 8388607
      %v1607 = vor.u32 %v1606, 8388608
      %v1608 = vsub.s32 0, %v1607
      %v1609 = vadd.s32 %v1604, 1
      %vm1610 = vcmp.gt.s32.totalorder %v1609, 0
      %v1611 = vsel %vm1610, %v1609, 0
      %v1612 = vshrl.u32 %v1611, 5
      %v1613 = vand.u32 %v1611, 31
      %v1614 = vsub.s32 32, %v1613
      %v1615 = vshrl.u32 683565275, %v1614
      %v1616 = vshll.u32 683565275, %v1613
      %v1617 = vshrl.u32 2475754826, %v1614
      %v1618 = vor.u32 %v1616, %v1617
      %v1619 = vshll.u32 2475754826, %v1613
      %v1620 = vshrl.u32 2131351028, %v1614
      %v1621 = vor.u32 %v1619, %v1620
      %v1622 = vshll.u32 2131351028, %v1613
      %v1623 = vshrl.u32 2102212464, %v1614
      %v1624 = vor.u32 %v1622, %v1623
      %v1625 = vshll.u32 2102212464, %v1613
      %v1626 = vshrl.u32 920167782, %v1614
      %v1627 = vor.u32 %v1625, %v1626
      %v1628 = vshll.u32 920167782, %v1613
      %v1629 = vshrl.u32 1326507024, %v1614
      %v1630 = vor.u32 %v1628, %v1629
      %vm1631 = vcmp.lt.s32.totalorder %v1612, 1
      %vm1632 = vcmp.lt.s32.totalorder %v1612, 2
      %vm1633 = vcmp.lt.s32.totalorder %v1612, 3
      %vm1634 = vcmp.lt.s32.totalorder %v1612, 4
      %v1635 = vsel %vm1631, %v1615, %v1618
      %v1636 = vsel %vm1634, %v1624, 2102212464
      %v1637 = vsel %vm1633, %v1621, %v1636
      %v1638 = vsel %vm1632, %v1635, %v1637
      %v1639 = vsel %vm1631, %v1618, %v1621
      %v1640 = vsel %vm1634, %v1627, 920167782
      %v1641 = vsel %vm1633, %v1624, %v1640
      %v1642 = vsel %vm1632, %v1639, %v1641
      %v1643 = vsel %vm1631, %v1621, %v1624
      %v1644 = vsel %vm1634, %v1630, 1326507024
      %v1645 = vsel %vm1633, %v1627, %v1644
      %v1646 = vsel %vm1632, %v1643, %v1645
      %v1647 = vshll.u32 %v1607, 8
      %v1648 = vmul.u32.u64.compose %v1647, %v1646
      %v1649 = vextract.low.u32 %v1648
      %v1650 = vextract.high.u32 %v1648
      %v1651 = vmul.u32.u64.compose %v1647, %v1642
      %v1652 = vextract.low.u32 %v1651
      %v1653 = vextract.high.u32 %v1651
      %v1654 = vmul.u32 %v1647, %v1638
      %v1655 = vadd.s32 %v1650, %v1652
      %vm1656 = vc.u32 %v1650, %v1652
      %v1657 = vadd.s32 %v1653, 1
      %v1658 = vsel %vm1656, %v1657, %v1653
      %v1659 = vadd.s32 %v1654, %v1658
      %v1660 = vadd.s32 %v1659, 536870912
      %v1661 = vshrl.u32 %v1660, 30
      %v1662 = vshll.u32 %v1661, 30
      %v1663 = vsub.s32 %v1659, %v1662
      %vm1664 = vcmp.lt.s32.totalorder %v1663, 0
      %v1665 = vsub.s32 0, %v1663
      %v1666 = vsel %vm1664, %v1665, %v1663
      %v1667 = vclz %v1666
      %v1668 = vsub.s32 %v1667, 2
      %vm1669 = vcmp.gt.s32.totalorder 0, %v1668
      %v1670 = vsel %vm1669, 0, %v1668
      %v1671 = vsub.s32 32, %v1670
      %v1672 = vshll.u32 %v1663, %v1670
      %v1673 = vshrl.u32 %v1655, %v1671
      %v1674 = vor.u32 %v1672, %v1673
      %v1675 = vsub.s32 4294967266, %v1670
      %v1676 = vadd.s32 %v1675, 127
      %v1677 = vshll.u32 %v1676, 23
      %v1678 = vor.u32 4788187, %v1677
      %v1679 = vand.u32 2147483647, %v1678
      %v1681 = vcvt.s32.f32 %v1674
      %v1682 = vmul.f32 %v1681, %v1679
      %v1683 = vxor.u32 %v1682, 2147483648
      %v1684 = vsel %vm1601, %v1683, %v1682
      %v1685 = vsub.s32 4, %v1661
      %v1686 = vsel %vm1601, %v1685, %v1661
      %v1687 = vsel %vm1600, %v450, %v1684
      %v1688 = vsel %vm1600, 0, %v1686
      %v1689 = vcosq.f32.pop %v1687
      %v1690 = vsinq.f32.pop %v1687
      %vm1691 = vweird.f32 %v450
      %v1692 = vadd.s32 %v1688, 3
      %v1693 = vand.u32 %v1692, 3
      %vm1694 = vcmp.lt.s32.totalorder %v1693, 2
      %vm1695 = vcmp.eq.s32.totalorder %v1693, 0
      %v1696 = vxor.u32 %v1690, 2147483648
      %v1697 = vsel %vm1695, %v1689, %v1696
      %vm1698 = vcmp.eq.s32.totalorder %v1693, 2
      %v1699 = vxor.u32 %v1689, 2147483648
      %v1700 = vsel %vm1698, %v1699, %v1690
      %v1701 = vsel %vm1694, %v1697, %v1700
      %v1702 = vsel %vm1691, nan, %v1701
      %v1703 = vand.u32 2147483647, %v451
      %vm1704 = vcmp.le.f32.partialorder %v1703, 0.7853982
      %vm1705 = vcmp.lt.s32.totalorder %v451, 0
      %v1706 = vand.u32 %v451, 2139095040
      %v1707 = vshrl.u32 %v1706, 23
      %v1708 = vsub.s32 %v1707, 127
      %v1709 = vand.u32 2147483647, %v451
      %v1710 = vand.u32 %v1709, 8388607
      %v1711 = vor.u32 %v1710, 8388608
      %v1712 = vsub.s32 0, %v1711
      %v1713 = vadd.s32 %v1708, 1
      %vm1714 = vcmp.gt.s32.totalorder %v1713, 0
      %v1715 = vsel %vm1714, %v1713, 0
      %v1716 = vshrl.u32 %v1715, 5
      %v1717 = vand.u32 %v1715, 31
      %v1718 = vsub.s32 32, %v1717
      %v1719 = vshrl.u32 683565275, %v1718
      %v1720 = vshll.u32 683565275, %v1717
      %v1721 = vshrl.u32 2475754826, %v1718
      %v1722 = vor.u32 %v1720, %v1721
      %v1723 = vshll.u32 2475754826, %v1717
      %v1724 = vshrl.u32 2131351028, %v1718
      %v1725 = vor.u32 %v1723, %v1724
      %v1726 = vshll.u32 2131351028, %v1717
      %v1727 = vshrl.u32 2102212464, %v1718
      %v1728 = vor.u32 %v1726, %v1727
      %v1729 = vshll.u32 2102212464, %v1717
      %v1730 = vshrl.u32 920167782, %v1718
      %v1731 = vor.u32 %v1729, %v1730
      %v1732 = vshll.u32 920167782, %v1717
      %v1733 = vshrl.u32 1326507024, %v1718
      %v1734 = vor.u32 %v1732, %v1733
      %vm1735 = vcmp.lt.s32.totalorder %v1716, 1
      %vm1736 = vcmp.lt.s32.totalorder %v1716, 2
      %vm1737 = vcmp.lt.s32.totalorder %v1716, 3
      %vm1738 = vcmp.lt.s32.totalorder %v1716, 4
      %v1739 = vsel %vm1735, %v1719, %v1722
      %v1740 = vsel %vm1738, %v1728, 2102212464
      %v1741 = vsel %vm1737, %v1725, %v1740
      %v1742 = vsel %vm1736, %v1739, %v1741
      %v1743 = vsel %vm1735, %v1722, %v1725
      %v1744 = vsel %vm1738, %v1731, 920167782
      %v1745 = vsel %vm1737, %v1728, %v1744
      %v1746 = vsel %vm1736, %v1743, %v1745
      %v1747 = vsel %vm1735, %v1725, %v1728
      %v1748 = vsel %vm1738, %v1734, 1326507024
      %v1749 = vsel %vm1737, %v1731, %v1748
      %v1750 = vsel %vm1736, %v1747, %v1749
      %v1751 = vshll.u32 %v1711, 8
      %v1752 = vmul.u32.u64.compose %v1751, %v1750
      %v1753 = vextract.low.u32 %v1752
      %v1754 = vextract.high.u32 %v1752
      %v1755 = vmul.u32.u64.compose %v1751, %v1746
      %v1756 = vextract.low.u32 %v1755
      %v1757 = vextract.high.u32 %v1755
      %v1758 = vmul.u32 %v1751, %v1742
      %v1759 = vadd.s32 %v1754, %v1756
      %vm1760 = vc.u32 %v1754, %v1756
      %v1761 = vadd.s32 %v1757, 1
      %v1762 = vsel %vm1760, %v1761, %v1757
      %v1763 = vadd.s32 %v1758, %v1762
      %v1764 = vadd.s32 %v1763, 536870912
      %v1765 = vshrl.u32 %v1764, 30
      %v1766 = vshll.u32 %v1765, 30
      %v1767 = vsub.s32 %v1763, %v1766
      %vm1768 = vcmp.lt.s32.totalorder %v1767, 0
      %v1769 = vsub.s32 0, %v1767
      %v1770 = vsel %vm1768, %v1769, %v1767
      %v1771 = vclz %v1770
      %v1772 = vsub.s32 %v1771, 2
      %vm1773 = vcmp.gt.s32.totalorder 0, %v1772
      %v1774 = vsel %vm1773, 0, %v1772
      %v1775 = vsub.s32 32, %v1774
      %v1776 = vshll.u32 %v1767, %v1774
      %v1777 = vshrl.u32 %v1759, %v1775
      %v1778 = vor.u32 %v1776, %v1777
      %v1779 = vsub.s32 4294967266, %v1774
      %v1780 = vadd.s32 %v1779, 127
      %v1781 = vshll.u32 %v1780, 23
      %v1782 = vor.u32 4788187, %v1781
      %v1783 = vand.u32 2147483647, %v1782
      %v1785 = vcvt.s32.f32 %v1778
      %v1786 = vmul.f32 %v1785, %v1783
      %v1787 = vxor.u32 %v1786, 2147483648
      %v1788 = vsel %vm1705, %v1787, %v1786
      %v1789 = vsub.s32 4, %v1765
      %v1790 = vsel %vm1705, %v1789, %v1765
      %v1791 = vsel %vm1704, %v451, %v1788
      %v1792 = vsel %vm1704, 0, %v1790
      %v1793 = vcosq.f32.pop %v1791
      %v1794 = vsinq.f32.pop %v1791
      %vm1795 = vweird.f32 %v451
      %v1796 = vadd.s32 %v1792, 3
      %v1797 = vand.u32 %v1796, 3
      %vm1798 = vcmp.lt.s32.totalorder %v1797, 2
      %vm1799 = vcmp.eq.s32.totalorder %v1797, 0
      %v1800 = vxor.u32 %v1794, 2147483648
      %v1801 = vsel %vm1799, %v1793, %v1800
      %vm1802 = vcmp.eq.s32.totalorder %v1797, 2
      %v1803 = vxor.u32 %v1793, 2147483648
      %v1804 = vsel %vm1802, %v1803, %v1794
      %v1805 = vsel %vm1798, %v1801, %v1804
      %v1806 = vsel %vm1795, nan, %v1805
      %v1807 = vand.u32 2147483647, %v452
      %vm1808 = vcmp.le.f32.partialorder %v1807, 0.7853982
      %vm1809 = vcmp.lt.s32.totalorder %v452, 0
      %v1810 = vand.u32 %v452, 2139095040
      %v1811 = vshrl.u32 %v1810, 23
      %v1812 = vsub.s32 %v1811, 127
      %v1813 = vand.u32 2147483647, %v452
      %v1814 = vand.u32 %v1813, 8388607
      %v1815 = vor.u32 %v1814, 8388608
      %v1816 = vsub.s32 0, %v1815
      %v1817 = vadd.s32 %v1812, 1
      %vm1818 = vcmp.gt.s32.totalorder %v1817, 0
      %v1819 = vsel %vm1818, %v1817, 0
      %v1820 = vshrl.u32 %v1819, 5
      %v1821 = vand.u32 %v1819, 31
      %v1822 = vsub.s32 32, %v1821
      %v1823 = vshrl.u32 683565275, %v1822
      %v1824 = vshll.u32 683565275, %v1821
      %v1825 = vshrl.u32 2475754826, %v1822
      %v1826 = vor.u32 %v1824, %v1825
      %v1827 = vshll.u32 2475754826, %v1821
      %v1828 = vshrl.u32 2131351028, %v1822
      %v1829 = vor.u32 %v1827, %v1828
      %v1830 = vshll.u32 2131351028, %v1821
      %v1831 = vshrl.u32 2102212464, %v1822
      %v1832 = vor.u32 %v1830, %v1831
      %v1833 = vshll.u32 2102212464, %v1821
      %v1834 = vshrl.u32 920167782, %v1822
      %v1835 = vor.u32 %v1833, %v1834
      %v1836 = vshll.u32 920167782, %v1821
      %v1837 = vshrl.u32 1326507024, %v1822
      %v1838 = vor.u32 %v1836, %v1837
      %vm1839 = vcmp.lt.s32.totalorder %v1820, 1
      %vm1840 = vcmp.lt.s32.totalorder %v1820, 2
      %vm1841 = vcmp.lt.s32.totalorder %v1820, 3
      %vm1842 = vcmp.lt.s32.totalorder %v1820, 4
      %v1843 = vsel %vm1839, %v1823, %v1826
      %v1844 = vsel %vm1842, %v1832, 2102212464
      %v1845 = vsel %vm1841, %v1829, %v1844
      %v1846 = vsel %vm1840, %v1843, %v1845
      %v1847 = vsel %vm1839, %v1826, %v1829
      %v1848 = vsel %vm1842, %v1835, 920167782
      %v1849 = vsel %vm1841, %v1832, %v1848
      %v1850 = vsel %vm1840, %v1847, %v1849
      %v1851 = vsel %vm1839, %v1829, %v1832
      %v1852 = vsel %vm1842, %v1838, 1326507024
      %v1853 = vsel %vm1841, %v1835, %v1852
      %v1854 = vsel %vm1840, %v1851, %v1853
      %v1855 = vshll.u32 %v1815, 8
      %v1856 = vmul.u32.u64.compose %v1855, %v1854
      %v1857 = vextract.low.u32 %v1856
      %v1858 = vextract.high.u32 %v1856
      %v1859 = vmul.u32.u64.compose %v1855, %v1850
      %v1860 = vextract.low.u32 %v1859
      %v1861 = vextract.high.u32 %v1859
      %v1862 = vmul.u32 %v1855, %v1846
      %v1863 = vadd.s32 %v1858, %v1860
      %vm1864 = vc.u32 %v1858, %v1860
      %v1865 = vadd.s32 %v1861, 1
      %v1866 = vsel %vm1864, %v1865, %v1861
      %v1867 = vadd.s32 %v1862, %v1866
      %v1868 = vadd.s32 %v1867, 536870912
      %v1869 = vshrl.u32 %v1868, 30
      %v1870 = vshll.u32 %v1869, 30
      %v1871 = vsub.s32 %v1867, %v1870
      %vm1872 = vcmp.lt.s32.totalorder %v1871, 0
      %v1873 = vsub.s32 0, %v1871
      %v1874 = vsel %vm1872, %v1873, %v1871
      %v1875 = vclz %v1874
      %v1876 = vsub.s32 %v1875, 2
      %vm1877 = vcmp.gt.s32.totalorder 0, %v1876
      %v1878 = vsel %vm1877, 0, %v1876
      %v1879 = vsub.s32 32, %v1878
      %v1880 = vshll.u32 %v1871, %v1878
      %v1881 = vshrl.u32 %v1863, %v1879
      %v1882 = vor.u32 %v1880, %v1881
      %v1883 = vsub.s32 4294967266, %v1878
      %v1884 = vadd.s32 %v1883, 127
      %v1885 = vshll.u32 %v1884, 23
      %v1886 = vor.u32 4788187, %v1885
      %v1887 = vand.u32 2147483647, %v1886
      %v1889 = vcvt.s32.f32 %v1882
      %v1890 = vmul.f32 %v1889, %v1887
      %v1891 = vxor.u32 %v1890, 2147483648
      %v1892 = vsel %vm1809, %v1891, %v1890
      %v1893 = vsub.s32 4, %v1869
      %v1894 = vsel %vm1809, %v1893, %v1869
      %v1895 = vsel %vm1808, %v452, %v1892
      %v1896 = vsel %vm1808, 0, %v1894
      %v1897 = vcosq.f32.pop %v1895
      %v1898 = vsinq.f32.pop %v1895
      %vm1899 = vweird.f32 %v452
      %v1900 = vadd.s32 %v1896, 3
      %v1901 = vand.u32 %v1900, 3
      %vm1902 = vcmp.lt.s32.totalorder %v1901, 2
      %vm1903 = vcmp.eq.s32.totalorder %v1901, 0
      %v1904 = vxor.u32 %v1898, 2147483648
      %v1905 = vsel %vm1903, %v1897, %v1904
      %vm1906 = vcmp.eq.s32.totalorder %v1901, 2
      %v1907 = vxor.u32 %v1897, 2147483648
      %v1908 = vsel %vm1906, %v1907, %v1898
      %v1909 = vsel %vm1902, %v1905, %v1908
      %v1910 = vsel %vm1899, nan, %v1909
      %v1911 = vand.u32 2147483647, %v453
      %vm1912 = vcmp.le.f32.partialorder %v1911, 0.7853982
      %vm1913 = vcmp.lt.s32.totalorder %v453, 0
      %v1914 = vand.u32 %v453, 2139095040
      %v1915 = vshrl.u32 %v1914, 23
      %v1916 = vsub.s32 %v1915, 127
      %v1917 = vand.u32 2147483647, %v453
      %v1918 = vand.u32 %v1917, 8388607
      %v1919 = vor.u32 %v1918, 8388608
      %v1920 = vsub.s32 0, %v1919
      %v1921 = vadd.s32 %v1916, 1
      %vm1922 = vcmp.gt.s32.totalorder %v1921, 0
      %v1923 = vsel %vm1922, %v1921, 0
      %v1924 = vshrl.u32 %v1923, 5
      %v1925 = vand.u32 %v1923, 31
      %v1926 = vsub.s32 32, %v1925
      %v1927 = vshrl.u32 683565275, %v1926
      %v1928 = vshll.u32 683565275, %v1925
      %v1929 = vshrl.u32 2475754826, %v1926
      %v1930 = vor.u32 %v1928, %v1929
      %v1931 = vshll.u32 2475754826, %v1925
      %v1932 = vshrl.u32 2131351028, %v1926
      %v1933 = vor.u32 %v1931, %v1932
      %v1934 = vshll.u32 2131351028, %v1925
      %v1935 = vshrl.u32 2102212464, %v1926
      %v1936 = vor.u32 %v1934, %v1935
      %v1937 = vshll.u32 2102212464, %v1925
      %v1938 = vshrl.u32 920167782, %v1926
      %v1939 = vor.u32 %v1937, %v1938
      %v1940 = vshll.u32 920167782, %v1925
      %v1941 = vshrl.u32 1326507024, %v1926
      %v1942 = vor.u32 %v1940, %v1941
      %vm1943 = vcmp.lt.s32.totalorder %v1924, 1
      %vm1944 = vcmp.lt.s32.totalorder %v1924, 2
      %vm1945 = vcmp.lt.s32.totalorder %v1924, 3
      %vm1946 = vcmp.lt.s32.totalorder %v1924, 4
      %v1947 = vsel %vm1943, %v1927, %v1930
      %v1948 = vsel %vm1946, %v1936, 2102212464
      %v1949 = vsel %vm1945, %v1933, %v1948
      %v1950 = vsel %vm1944, %v1947, %v1949
      %v1951 = vsel %vm1943, %v1930, %v1933
      %v1952 = vsel %vm1946, %v1939, 920167782
      %v1953 = vsel %vm1945, %v1936, %v1952
      %v1954 = vsel %vm1944, %v1951, %v1953
      %v1955 = vsel %vm1943, %v1933, %v1936
      %v1956 = vsel %vm1946, %v1942, 1326507024
      %v1957 = vsel %vm1945, %v1939, %v1956
      %v1958 = vsel %vm1944, %v1955, %v1957
      %v1959 = vshll.u32 %v1919, 8
      %v1960 = vmul.u32.u64.compose %v1959, %v1958
      %v1961 = vextract.low.u32 %v1960
      %v1962 = vextract.high.u32 %v1960
      %v1963 = vmul.u32.u64.compose %v1959, %v1954
      %v1964 = vextract.low.u32 %v1963
      %v1965 = vextract.high.u32 %v1963
      %v1966 = vmul.u32 %v1959, %v1950
      %v1967 = vadd.s32 %v1962, %v1964
      %vm1968 = vc.u32 %v1962, %v1964
      %v1969 = vadd.s32 %v1965, 1
      %v1970 = vsel %vm1968, %v1969, %v1965
      %v1971 = vadd.s32 %v1966, %v1970
      %v1972 = vadd.s32 %v1971, 536870912
      %v1973 = vshrl.u32 %v1972, 30
      %v1974 = vshll.u32 %v1973, 30
      %v1975 = vsub.s32 %v1971, %v1974
      %vm1976 = vcmp.lt.s32.totalorder %v1975, 0
      %v1977 = vsub.s32 0, %v1975
      %v1978 = vsel %vm1976, %v1977, %v1975
      %v1979 = vclz %v1978
      %v1980 = vsub.s32 %v1979, 2
      %vm1981 = vcmp.gt.s32.totalorder 0, %v1980
      %v1982 = vsel %vm1981, 0, %v1980
      %v1983 = vsub.s32 32, %v1982
      %v1984 = vshll.u32 %v1975, %v1982
      %v1985 = vshrl.u32 %v1967, %v1983
      %v1986 = vor.u32 %v1984, %v1985
      %v1987 = vsub.s32 4294967266, %v1982
      %v1988 = vadd.s32 %v1987, 127
      %v1989 = vshll.u32 %v1988, 23
      %v1990 = vor.u32 4788187, %v1989
      %v1991 = vand.u32 2147483647, %v1990
      %v1993 = vcvt.s32.f32 %v1986
      %v1994 = vmul.f32 %v1993, %v1991
      %v1995 = vxor.u32 %v1994, 2147483648
      %v1996 = vsel %vm1913, %v1995, %v1994
      %v1997 = vsub.s32 4, %v1973
      %v1998 = vsel %vm1913, %v1997, %v1973
      %v1999 = vsel %vm1912, %v453, %v1996
      %v2000 = vsel %vm1912, 0, %v1998
      %v2001 = vcosq.f32.pop %v1999
      %v2002 = vsinq.f32.pop %v1999
      %vm2003 = vweird.f32 %v453
      %v2004 = vadd.s32 %v2000, 3
      %v2005 = vand.u32 %v2004, 3
      %vm2006 = vcmp.lt.s32.totalorder %v2005, 2
      %vm2007 = vcmp.eq.s32.totalorder %v2005, 0
      %v2008 = vxor.u32 %v2002, 2147483648
      %v2009 = vsel %vm2007, %v2001, %v2008
      %vm2010 = vcmp.eq.s32.totalorder %v2005, 2
      %v2011 = vxor.u32 %v2001, 2147483648
      %v2012 = vsel %vm2010, %v2011, %v2002
      %v2013 = vsel %vm2006, %v2009, %v2012
      %v2014 = vsel %vm2003, nan, %v2013
      %v2015 = vand.u32 2147483647, %v454
      %vm2016 = vcmp.le.f32.partialorder %v2015, 0.7853982
      %vm2017 = vcmp.lt.s32.totalorder %v454, 0
      %v2018 = vand.u32 %v454, 2139095040
      %v2019 = vshrl.u32 %v2018, 23
      %v2020 = vsub.s32 %v2019, 127
      %v2021 = vand.u32 2147483647, %v454
      %v2022 = vand.u32 %v2021, 8388607
      %v2023 = vor.u32 %v2022, 8388608
      %v2024 = vsub.s32 0, %v2023
      %v2025 = vadd.s32 %v2020, 1
      %vm2026 = vcmp.gt.s32.totalorder %v2025, 0
      %v2027 = vsel %vm2026, %v2025, 0
      %v2028 = vshrl.u32 %v2027, 5
      %v2029 = vand.u32 %v2027, 31
      %v2030 = vsub.s32 32, %v2029
      %v2031 = vshrl.u32 683565275, %v2030
      %v2032 = vshll.u32 683565275, %v2029
      %v2033 = vshrl.u32 2475754826, %v2030
      %v2034 = vor.u32 %v2032, %v2033
      %v2035 = vshll.u32 2475754826, %v2029
      %v2036 = vshrl.u32 2131351028, %v2030
      %v2037 = vor.u32 %v2035, %v2036
      %v2038 = vshll.u32 2131351028, %v2029
      %v2039 = vshrl.u32 2102212464, %v2030
      %v2040 = vor.u32 %v2038, %v2039
      %v2041 = vshll.u32 2102212464, %v2029
      %v2042 = vshrl.u32 920167782, %v2030
      %v2043 = vor.u32 %v2041, %v2042
      %v2044 = vshll.u32 920167782, %v2029
      %v2045 = vshrl.u32 1326507024, %v2030
      %v2046 = vor.u32 %v2044, %v2045
      %vm2047 = vcmp.lt.s32.totalorder %v2028, 1
      %vm2048 = vcmp.lt.s32.totalorder %v2028, 2
      %vm2049 = vcmp.lt.s32.totalorder %v2028, 3
      %vm2050 = vcmp.lt.s32.totalorder %v2028, 4
      %v2051 = vsel %vm2047, %v2031, %v2034
      %v2052 = vsel %vm2050, %v2040, 2102212464
      %v2053 = vsel %vm2049, %v2037, %v2052
      %v2054 = vsel %vm2048, %v2051, %v2053
      %v2055 = vsel %vm2047, %v2034, %v2037
      %v2056 = vsel %vm2050, %v2043, 920167782
      %v2057 = vsel %vm2049, %v2040, %v2056
      %v2058 = vsel %vm2048, %v2055, %v2057
      %v2059 = vsel %vm2047, %v2037, %v2040
      %v2060 = vsel %vm2050, %v2046, 1326507024
      %v2061 = vsel %vm2049, %v2043, %v2060
      %v2062 = vsel %vm2048, %v2059, %v2061
      %v2063 = vshll.u32 %v2023, 8
      %v2064 = vmul.u32.u64.compose %v2063, %v2062
      %v2065 = vextract.low.u32 %v2064
      %v2066 = vextract.high.u32 %v2064
      %v2067 = vmul.u32.u64.compose %v2063, %v2058
      %v2068 = vextract.low.u32 %v2067
      %v2069 = vextract.high.u32 %v2067
      %v2070 = vmul.u32 %v2063, %v2054
      %v2071 = vadd.s32 %v2066, %v2068
      %vm2072 = vc.u32 %v2066, %v2068
      %v2073 = vadd.s32 %v2069, 1
      %v2074 = vsel %vm2072, %v2073, %v2069
      %v2075 = vadd.s32 %v2070, %v2074
      %v2076 = vadd.s32 %v2075, 536870912
      %v2077 = vshrl.u32 %v2076, 30
      %v2078 = vshll.u32 %v2077, 30
      %v2079 = vsub.s32 %v2075, %v2078
      %vm2080 = vcmp.lt.s32.totalorder %v2079, 0
      %v2081 = vsub.s32 0, %v2079
      %v2082 = vsel %vm2080, %v2081, %v2079
      %v2083 = vclz %v2082
      %v2084 = vsub.s32 %v2083, 2
      %vm2085 = vcmp.gt.s32.totalorder 0, %v2084
      %v2086 = vsel %vm2085, 0, %v2084
      %v2087 = vsub.s32 32, %v2086
      %v2088 = vshll.u32 %v2079, %v2086
      %v2089 = vshrl.u32 %v2071, %v2087
      %v2090 = vor.u32 %v2088, %v2089
      %v2091 = vsub.s32 4294967266, %v2086
      %v2092 = vadd.s32 %v2091, 127
      %v2093 = vshll.u32 %v2092, 23
      %v2094 = vor.u32 4788187, %v2093
      %v2095 = vand.u32 2147483647, %v2094
      %v2097 = vcvt.s32.f32 %v2090
      %v2098 = vmul.f32 %v2097, %v2095
      %v2099 = vxor.u32 %v2098, 2147483648
      %v2100 = vsel %vm2017, %v2099, %v2098
      %v2101 = vsub.s32 4, %v2077
      %v2102 = vsel %vm2017, %v2101, %v2077
      %v2103 = vsel %vm2016, %v454, %v2100
      %v2104 = vsel %vm2016, 0, %v2102
      %v2105 = vcosq.f32.pop %v2103
      %v2106 = vsinq.f32.pop %v2103
      %vm2107 = vweird.f32 %v454
      %v2108 = vadd.s32 %v2104, 3
      %v2109 = vand.u32 %v2108, 3
      %vm2110 = vcmp.lt.s32.totalorder %v2109, 2
      %vm2111 = vcmp.eq.s32.totalorder %v2109, 0
      %v2112 = vxor.u32 %v2106, 2147483648
      %v2113 = vsel %vm2111, %v2105, %v2112
      %vm2114 = vcmp.eq.s32.totalorder %v2109, 2
      %v2115 = vxor.u32 %v2105, 2147483648
      %v2116 = vsel %vm2114, %v2115, %v2106
      %v2117 = vsel %vm2110, %v2113, %v2116
      %v2118 = vsel %vm2107, nan, %v2117
      %vm2119 = vcmask 261120
      %2120 = vst.msk [vmem:[%s207] sm:$0xff] %vm2119, %v558
      %2121 = vst.msk [vmem:[%s207 + $0x8] sm:$0xff] %vm2119, %v662
      %2122 = vst.msk [vmem:[%s207 + $0x10] sm:$0xff] %vm2119, %v766
      %2123 = vst.msk [vmem:[%s207 + $0x18] sm:$0xff] %vm2119, %v870
      %2124 = vst.msk [vmem:[%s207 + $0x20] sm:$0xff] %vm2119, %v974
      %2125 = vst.msk [vmem:[%s207 + $0x28] sm:$0xff] %vm2119, %v1078
      %2126 = vst.msk [vmem:[%s207 + $0x30] sm:$0xff] %vm2119, %v1182
      %2127 = vst.msk [vmem:[%s207 + $0x38] sm:$0xff] %vm2119, %v1286
      %2128 = vst.msk [vmem:[%s207 + $0x40] sm:$0xff] %vm2119, %v1390
      %2129 = vst.msk [vmem:[%s207 + $0x48] sm:$0xff] %vm2119, %v1494
      %2130 = vst.msk [vmem:[%s207 + $0x50] sm:$0xff] %vm2119, %v1598
      %2131 = vst.msk [vmem:[%s207 + $0x58] sm:$0xff] %vm2119, %v1702
      %2132 = vst.msk [vmem:[%s207 + $0x60] sm:$0xff] %vm2119, %v1806
      %2133 = vst.msk [vmem:[%s207 + $0x68] sm:$0xff] %vm2119, %v1910
      %2134 = vst.msk [vmem:[%s207 + $0x70] sm:$0xff] %vm2119, %v2014
      %2135 = vst.msk [vmem:[%s207 + $0x78] sm:$0xff] %vm2119, %v2118
      %s2136 = scalar_lea.vmem %s1, 2
      %v2137 = vld [vmem:[%s2136] sm:$0x3]
      %v2138 = vlaneseq
      %v2139 = vshrl.u32 %v2138, 7
      %v2140 = vsub.s32 0, %v2139
      %v2141 = vrot.slane %v2137, %v2140
      %v2142 = vmul.f32 %v235, %v2141
      %v2143 = vmul.f32 %v240, %v2141
      %v2144 = vmul.f32 %v245, %v2141
      %v2145 = vmul.f32 %v250, %v2141
      %v2146 = vmul.f32 %v255, %v2141
      %v2147 = vmul.f32 %v260, %v2141
      %v2148 = vmul.f32 %v265, %v2141
      %v2149 = vmul.f32 %v270, %v2141
      %v2150 = vmul.f32 %v275, %v2141
      %v2151 = vmul.f32 %v280, %v2141
      %v2152 = vmul.f32 %v285, %v2141
      %v2153 = vmul.f32 %v290, %v2141
      %v2154 = vmul.f32 %v295, %v2141
      %v2155 = vmul.f32 %v300, %v2141
      %v2156 = vmul.f32 %v305, %v2141
      %v2157 = vmul.f32 %v310, %v2141
      %s2158 = scalar_lea.vmem %s2, 1
      %v2159 = vld [vmem:[%s2158] sm:$0x1]
      %v2161 = vlaneseq
      %v2162 = vshrl.u32 %v2161, 7
      %v2163 = vsub.s32 0, %v2162
      %v2164 = vrot.slane %v2159, %v2163
      %v2166 = vadd.f32 %v2142, %v2164
      %v2167 = vadd.f32 %v2143, %v2164
      %v2168 = vadd.f32 %v2144, %v2164
      %v2169 = vadd.f32 %v2145, %v2164
      %v2170 = vadd.f32 %v2146, %v2164
      %v2171 = vadd.f32 %v2147, %v2164
      %v2172 = vadd.f32 %v2148, %v2164
      %v2173 = vadd.f32 %v2149, %v2164
      %v2174 = vadd.f32 %v2150, %v2164
      %v2175 = vadd.f32 %v2151, %v2164
      %v2176 = vadd.f32 %v2152, %v2164
      %v2177 = vadd.f32 %v2153, %v2164
      %v2178 = vadd.f32 %v2154, %v2164
      %v2179 = vadd.f32 %v2155, %v2164
      %v2180 = vadd.f32 %v2156, %v2164
      %v2181 = vadd.f32 %v2157, %v2164
      %v2182 = vlaneseq
      %v2183 = vshrl.u32 %v2182, 7
      %v2184 = vsub.s32 1, %v2183
      %v2185 = vrot.slane %v2137, %v2184
      %v2186 = vmul.f32 %v357, %v2185
      %v2187 = vmul.f32 %v361, %v2185
      %v2188 = vmul.f32 %v365, %v2185
      %v2189 = vmul.f32 %v369, %v2185
      %v2190 = vmul.f32 %v373, %v2185
      %v2191 = vmul.f32 %v377, %v2185
      %v2192 = vmul.f32 %v381, %v2185
      %v2193 = vmul.f32 %v385, %v2185
      %v2194 = vmul.f32 %v389, %v2185
      %v2195 = vmul.f32 %v393, %v2185
      %v2196 = vmul.f32 %v397, %v2185
      %v2197 = vmul.f32 %v401, %v2185
      %v2198 = vmul.f32 %v405, %v2185
      %v2199 = vmul.f32 %v409, %v2185
      %v2200 = vmul.f32 %v413, %v2185
      %v2201 = vmul.f32 %v417, %v2185
      %v2202 = vadd.f32 %v2166, %v2186
      %v2203 = vadd.f32 %v2167, %v2187
      %v2204 = vadd.f32 %v2168, %v2188
      %v2205 = vadd.f32 %v2169, %v2189
      %v2206 = vadd.f32 %v2170, %v2190
      %v2207 = vadd.f32 %v2171, %v2191
      %v2208 = vadd.f32 %v2172, %v2192
      %v2209 = vadd.f32 %v2173, %v2193
      %v2210 = vadd.f32 %v2174, %v2194
      %v2211 = vadd.f32 %v2175, %v2195
      %v2212 = vadd.f32 %v2176, %v2196
      %v2213 = vadd.f32 %v2177, %v2197
      %v2214 = vadd.f32 %v2178, %v2198
      %v2215 = vadd.f32 %v2179, %v2199
      %v2216 = vadd.f32 %v2180, %v2200
      %v2217 = vadd.f32 %v2181, %v2201
      %v2218 = vand.u32 2147483647, %v2202
      %vm2219 = vcmp.le.f32.partialorder %v2218, 0.7853982
      %vm2220 = vcmp.lt.s32.totalorder %v2202, 0
      %v2221 = vand.u32 %v2202, 2139095040
      %v2222 = vshrl.u32 %v2221, 23
      %v2223 = vsub.s32 %v2222, 127
      %v2224 = vand.u32 2147483647, %v2202
      %v2225 = vand.u32 %v2224, 8388607
      %v2226 = vor.u32 %v2225, 8388608
      %v2227 = vsub.s32 0, %v2226
      %v2228 = vadd.s32 %v2223, 1
      %vm2229 = vcmp.gt.s32.totalorder %v2228, 0
      %v2230 = vsel %vm2229, %v2228, 0
      %v2231 = vshrl.u32 %v2230, 5
      %v2232 = vand.u32 %v2230, 31
      %v2233 = vsub.s32 32, %v2232
      %v2234 = vshrl.u32 683565275, %v2233
      %v2235 = vshll.u32 683565275, %v2232
      %v2236 = vshrl.u32 2475754826, %v2233
      %v2237 = vor.u32 %v2235, %v2236
      %v2238 = vshll.u32 2475754826, %v2232
      %v2239 = vshrl.u32 2131351028, %v2233
      %v2240 = vor.u32 %v2238, %v2239
      %v2241 = vshll.u32 2131351028, %v2232
      %v2242 = vshrl.u32 2102212464, %v2233
      %v2243 = vor.u32 %v2241, %v2242
      %v2244 = vshll.u32 2102212464, %v2232
      %v2245 = vshrl.u32 920167782, %v2233
      %v2246 = vor.u32 %v2244, %v2245
      %v2247 = vshll.u32 920167782, %v2232
      %v2248 = vshrl.u32 1326507024, %v2233
      %v2249 = vor.u32 %v2247, %v2248
      %vm2250 = vcmp.lt.s32.totalorder %v2231, 1
      %vm2251 = vcmp.lt.s32.totalorder %v2231, 2
      %vm2252 = vcmp.lt.s32.totalorder %v2231, 3
      %vm2253 = vcmp.lt.s32.totalorder %v2231, 4
      %v2254 = vsel %vm2250, %v2234, %v2237
      %v2255 = vsel %vm2253, %v2243, 2102212464
      %v2256 = vsel %vm2252, %v2240, %v2255
      %v2257 = vsel %vm2251, %v2254, %v2256
      %v2258 = vsel %vm2250, %v2237, %v2240
      %v2259 = vsel %vm2253, %v2246, 920167782
      %v2260 = vsel %vm2252, %v2243, %v2259
      %v2261 = vsel %vm2251, %v2258, %v2260
      %v2262 = vsel %vm2250, %v2240, %v2243
      %v2263 = vsel %vm2253, %v2249, 1326507024
      %v2264 = vsel %vm2252, %v2246, %v2263
      %v2265 = vsel %vm2251, %v2262, %v2264
      %v2266 = vshll.u32 %v2226, 8
      %v2267 = vmul.u32.u64.compose %v2266, %v2265
      %v2268 = vextract.low.u32 %v2267
      %v2269 = vextract.high.u32 %v2267
      %v2270 = vmul.u32.u64.compose %v2266, %v2261
      %v2271 = vextract.low.u32 %v2270
      %v2272 = vextract.high.u32 %v2270
      %v2273 = vmul.u32 %v2266, %v2257
      %v2274 = vadd.s32 %v2269, %v2271
      %vm2275 = vc.u32 %v2269, %v2271
      %v2276 = vadd.s32 %v2272, 1
      %v2277 = vsel %vm2275, %v2276, %v2272
      %v2278 = vadd.s32 %v2273, %v2277
      %v2279 = vadd.s32 %v2278, 536870912
      %v2280 = vshrl.u32 %v2279, 30
      %v2281 = vshll.u32 %v2280, 30
      %v2282 = vsub.s32 %v2278, %v2281
      %vm2283 = vcmp.lt.s32.totalorder %v2282, 0
      %v2284 = vsub.s32 0, %v2282
      %v2285 = vsel %vm2283, %v2284, %v2282
      %v2286 = vclz %v2285
      %v2287 = vsub.s32 %v2286, 2
      %vm2288 = vcmp.gt.s32.totalorder 0, %v2287
      %v2289 = vsel %vm2288, 0, %v2287
      %v2290 = vsub.s32 32, %v2289
      %v2291 = vshll.u32 %v2282, %v2289
      %v2292 = vshrl.u32 %v2274, %v2290
      %v2293 = vor.u32 %v2291, %v2292
      %v2294 = vsub.s32 4294967266, %v2289
      %v2295 = vadd.s32 %v2294, 127
      %v2296 = vshll.u32 %v2295, 23
      %v2297 = vor.u32 4788187, %v2296
      %v2298 = vand.u32 2147483647, %v2297
      %v2300 = vcvt.s32.f32 %v2293
      %v2301 = vmul.f32 %v2300, %v2298
      %v2302 = vxor.u32 %v2301, 2147483648
      %v2303 = vsel %vm2220, %v2302, %v2301
      %v2304 = vsub.s32 4, %v2280
      %v2305 = vsel %vm2220, %v2304, %v2280
      %v2306 = vsel %vm2219, %v2202, %v2303
      %v2307 = vsel %vm2219, 0, %v2305
      %v2308 = vcosq.f32.pop %v2306
      %v2309 = vsinq.f32.pop %v2306
      %vm2310 = vweird.f32 %v2202
      %v2311 = vadd.s32 %v2307, 3
      %v2312 = vand.u32 %v2311, 3
      %vm2313 = vcmp.lt.s32.totalorder %v2312, 2
      %vm2314 = vcmp.eq.s32.totalorder %v2312, 0
      %v2315 = vxor.u32 %v2309, 2147483648
      %v2316 = vsel %vm2314, %v2308, %v2315
      %vm2317 = vcmp.eq.s32.totalorder %v2312, 2
      %v2318 = vxor.u32 %v2308, 2147483648
      %v2319 = vsel %vm2317, %v2318, %v2309
      %v2320 = vsel %vm2313, %v2316, %v2319
      %v2321 = vsel %vm2310, nan, %v2320
      %v2322 = vand.u32 2147483647, %v2203
      %vm2323 = vcmp.le.f32.partialorder %v2322, 0.7853982
      %vm2324 = vcmp.lt.s32.totalorder %v2203, 0
      %v2325 = vand.u32 %v2203, 2139095040
      %v2326 = vshrl.u32 %v2325, 23
      %v2327 = vsub.s32 %v2326, 127
      %v2328 = vand.u32 2147483647, %v2203
      %v2329 = vand.u32 %v2328, 8388607
      %v2330 = vor.u32 %v2329, 8388608
      %v2331 = vsub.s32 0, %v2330
      %v2332 = vadd.s32 %v2327, 1
      %vm2333 = vcmp.gt.s32.totalorder %v2332, 0
      %v2334 = vsel %vm2333, %v2332, 0
      %v2335 = vshrl.u32 %v2334, 5
      %v2336 = vand.u32 %v2334, 31
      %v2337 = vsub.s32 32, %v2336
      %v2338 = vshrl.u32 683565275, %v2337
      %v2339 = vshll.u32 683565275, %v2336
      %v2340 = vshrl.u32 2475754826, %v2337
      %v2341 = vor.u32 %v2339, %v2340
      %v2342 = vshll.u32 2475754826, %v2336
      %v2343 = vshrl.u32 2131351028, %v2337
      %v2344 = vor.u32 %v2342, %v2343
      %v2345 = vshll.u32 2131351028, %v2336
      %v2346 = vshrl.u32 2102212464, %v2337
      %v2347 = vor.u32 %v2345, %v2346
      %v2348 = vshll.u32 2102212464, %v2336
      %v2349 = vshrl.u32 920167782, %v2337
      %v2350 = vor.u32 %v2348, %v2349
      %v2351 = vshll.u32 920167782, %v2336
      %v2352 = vshrl.u32 1326507024, %v2337
      %v2353 = vor.u32 %v2351, %v2352
      %vm2354 = vcmp.lt.s32.totalorder %v2335, 1
      %vm2355 = vcmp.lt.s32.totalorder %v2335, 2
      %vm2356 = vcmp.lt.s32.totalorder %v2335, 3
      %vm2357 = vcmp.lt.s32.totalorder %v2335, 4
      %v2358 = vsel %vm2354, %v2338, %v2341
      %v2359 = vsel %vm2357, %v2347, 2102212464
      %v2360 = vsel %vm2356, %v2344, %v2359
      %v2361 = vsel %vm2355, %v2358, %v2360
      %v2362 = vsel %vm2354, %v2341, %v2344
      %v2363 = vsel %vm2357, %v2350, 920167782
      %v2364 = vsel %vm2356, %v2347, %v2363
      %v2365 = vsel %vm2355, %v2362, %v2364
      %v2366 = vsel %vm2354, %v2344, %v2347
      %v2367 = vsel %vm2357, %v2353, 1326507024
      %v2368 = vsel %vm2356, %v2350, %v2367
      %v2369 = vsel %vm2355, %v2366, %v2368
      %v2370 = vshll.u32 %v2330, 8
      %v2371 = vmul.u32.u64.compose %v2370, %v2369
      %v2372 = vextract.low.u32 %v2371
      %v2373 = vextract.high.u32 %v2371
      %v2374 = vmul.u32.u64.compose %v2370, %v2365
      %v2375 = vextract.low.u32 %v2374
      %v2376 = vextract.high.u32 %v2374
      %v2377 = vmul.u32 %v2370, %v2361
      %v2378 = vadd.s32 %v2373, %v2375
      %vm2379 = vc.u32 %v2373, %v2375
      %v2380 = vadd.s32 %v2376, 1
      %v2381 = vsel %vm2379, %v2380, %v2376
      %v2382 = vadd.s32 %v2377, %v2381
      %v2383 = vadd.s32 %v2382, 536870912
      %v2384 = vshrl.u32 %v2383, 30
      %v2385 = vshll.u32 %v2384, 30
      %v2386 = vsub.s32 %v2382, %v2385
      %vm2387 = vcmp.lt.s32.totalorder %v2386, 0
      %v2388 = vsub.s32 0, %v2386
      %v2389 = vsel %vm2387, %v2388, %v2386
      %v2390 = vclz %v2389
      %v2391 = vsub.s32 %v2390, 2
      %vm2392 = vcmp.gt.s32.totalorder 0, %v2391
      %v2393 = vsel %vm2392, 0, %v2391
      %v2394 = vsub.s32 32, %v2393
      %v2395 = vshll.u32 %v2386, %v2393
      %v2396 = vshrl.u32 %v2378, %v2394
      %v2397 = vor.u32 %v2395, %v2396
      %v2398 = vsub.s32 4294967266, %v2393
      %v2399 = vadd.s32 %v2398, 127
      %v2400 = vshll.u32 %v2399, 23
      %v2401 = vor.u32 4788187, %v2400
      %v2402 = vand.u32 2147483647, %v2401
      %v2404 = vcvt.s32.f32 %v2397
      %v2405 = vmul.f32 %v2404, %v2402
      %v2406 = vxor.u32 %v2405, 2147483648
      %v2407 = vsel %vm2324, %v2406, %v2405
      %v2408 = vsub.s32 4, %v2384
      %v2409 = vsel %vm2324, %v2408, %v2384
      %v2410 = vsel %vm2323, %v2203, %v2407
      %v2411 = vsel %vm2323, 0, %v2409
      %v2412 = vcosq.f32.pop %v2410
      %v2413 = vsinq.f32.pop %v2410
      %vm2414 = vweird.f32 %v2203
      %v2415 = vadd.s32 %v2411, 3
      %v2416 = vand.u32 %v2415, 3
      %vm2417 = vcmp.lt.s32.totalorder %v2416, 2
      %vm2418 = vcmp.eq.s32.totalorder %v2416, 0
      %v2419 = vxor.u32 %v2413, 2147483648
      %v2420 = vsel %vm2418, %v2412, %v2419
      %vm2421 = vcmp.eq.s32.totalorder %v2416, 2
      %v2422 = vxor.u32 %v2412, 2147483648
      %v2423 = vsel %vm2421, %v2422, %v2413
      %v2424 = vsel %vm2417, %v2420, %v2423
      %v2425 = vsel %vm2414, nan, %v2424
      %v2426 = vand.u32 2147483647, %v2204
      %vm2427 = vcmp.le.f32.partialorder %v2426, 0.7853982
      %vm2428 = vcmp.lt.s32.totalorder %v2204, 0
      %v2429 = vand.u32 %v2204, 2139095040
      %v2430 = vshrl.u32 %v2429, 23
      %v2431 = vsub.s32 %v2430, 127
      %v2432 = vand.u32 2147483647, %v2204
      %v2433 = vand.u32 %v2432, 8388607
      %v2434 = vor.u32 %v2433, 8388608
      %v2435 = vsub.s32 0, %v2434
      %v2436 = vadd.s32 %v2431, 1
      %vm2437 = vcmp.gt.s32.totalorder %v2436, 0
      %v2438 = vsel %vm2437, %v2436, 0
      %v2439 = vshrl.u32 %v2438, 5
      %v2440 = vand.u32 %v2438, 31
      %v2441 = vsub.s32 32, %v2440
      %v2442 = vshrl.u32 683565275, %v2441
      %v2443 = vshll.u32 683565275, %v2440
      %v2444 = vshrl.u32 2475754826, %v2441
      %v2445 = vor.u32 %v2443, %v2444
      %v2446 = vshll.u32 2475754826, %v2440
      %v2447 = vshrl.u32 2131351028, %v2441
      %v2448 = vor.u32 %v2446, %v2447
      %v2449 = vshll.u32 2131351028, %v2440
      %v2450 = vshrl.u32 2102212464, %v2441
      %v2451 = vor.u32 %v2449, %v2450
      %v2452 = vshll.u32 2102212464, %v2440
      %v2453 = vshrl.u32 920167782, %v2441
      %v2454 = vor.u32 %v2452, %v2453
      %v2455 = vshll.u32 920167782, %v2440
      %v2456 = vshrl.u32 1326507024, %v2441
      %v2457 = vor.u32 %v2455, %v2456
      %vm2458 = vcmp.lt.s32.totalorder %v2439, 1
      %vm2459 = vcmp.lt.s32.totalorder %v2439, 2
      %vm2460 = vcmp.lt.s32.totalorder %v2439, 3
      %vm2461 = vcmp.lt.s32.totalorder %v2439, 4
      %v2462 = vsel %vm2458, %v2442, %v2445
      %v2463 = vsel %vm2461, %v2451, 2102212464
      %v2464 = vsel %vm2460, %v2448, %v2463
      %v2465 = vsel %vm2459, %v2462, %v2464
      %v2466 = vsel %vm2458, %v2445, %v2448
      %v2467 = vsel %vm2461, %v2454, 920167782
      %v2468 = vsel %vm2460, %v2451, %v2467
      %v2469 = vsel %vm2459, %v2466, %v2468
      %v2470 = vsel %vm2458, %v2448, %v2451
      %v2471 = vsel %vm2461, %v2457, 1326507024
      %v2472 = vsel %vm2460, %v2454, %v2471
      %v2473 = vsel %vm2459, %v2470, %v2472
      %v2474 = vshll.u32 %v2434, 8
      %v2475 = vmul.u32.u64.compose %v2474, %v2473
      %v2476 = vextract.low.u32 %v2475
      %v2477 = vextract.high.u32 %v2475
      %v2478 = vmul.u32.u64.compose %v2474, %v2469
      %v2479 = vextract.low.u32 %v2478
      %v2480 = vextract.high.u32 %v2478
      %v2481 = vmul.u32 %v2474, %v2465
      %v2482 = vadd.s32 %v2477, %v2479
      %vm2483 = vc.u32 %v2477, %v2479
      %v2484 = vadd.s32 %v2480, 1
      %v2485 = vsel %vm2483, %v2484, %v2480
      %v2486 = vadd.s32 %v2481, %v2485
      %v2487 = vadd.s32 %v2486, 536870912
      %v2488 = vshrl.u32 %v2487, 30
      %v2489 = vshll.u32 %v2488, 30
      %v2490 = vsub.s32 %v2486, %v2489
      %vm2491 = vcmp.lt.s32.totalorder %v2490, 0
      %v2492 = vsub.s32 0, %v2490
      %v2493 = vsel %vm2491, %v2492, %v2490
      %v2494 = vclz %v2493
      %v2495 = vsub.s32 %v2494, 2
      %vm2496 = vcmp.gt.s32.totalorder 0, %v2495
      %v2497 = vsel %vm2496, 0, %v2495
      %v2498 = vsub.s32 32, %v2497
      %v2499 = vshll.u32 %v2490, %v2497
      %v2500 = vshrl.u32 %v2482, %v2498
      %v2501 = vor.u32 %v2499, %v2500
      %v2502 = vsub.s32 4294967266, %v2497
      %v2503 = vadd.s32 %v2502, 127
      %v2504 = vshll.u32 %v2503, 23
      %v2505 = vor.u32 4788187, %v2504
      %v2506 = vand.u32 2147483647, %v2505
      %v2508 = vcvt.s32.f32 %v2501
      %v2509 = vmul.f32 %v2508, %v2506
      %v2510 = vxor.u32 %v2509, 2147483648
      %v2511 = vsel %vm2428, %v2510, %v2509
      %v2512 = vsub.s32 4, %v2488
      %v2513 = vsel %vm2428, %v2512, %v2488
      %v2514 = vsel %vm2427, %v2204, %v2511
      %v2515 = vsel %vm2427, 0, %v2513
      %v2516 = vcosq.f32.pop %v2514
      %v2517 = vsinq.f32.pop %v2514
      %vm2518 = vweird.f32 %v2204
      %v2519 = vadd.s32 %v2515, 3
      %v2520 = vand.u32 %v2519, 3
      %vm2521 = vcmp.lt.s32.totalorder %v2520, 2
      %vm2522 = vcmp.eq.s32.totalorder %v2520, 0
      %v2523 = vxor.u32 %v2517, 2147483648
      %v2524 = vsel %vm2522, %v2516, %v2523
      %vm2525 = vcmp.eq.s32.totalorder %v2520, 2
      %v2526 = vxor.u32 %v2516, 2147483648
      %v2527 = vsel %vm2525, %v2526, %v2517
      %v2528 = vsel %vm2521, %v2524, %v2527
      %v2529 = vsel %vm2518, nan, %v2528
      %v2530 = vand.u32 2147483647, %v2205
      %vm2531 = vcmp.le.f32.partialorder %v2530, 0.7853982
      %vm2532 = vcmp.lt.s32.totalorder %v2205, 0
      %v2533 = vand.u32 %v2205, 2139095040
      %v2534 = vshrl.u32 %v2533, 23
      %v2535 = vsub.s32 %v2534, 127
      %v2536 = vand.u32 2147483647, %v2205
      %v2537 = vand.u32 %v2536, 8388607
      %v2538 = vor.u32 %v2537, 8388608
      %v2539 = vsub.s32 0, %v2538
      %v2540 = vadd.s32 %v2535, 1
      %vm2541 = vcmp.gt.s32.totalorder %v2540, 0
      %v2542 = vsel %vm2541, %v2540, 0
      %v2543 = vshrl.u32 %v2542, 5
      %v2544 = vand.u32 %v2542, 31
      %v2545 = vsub.s32 32, %v2544
      %v2546 = vshrl.u32 683565275, %v2545
      %v2547 = vshll.u32 683565275, %v2544
      %v2548 = vshrl.u32 2475754826, %v2545
      %v2549 = vor.u32 %v2547, %v2548
      %v2550 = vshll.u32 2475754826, %v2544
      %v2551 = vshrl.u32 2131351028, %v2545
      %v2552 = vor.u32 %v2550, %v2551
      %v2553 = vshll.u32 2131351028, %v2544
      %v2554 = vshrl.u32 2102212464, %v2545
      %v2555 = vor.u32 %v2553, %v2554
      %v2556 = vshll.u32 2102212464, %v2544
      %v2557 = vshrl.u32 920167782, %v2545
      %v2558 = vor.u32 %v2556, %v2557
      %v2559 = vshll.u32 920167782, %v2544
      %v2560 = vshrl.u32 1326507024, %v2545
      %v2561 = vor.u32 %v2559, %v2560
      %vm2562 = vcmp.lt.s32.totalorder %v2543, 1
      %vm2563 = vcmp.lt.s32.totalorder %v2543, 2
      %vm2564 = vcmp.lt.s32.totalorder %v2543, 3
      %vm2565 = vcmp.lt.s32.totalorder %v2543, 4
      %v2566 = vsel %vm2562, %v2546, %v2549
      %v2567 = vsel %vm2565, %v2555, 2102212464
      %v2568 = vsel %vm2564, %v2552, %v2567
      %v2569 = vsel %vm2563, %v2566, %v2568
      %v2570 = vsel %vm2562, %v2549, %v2552
      %v2571 = vsel %vm2565, %v2558, 920167782
      %v2572 = vsel %vm2564, %v2555, %v2571
      %v2573 = vsel %vm2563, %v2570, %v2572
      %v2574 = vsel %vm2562, %v2552, %v2555
      %v2575 = vsel %vm2565, %v2561, 1326507024
      %v2576 = vsel %vm2564, %v2558, %v2575
      %v2577 = vsel %vm2563, %v2574, %v2576
      %v2578 = vshll.u32 %v2538, 8
      %v2579 = vmul.u32.u64.compose %v2578, %v2577
      %v2580 = vextract.low.u32 %v2579
      %v2581 = vextract.high.u32 %v2579
      %v2582 = vmul.u32.u64.compose %v2578, %v2573
      %v2583 = vextract.low.u32 %v2582
      %v2584 = vextract.high.u32 %v2582
      %v2585 = vmul.u32 %v2578, %v2569
      %v2586 = vadd.s32 %v2581, %v2583
      %vm2587 = vc.u32 %v2581, %v2583
      %v2588 = vadd.s32 %v2584, 1
      %v2589 = vsel %vm2587, %v2588, %v2584
      %v2590 = vadd.s32 %v2585, %v2589
      %v2591 = vadd.s32 %v2590, 536870912
      %v2592 = vshrl.u32 %v2591, 30
      %v2593 = vshll.u32 %v2592, 30
      %v2594 = vsub.s32 %v2590, %v2593
      %vm2595 = vcmp.lt.s32.totalorder %v2594, 0
      %v2596 = vsub.s32 0, %v2594
      %v2597 = vsel %vm2595, %v2596, %v2594
      %v2598 = vclz %v2597
      %v2599 = vsub.s32 %v2598, 2
      %vm2600 = vcmp.gt.s32.totalorder 0, %v2599
      %v2601 = vsel %vm2600, 0, %v2599
      %v2602 = vsub.s32 32, %v2601
      %v2603 = vshll.u32 %v2594, %v2601
      %v2604 = vshrl.u32 %v2586, %v2602
      %v2605 = vor.u32 %v2603, %v2604
      %v2606 = vsub.s32 4294967266, %v2601
      %v2607 = vadd.s32 %v2606, 127
      %v2608 = vshll.u32 %v2607, 23
      %v2609 = vor.u32 4788187, %v2608
      %v2610 = vand.u32 2147483647, %v2609
      %v2612 = vcvt.s32.f32 %v2605
      %v2613 = vmul.f32 %v2612, %v2610
      %v2614 = vxor.u32 %v2613, 2147483648
      %v2615 = vsel %vm2532, %v2614, %v2613
      %v2616 = vsub.s32 4, %v2592
      %v2617 = vsel %vm2532, %v2616, %v2592
      %v2618 = vsel %vm2531, %v2205, %v2615
      %v2619 = vsel %vm2531, 0, %v2617
      %v2620 = vcosq.f32.pop %v2618
      %v2621 = vsinq.f32.pop %v2618
      %vm2622 = vweird.f32 %v2205
      %v2623 = vadd.s32 %v2619, 3
      %v2624 = vand.u32 %v2623, 3
      %vm2625 = vcmp.lt.s32.totalorder %v2624, 2
      %vm2626 = vcmp.eq.s32.totalorder %v2624, 0
      %v2627 = vxor.u32 %v2621, 2147483648
      %v2628 = vsel %vm2626, %v2620, %v2627
      %vm2629 = vcmp.eq.s32.totalorder %v2624, 2
      %v2630 = vxor.u32 %v2620, 2147483648
      %v2631 = vsel %vm2629, %v2630, %v2621
      %v2632 = vsel %vm2625, %v2628, %v2631
      %v2633 = vsel %vm2622, nan, %v2632
      %v2634 = vand.u32 2147483647, %v2206
      %vm2635 = vcmp.le.f32.partialorder %v2634, 0.7853982
      %vm2636 = vcmp.lt.s32.totalorder %v2206, 0
      %v2637 = vand.u32 %v2206, 2139095040
      %v2638 = vshrl.u32 %v2637, 23
      %v2639 = vsub.s32 %v2638, 127
      %v2640 = vand.u32 2147483647, %v2206
      %v2641 = vand.u32 %v2640, 8388607
      %v2642 = vor.u32 %v2641, 8388608
      %v2643 = vsub.s32 0, %v2642
      %v2644 = vadd.s32 %v2639, 1
      %vm2645 = vcmp.gt.s32.totalorder %v2644, 0
      %v2646 = vsel %vm2645, %v2644, 0
      %v2647 = vshrl.u32 %v2646, 5
      %v2648 = vand.u32 %v2646, 31
      %v2649 = vsub.s32 32, %v2648
      %v2650 = vshrl.u32 683565275, %v2649
      %v2651 = vshll.u32 683565275, %v2648
      %v2652 = vshrl.u32 2475754826, %v2649
      %v2653 = vor.u32 %v2651, %v2652
      %v2654 = vshll.u32 2475754826, %v2648
      %v2655 = vshrl.u32 2131351028, %v2649
      %v2656 = vor.u32 %v2654, %v2655
      %v2657 = vshll.u32 2131351028, %v2648
      %v2658 = vshrl.u32 2102212464, %v2649
      %v2659 = vor.u32 %v2657, %v2658
      %v2660 = vshll.u32 2102212464, %v2648
      %v2661 = vshrl.u32 920167782, %v2649
      %v2662 = vor.u32 %v2660, %v2661
      %v2663 = vshll.u32 920167782, %v2648
      %v2664 = vshrl.u32 1326507024, %v2649
      %v2665 = vor.u32 %v2663, %v2664
      %vm2666 = vcmp.lt.s32.totalorder %v2647, 1
      %vm2667 = vcmp.lt.s32.totalorder %v2647, 2
      %vm2668 = vcmp.lt.s32.totalorder %v2647, 3
      %vm2669 = vcmp.lt.s32.totalorder %v2647, 4
      %v2670 = vsel %vm2666, %v2650, %v2653
      %v2671 = vsel %vm2669, %v2659, 2102212464
      %v2672 = vsel %vm2668, %v2656, %v2671
      %v2673 = vsel %vm2667, %v2670, %v2672
      %v2674 = vsel %vm2666, %v2653, %v2656
      %v2675 = vsel %vm2669, %v2662, 920167782
      %v2676 = vsel %vm2668, %v2659, %v2675
      %v2677 = vsel %vm2667, %v2674, %v2676
      %v2678 = vsel %vm2666, %v2656, %v2659
      %v2679 = vsel %vm2669, %v2665, 1326507024
      %v2680 = vsel %vm2668, %v2662, %v2679
      %v2681 = vsel %vm2667, %v2678, %v2680
      %v2682 = vshll.u32 %v2642, 8
      %v2683 = vmul.u32.u64.compose %v2682, %v2681
      %v2684 = vextract.low.u32 %v2683
      %v2685 = vextract.high.u32 %v2683
      %v2686 = vmul.u32.u64.compose %v2682, %v2677
      %v2687 = vextract.low.u32 %v2686
      %v2688 = vextract.high.u32 %v2686
      %v2689 = vmul.u32 %v2682, %v2673
      %v2690 = vadd.s32 %v2685, %v2687
      %vm2691 = vc.u32 %v2685, %v2687
      %v2692 = vadd.s32 %v2688, 1
      %v2693 = vsel %vm2691, %v2692, %v2688
      %v2694 = vadd.s32 %v2689, %v2693
      %v2695 = vadd.s32 %v2694, 536870912
      %v2696 = vshrl.u32 %v2695, 30
      %v2697 = vshll.u32 %v2696, 30
      %v2698 = vsub.s32 %v2694, %v2697
      %vm2699 = vcmp.lt.s32.totalorder %v2698, 0
      %v2700 = vsub.s32 0, %v2698
      %v2701 = vsel %vm2699, %v2700, %v2698
      %v2702 = vclz %v2701
      %v2703 = vsub.s32 %v2702, 2
      %vm2704 = vcmp.gt.s32.totalorder 0, %v2703
      %v2705 = vsel %vm2704, 0, %v2703
      %v2706 = vsub.s32 32, %v2705
      %v2707 = vshll.u32 %v2698, %v2705
      %v2708 = vshrl.u32 %v2690, %v2706
      %v2709 = vor.u32 %v2707, %v2708
      %v2710 = vsub.s32 4294967266, %v2705
      %v2711 = vadd.s32 %v2710, 127
      %v2712 = vshll.u32 %v2711, 23
      %v2713 = vor.u32 4788187, %v2712
      %v2714 = vand.u32 2147483647, %v2713
      %v2716 = vcvt.s32.f32 %v2709
      %v2717 = vmul.f32 %v2716, %v2714
      %v2718 = vxor.u32 %v2717, 2147483648
      %v2719 = vsel %vm2636, %v2718, %v2717
      %v2720 = vsub.s32 4, %v2696
      %v2721 = vsel %vm2636, %v2720, %v2696
      %v2722 = vsel %vm2635, %v2206, %v2719
      %v2723 = vsel %vm2635, 0, %v2721
      %v2724 = vcosq.f32.pop %v2722
      %v2725 = vsinq.f32.pop %v2722
      %vm2726 = vweird.f32 %v2206
      %v2727 = vadd.s32 %v2723, 3
      %v2728 = vand.u32 %v2727, 3
      %vm2729 = vcmp.lt.s32.totalorder %v2728, 2
      %vm2730 = vcmp.eq.s32.totalorder %v2728, 0
      %v2731 = vxor.u32 %v2725, 2147483648
      %v2732 = vsel %vm2730, %v2724, %v2731
      %vm2733 = vcmp.eq.s32.totalorder %v2728, 2
      %v2734 = vxor.u32 %v2724, 2147483648
      %v2735 = vsel %vm2733, %v2734, %v2725
      %v2736 = vsel %vm2729, %v2732, %v2735
      %v2737 = vsel %vm2726, nan, %v2736
      %v2738 = vand.u32 2147483647, %v2207
      %vm2739 = vcmp.le.f32.partialorder %v2738, 0.7853982
      %vm2740 = vcmp.lt.s32.totalorder %v2207, 0
      %v2741 = vand.u32 %v2207, 2139095040
      %v2742 = vshrl.u32 %v2741, 23
      %v2743 = vsub.s32 %v2742, 127
      %v2744 = vand.u32 2147483647, %v2207
      %v2745 = vand.u32 %v2744, 8388607
      %v2746 = vor.u32 %v2745, 8388608
      %v2747 = vsub.s32 0, %v2746
      %v2748 = vadd.s32 %v2743, 1
      %vm2749 = vcmp.gt.s32.totalorder %v2748, 0
      %v2750 = vsel %vm2749, %v2748, 0
      %v2751 = vshrl.u32 %v2750, 5
      %v2752 = vand.u32 %v2750, 31
      %v2753 = vsub.s32 32, %v2752
      %v2754 = vshrl.u32 683565275, %v2753
      %v2755 = vshll.u32 683565275, %v2752
      %v2756 = vshrl.u32 2475754826, %v2753
      %v2757 = vor.u32 %v2755, %v2756
      %v2758 = vshll.u32 2475754826, %v2752
      %v2759 = vshrl.u32 2131351028, %v2753
      %v2760 = vor.u32 %v2758, %v2759
      %v2761 = vshll.u32 2131351028, %v2752
      %v2762 = vshrl.u32 2102212464, %v2753
      %v2763 = vor.u32 %v2761, %v2762
      %v2764 = vshll.u32 2102212464, %v2752
      %v2765 = vshrl.u32 920167782, %v2753
      %v2766 = vor.u32 %v2764, %v2765
      %v2767 = vshll.u32 920167782, %v2752
      %v2768 = vshrl.u32 1326507024, %v2753
      %v2769 = vor.u32 %v2767, %v2768
      %vm2770 = vcmp.lt.s32.totalorder %v2751, 1
      %vm2771 = vcmp.lt.s32.totalorder %v2751, 2
      %vm2772 = vcmp.lt.s32.totalorder %v2751, 3
      %vm2773 = vcmp.lt.s32.totalorder %v2751, 4
      %v2774 = vsel %vm2770, %v2754, %v2757
      %v2775 = vsel %vm2773, %v2763, 2102212464
      %v2776 = vsel %vm2772, %v2760, %v2775
      %v2777 = vsel %vm2771, %v2774, %v2776
      %v2778 = vsel %vm2770, %v2757, %v2760
      %v2779 = vsel %vm2773, %v2766, 920167782
      %v2780 = vsel %vm2772, %v2763, %v2779
      %v2781 = vsel %vm2771, %v2778, %v2780
      %v2782 = vsel %vm2770, %v2760, %v2763
      %v2783 = vsel %vm2773, %v2769, 1326507024
      %v2784 = vsel %vm2772, %v2766, %v2783
      %v2785 = vsel %vm2771, %v2782, %v2784
      %v2786 = vshll.u32 %v2746, 8
      %v2787 = vmul.u32.u64.compose %v2786, %v2785
      %v2788 = vextract.low.u32 %v2787
      %v2789 = vextract.high.u32 %v2787
      %v2790 = vmul.u32.u64.compose %v2786, %v2781
      %v2791 = vextract.low.u32 %v2790
      %v2792 = vextract.high.u32 %v2790
      %v2793 = vmul.u32 %v2786, %v2777
      %v2794 = vadd.s32 %v2789, %v2791
      %vm2795 = vc.u32 %v2789, %v2791
      %v2796 = vadd.s32 %v2792, 1
      %v2797 = vsel %vm2795, %v2796, %v2792
      %v2798 = vadd.s32 %v2793, %v2797
      %v2799 = vadd.s32 %v2798, 536870912
      %v2800 = vshrl.u32 %v2799, 30
      %v2801 = vshll.u32 %v2800, 30
      %v2802 = vsub.s32 %v2798, %v2801
      %vm2803 = vcmp.lt.s32.totalorder %v2802, 0
      %v2804 = vsub.s32 0, %v2802
      %v2805 = vsel %vm2803, %v2804, %v2802
      %v2806 = vclz %v2805
      %v2807 = vsub.s32 %v2806, 2
      %vm2808 = vcmp.gt.s32.totalorder 0, %v2807
      %v2809 = vsel %vm2808, 0, %v2807
      %v2810 = vsub.s32 32, %v2809
      %v2811 = vshll.u32 %v2802, %v2809
      %v2812 = vshrl.u32 %v2794, %v2810
      %v2813 = vor.u32 %v2811, %v2812
      %v2814 = vsub.s32 4294967266, %v2809
      %v2815 = vadd.s32 %v2814, 127
      %v2816 = vshll.u32 %v2815, 23
      %v2817 = vor.u32 4788187, %v2816
      %v2818 = vand.u32 2147483647, %v2817
      %v2820 = vcvt.s32.f32 %v2813
      %v2821 = vmul.f32 %v2820, %v2818
      %v2822 = vxor.u32 %v2821, 2147483648
      %v2823 = vsel %vm2740, %v2822, %v2821
      %v2824 = vsub.s32 4, %v2800
      %v2825 = vsel %vm2740, %v2824, %v2800
      %v2826 = vsel %vm2739, %v2207, %v2823
      %v2827 = vsel %vm2739, 0, %v2825
      %v2828 = vcosq.f32.pop %v2826
      %v2829 = vsinq.f32.pop %v2826
      %vm2830 = vweird.f32 %v2207
      %v2831 = vadd.s32 %v2827, 3
      %v2832 = vand.u32 %v2831, 3
      %vm2833 = vcmp.lt.s32.totalorder %v2832, 2
      %vm2834 = vcmp.eq.s32.totalorder %v2832, 0
      %v2835 = vxor.u32 %v2829, 2147483648
      %v2836 = vsel %vm2834, %v2828, %v2835
      %vm2837 = vcmp.eq.s32.totalorder %v2832, 2
      %v2838 = vxor.u32 %v2828, 2147483648
      %v2839 = vsel %vm2837, %v2838, %v2829
      %v2840 = vsel %vm2833, %v2836, %v2839
      %v2841 = vsel %vm2830, nan, %v2840
      %v2842 = vand.u32 2147483647, %v2208
      %vm2843 = vcmp.le.f32.partialorder %v2842, 0.7853982
      %vm2844 = vcmp.lt.s32.totalorder %v2208, 0
      %v2845 = vand.u32 %v2208, 2139095040
      %v2846 = vshrl.u32 %v2845, 23
      %v2847 = vsub.s32 %v2846, 127
      %v2848 = vand.u32 2147483647, %v2208
      %v2849 = vand.u32 %v2848, 8388607
      %v2850 = vor.u32 %v2849, 8388608
      %v2851 = vsub.s32 0, %v2850
      %v2852 = vadd.s32 %v2847, 1
      %vm2853 = vcmp.gt.s32.totalorder %v2852, 0
      %v2854 = vsel %vm2853, %v2852, 0
      %v2855 = vshrl.u32 %v2854, 5
      %v2856 = vand.u32 %v2854, 31
      %v2857 = vsub.s32 32, %v2856
      %v2858 = vshrl.u32 683565275, %v2857
      %v2859 = vshll.u32 683565275, %v2856
      %v2860 = vshrl.u32 2475754826, %v2857
      %v2861 = vor.u32 %v2859, %v2860
      %v2862 = vshll.u32 2475754826, %v2856
      %v2863 = vshrl.u32 2131351028, %v2857
      %v2864 = vor.u32 %v2862, %v2863
      %v2865 = vshll.u32 2131351028, %v2856
      %v2866 = vshrl.u32 2102212464, %v2857
      %v2867 = vor.u32 %v2865, %v2866
      %v2868 = vshll.u32 2102212464, %v2856
      %v2869 = vshrl.u32 920167782, %v2857
      %v2870 = vor.u32 %v2868, %v2869
      %v2871 = vshll.u32 920167782, %v2856
      %v2872 = vshrl.u32 1326507024, %v2857
      %v2873 = vor.u32 %v2871, %v2872
      %vm2874 = vcmp.lt.s32.totalorder %v2855, 1
      %vm2875 = vcmp.lt.s32.totalorder %v2855, 2
      %vm2876 = vcmp.lt.s32.totalorder %v2855, 3
      %vm2877 = vcmp.lt.s32.totalorder %v2855, 4
      %v2878 = vsel %vm2874, %v2858, %v2861
      %v2879 = vsel %vm2877, %v2867, 2102212464
      %v2880 = vsel %vm2876, %v2864, %v2879
      %v2881 = vsel %vm2875, %v2878, %v2880
      %v2882 = vsel %vm2874, %v2861, %v2864
      %v2883 = vsel %vm2877, %v2870, 920167782
      %v2884 = vsel %vm2876, %v2867, %v2883
      %v2885 = vsel %vm2875, %v2882, %v2884
      %v2886 = vsel %vm2874, %v2864, %v2867
      %v2887 = vsel %vm2877, %v2873, 1326507024
      %v2888 = vsel %vm2876, %v2870, %v2887
      %v2889 = vsel %vm2875, %v2886, %v2888
      %v2890 = vshll.u32 %v2850, 8
      %v2891 = vmul.u32.u64.compose %v2890, %v2889
      %v2892 = vextract.low.u32 %v2891
      %v2893 = vextract.high.u32 %v2891
      %v2894 = vmul.u32.u64.compose %v2890, %v2885
      %v2895 = vextract.low.u32 %v2894
      %v2896 = vextract.high.u32 %v2894
      %v2897 = vmul.u32 %v2890, %v2881
      %v2898 = vadd.s32 %v2893, %v2895
      %vm2899 = vc.u32 %v2893, %v2895
      %v2900 = vadd.s32 %v2896, 1
      %v2901 = vsel %vm2899, %v2900, %v2896
      %v2902 = vadd.s32 %v2897, %v2901
      %v2903 = vadd.s32 %v2902, 536870912
      %v2904 = vshrl.u32 %v2903, 30
      %v2905 = vshll.u32 %v2904, 30
      %v2906 = vsub.s32 %v2902, %v2905
      %vm2907 = vcmp.lt.s32.totalorder %v2906, 0
      %v2908 = vsub.s32 0, %v2906
      %v2909 = vsel %vm2907, %v2908, %v2906
      %v2910 = vclz %v2909
      %v2911 = vsub.s32 %v2910, 2
      %vm2912 = vcmp.gt.s32.totalorder 0, %v2911
      %v2913 = vsel %vm2912, 0, %v2911
      %v2914 = vsub.s32 32, %v2913
      %v2915 = vshll.u32 %v2906, %v2913
      %v2916 = vshrl.u32 %v2898, %v2914
      %v2917 = vor.u32 %v2915, %v2916
      %v2918 = vsub.s32 4294967266, %v2913
      %v2919 = vadd.s32 %v2918, 127
      %v2920 = vshll.u32 %v2919, 23
      %v2921 = vor.u32 4788187, %v2920
      %v2922 = vand.u32 2147483647, %v2921
      %v2924 = vcvt.s32.f32 %v2917
      %v2925 = vmul.f32 %v2924, %v2922
      %v2926 = vxor.u32 %v2925, 2147483648
      %v2927 = vsel %vm2844, %v2926, %v2925
      %v2928 = vsub.s32 4, %v2904
      %v2929 = vsel %vm2844, %v2928, %v2904
      %v2930 = vsel %vm2843, %v2208, %v2927
      %v2931 = vsel %vm2843, 0, %v2929
      %v2932 = vcosq.f32.pop %v2930
      %v2933 = vsinq.f32.pop %v2930
      %vm2934 = vweird.f32 %v2208
      %v2935 = vadd.s32 %v2931, 3
      %v2936 = vand.u32 %v2935, 3
      %vm2937 = vcmp.lt.s32.totalorder %v2936, 2
      %vm2938 = vcmp.eq.s32.totalorder %v2936, 0
      %v2939 = vxor.u32 %v2933, 2147483648
      %v2940 = vsel %vm2938, %v2932, %v2939
      %vm2941 = vcmp.eq.s32.totalorder %v2936, 2
      %v2942 = vxor.u32 %v2932, 2147483648
      %v2943 = vsel %vm2941, %v2942, %v2933
      %v2944 = vsel %vm2937, %v2940, %v2943
      %v2945 = vsel %vm2934, nan, %v2944
      %v2946 = vand.u32 2147483647, %v2209
      %vm2947 = vcmp.le.f32.partialorder %v2946, 0.7853982
      %vm2948 = vcmp.lt.s32.totalorder %v2209, 0
      %v2949 = vand.u32 %v2209, 2139095040
      %v2950 = vshrl.u32 %v2949, 23
      %v2951 = vsub.s32 %v2950, 127
      %v2952 = vand.u32 2147483647, %v2209
      %v2953 = vand.u32 %v2952, 8388607
      %v2954 = vor.u32 %v2953, 8388608
      %v2955 = vsub.s32 0, %v2954
      %v2956 = vadd.s32 %v2951, 1
      %vm2957 = vcmp.gt.s32.totalorder %v2956, 0
      %v2958 = vsel %vm2957, %v2956, 0
      %v2959 = vshrl.u32 %v2958, 5
      %v2960 = vand.u32 %v2958, 31
      %v2961 = vsub.s32 32, %v2960
      %v2962 = vshrl.u32 683565275, %v2961
      %v2963 = vshll.u32 683565275, %v2960
      %v2964 = vshrl.u32 2475754826, %v2961
      %v2965 = vor.u32 %v2963, %v2964
      %v2966 = vshll.u32 2475754826, %v2960
      %v2967 = vshrl.u32 2131351028, %v2961
      %v2968 = vor.u32 %v2966, %v2967
      %v2969 = vshll.u32 2131351028, %v2960
      %v2970 = vshrl.u32 2102212464, %v2961
      %v2971 = vor.u32 %v2969, %v2970
      %v2972 = vshll.u32 2102212464, %v2960
      %v2973 = vshrl.u32 920167782, %v2961
      %v2974 = vor.u32 %v2972, %v2973
      %v2975 = vshll.u32 920167782, %v2960
      %v2976 = vshrl.u32 1326507024, %v2961
      %v2977 = vor.u32 %v2975, %v2976
      %vm2978 = vcmp.lt.s32.totalorder %v2959, 1
      %vm2979 = vcmp.lt.s32.totalorder %v2959, 2
      %vm2980 = vcmp.lt.s32.totalorder %v2959, 3
      %vm2981 = vcmp.lt.s32.totalorder %v2959, 4
      %v2982 = vsel %vm2978, %v2962, %v2965
      %v2983 = vsel %vm2981, %v2971, 2102212464
      %v2984 = vsel %vm2980, %v2968, %v2983
      %v2985 = vsel %vm2979, %v2982, %v2984
      %v2986 = vsel %vm2978, %v2965, %v2968
      %v2987 = vsel %vm2981, %v2974, 920167782
      %v2988 = vsel %vm2980, %v2971, %v2987
      %v2989 = vsel %vm2979, %v2986, %v2988
      %v2990 = vsel %vm2978, %v2968, %v2971
      %v2991 = vsel %vm2981, %v2977, 1326507024
      %v2992 = vsel %vm2980, %v2974, %v2991
      %v2993 = vsel %vm2979, %v2990, %v2992
      %v2994 = vshll.u32 %v2954, 8
      %v2995 = vmul.u32.u64.compose %v2994, %v2993
      %v2996 = vextract.low.u32 %v2995
      %v2997 = vextract.high.u32 %v2995
      %v2998 = vmul.u32.u64.compose %v2994, %v2989
      %v2999 = vextract.low.u32 %v2998
      %v3000 = vextract.high.u32 %v2998
      %v3001 = vmul.u32 %v2994, %v2985
      %v3002 = vadd.s32 %v2997, %v2999
      %vm3003 = vc.u32 %v2997, %v2999
      %v3004 = vadd.s32 %v3000, 1
      %v3005 = vsel %vm3003, %v3004, %v3000
      %v3006 = vadd.s32 %v3001, %v3005
      %v3007 = vadd.s32 %v3006, 536870912
      %v3008 = vshrl.u32 %v3007, 30
      %v3009 = vshll.u32 %v3008, 30
      %v3010 = vsub.s32 %v3006, %v3009
      %vm3011 = vcmp.lt.s32.totalorder %v3010, 0
      %v3012 = vsub.s32 0, %v3010
      %v3013 = vsel %vm3011, %v3012, %v3010
      %v3014 = vclz %v3013
      %v3015 = vsub.s32 %v3014, 2
      %vm3016 = vcmp.gt.s32.totalorder 0, %v3015
      %v3017 = vsel %vm3016, 0, %v3015
      %v3018 = vsub.s32 32, %v3017
      %v3019 = vshll.u32 %v3010, %v3017
      %v3020 = vshrl.u32 %v3002, %v3018
      %v3021 = vor.u32 %v3019, %v3020
      %v3022 = vsub.s32 4294967266, %v3017
      %v3023 = vadd.s32 %v3022, 127
      %v3024 = vshll.u32 %v3023, 23
      %v3025 = vor.u32 4788187, %v3024
      %v3026 = vand.u32 2147483647, %v3025
      %v3028 = vcvt.s32.f32 %v3021
      %v3029 = vmul.f32 %v3028, %v3026
      %v3030 = vxor.u32 %v3029, 2147483648
      %v3031 = vsel %vm2948, %v3030, %v3029
      %v3032 = vsub.s32 4, %v3008
      %v3033 = vsel %vm2948, %v3032, %v3008
      %v3034 = vsel %vm2947, %v2209, %v3031
      %v3035 = vsel %vm2947, 0, %v3033
      %v3036 = vcosq.f32.pop %v3034
      %v3037 = vsinq.f32.pop %v3034
      %vm3038 = vweird.f32 %v2209
      %v3039 = vadd.s32 %v3035, 3
      %v3040 = vand.u32 %v3039, 3
      %vm3041 = vcmp.lt.s32.totalorder %v3040, 2
      %vm3042 = vcmp.eq.s32.totalorder %v3040, 0
      %v3043 = vxor.u32 %v3037, 2147483648
      %v3044 = vsel %vm3042, %v3036, %v3043
      %vm3045 = vcmp.eq.s32.totalorder %v3040, 2
      %v3046 = vxor.u32 %v3036, 2147483648
      %v3047 = vsel %vm3045, %v3046, %v3037
      %v3048 = vsel %vm3041, %v3044, %v3047
      %v3049 = vsel %vm3038, nan, %v3048
      %v3050 = vand.u32 2147483647, %v2210
      %vm3051 = vcmp.le.f32.partialorder %v3050, 0.7853982
      %vm3052 = vcmp.lt.s32.totalorder %v2210, 0
      %v3053 = vand.u32 %v2210, 2139095040
      %v3054 = vshrl.u32 %v3053, 23
      %v3055 = vsub.s32 %v3054, 127
      %v3056 = vand.u32 2147483647, %v2210
      %v3057 = vand.u32 %v3056, 8388607
      %v3058 = vor.u32 %v3057, 8388608
      %v3059 = vsub.s32 0, %v3058
      %v3060 = vadd.s32 %v3055, 1
      %vm3061 = vcmp.gt.s32.totalorder %v3060, 0
      %v3062 = vsel %vm3061, %v3060, 0
      %v3063 = vshrl.u32 %v3062, 5
      %v3064 = vand.u32 %v3062, 31
      %v3065 = vsub.s32 32, %v3064
      %v3066 = vshrl.u32 683565275, %v3065
      %v3067 = vshll.u32 683565275, %v3064
      %v3068 = vshrl.u32 2475754826, %v3065
      %v3069 = vor.u32 %v3067, %v3068
      %v3070 = vshll.u32 2475754826, %v3064
      %v3071 = vshrl.u32 2131351028, %v3065
      %v3072 = vor.u32 %v3070, %v3071
      %v3073 = vshll.u32 2131351028, %v3064
      %v3074 = vshrl.u32 2102212464, %v3065
      %v3075 = vor.u32 %v3073, %v3074
      %v3076 = vshll.u32 2102212464, %v3064
      %v3077 = vshrl.u32 920167782, %v3065
      %v3078 = vor.u32 %v3076, %v3077
      %v3079 = vshll.u32 920167782, %v3064
      %v3080 = vshrl.u32 1326507024, %v3065
      %v3081 = vor.u32 %v3079, %v3080
      %vm3082 = vcmp.lt.s32.totalorder %v3063, 1
      %vm3083 = vcmp.lt.s32.totalorder %v3063, 2
      %vm3084 = vcmp.lt.s32.totalorder %v3063, 3
      %vm3085 = vcmp.lt.s32.totalorder %v3063, 4
      %v3086 = vsel %vm3082, %v3066, %v3069
      %v3087 = vsel %vm3085, %v3075, 2102212464
      %v3088 = vsel %vm3084, %v3072, %v3087
      %v3089 = vsel %vm3083, %v3086, %v3088
      %v3090 = vsel %vm3082, %v3069, %v3072
      %v3091 = vsel %vm3085, %v3078, 920167782
      %v3092 = vsel %vm3084, %v3075, %v3091
      %v3093 = vsel %vm3083, %v3090, %v3092
      %v3094 = vsel %vm3082, %v3072, %v3075
      %v3095 = vsel %vm3085, %v3081, 1326507024
      %v3096 = vsel %vm3084, %v3078, %v3095
      %v3097 = vsel %vm3083, %v3094, %v3096
      %v3098 = vshll.u32 %v3058, 8
      %v3099 = vmul.u32.u64.compose %v3098, %v3097
      %v3100 = vextract.low.u32 %v3099
      %v3101 = vextract.high.u32 %v3099
      %v3102 = vmul.u32.u64.compose %v3098, %v3093
      %v3103 = vextract.low.u32 %v3102
      %v3104 = vextract.high.u32 %v3102
      %v3105 = vmul.u32 %v3098, %v3089
      %v3106 = vadd.s32 %v3101, %v3103
      %vm3107 = vc.u32 %v3101, %v3103
      %v3108 = vadd.s32 %v3104, 1
      %v3109 = vsel %vm3107, %v3108, %v3104
      %v3110 = vadd.s32 %v3105, %v3109
      %v3111 = vadd.s32 %v3110, 536870912
      %v3112 = vshrl.u32 %v3111, 30
      %v3113 = vshll.u32 %v3112, 30
      %v3114 = vsub.s32 %v3110, %v3113
      %vm3115 = vcmp.lt.s32.totalorder %v3114, 0
      %v3116 = vsub.s32 0, %v3114
      %v3117 = vsel %vm3115, %v3116, %v3114
      %v3118 = vclz %v3117
      %v3119 = vsub.s32 %v3118, 2
      %vm3120 = vcmp.gt.s32.totalorder 0, %v3119
      %v3121 = vsel %vm3120, 0, %v3119
      %v3122 = vsub.s32 32, %v3121
      %v3123 = vshll.u32 %v3114, %v3121
      %v3124 = vshrl.u32 %v3106, %v3122
      %v3125 = vor.u32 %v3123, %v3124
      %v3126 = vsub.s32 4294967266, %v3121
      %v3127 = vadd.s32 %v3126, 127
      %v3128 = vshll.u32 %v3127, 23
      %v3129 = vor.u32 4788187, %v3128
      %v3130 = vand.u32 2147483647, %v3129
      %v3132 = vcvt.s32.f32 %v3125
      %v3133 = vmul.f32 %v3132, %v3130
      %v3134 = vxor.u32 %v3133, 2147483648
      %v3135 = vsel %vm3052, %v3134, %v3133
      %v3136 = vsub.s32 4, %v3112
      %v3137 = vsel %vm3052, %v3136, %v3112
      %v3138 = vsel %vm3051, %v2210, %v3135
      %v3139 = vsel %vm3051, 0, %v3137
      %v3140 = vcosq.f32.pop %v3138
      %v3141 = vsinq.f32.pop %v3138
      %vm3142 = vweird.f32 %v2210
      %v3143 = vadd.s32 %v3139, 3
      %v3144 = vand.u32 %v3143, 3
      %vm3145 = vcmp.lt.s32.totalorder %v3144, 2
      %vm3146 = vcmp.eq.s32.totalorder %v3144, 0
      %v3147 = vxor.u32 %v3141, 2147483648
      %v3148 = vsel %vm3146, %v3140, %v3147
      %vm3149 = vcmp.eq.s32.totalorder %v3144, 2
      %v3150 = vxor.u32 %v3140, 2147483648
      %v3151 = vsel %vm3149, %v3150, %v3141
      %v3152 = vsel %vm3145, %v3148, %v3151
      %v3153 = vsel %vm3142, nan, %v3152
      %v3154 = vand.u32 2147483647, %v2211
      %vm3155 = vcmp.le.f32.partialorder %v3154, 0.7853982
      %vm3156 = vcmp.lt.s32.totalorder %v2211, 0
      %v3157 = vand.u32 %v2211, 2139095040
      %v3158 = vshrl.u32 %v3157, 23
      %v3159 = vsub.s32 %v3158, 127
      %v3160 = vand.u32 2147483647, %v2211
      %v3161 = vand.u32 %v3160, 8388607
      %v3162 = vor.u32 %v3161, 8388608
      %v3163 = vsub.s32 0, %v3162
      %v3164 = vadd.s32 %v3159, 1
      %vm3165 = vcmp.gt.s32.totalorder %v3164, 0
      %v3166 = vsel %vm3165, %v3164, 0
      %v3167 = vshrl.u32 %v3166, 5
      %v3168 = vand.u32 %v3166, 31
      %v3169 = vsub.s32 32, %v3168
      %v3170 = vshrl.u32 683565275, %v3169
      %v3171 = vshll.u32 683565275, %v3168
      %v3172 = vshrl.u32 2475754826, %v3169
      %v3173 = vor.u32 %v3171, %v3172
      %v3174 = vshll.u32 2475754826, %v3168
      %v3175 = vshrl.u32 2131351028, %v3169
      %v3176 = vor.u32 %v3174, %v3175
      %v3177 = vshll.u32 2131351028, %v3168
      %v3178 = vshrl.u32 2102212464, %v3169
      %v3179 = vor.u32 %v3177, %v3178
      %v3180 = vshll.u32 2102212464, %v3168
      %v3181 = vshrl.u32 920167782, %v3169
      %v3182 = vor.u32 %v3180, %v3181
      %v3183 = vshll.u32 920167782, %v3168
      %v3184 = vshrl.u32 1326507024, %v3169
      %v3185 = vor.u32 %v3183, %v3184
      %vm3186 = vcmp.lt.s32.totalorder %v3167, 1
      %vm3187 = vcmp.lt.s32.totalorder %v3167, 2
      %vm3188 = vcmp.lt.s32.totalorder %v3167, 3
      %vm3189 = vcmp.lt.s32.totalorder %v3167, 4
      %v3190 = vsel %vm3186, %v3170, %v3173
      %v3191 = vsel %vm3189, %v3179, 2102212464
      %v3192 = vsel %vm3188, %v3176, %v3191
      %v3193 = vsel %vm3187, %v3190, %v3192
      %v3194 = vsel %vm3186, %v3173, %v3176
      %v3195 = vsel %vm3189, %v3182, 920167782
      %v3196 = vsel %vm3188, %v3179, %v3195
      %v3197 = vsel %vm3187, %v3194, %v3196
      %v3198 = vsel %vm3186, %v3176, %v3179
      %v3199 = vsel %vm3189, %v3185, 1326507024
      %v3200 = vsel %vm3188, %v3182, %v3199
      %v3201 = vsel %vm3187, %v3198, %v3200
      %v3202 = vshll.u32 %v3162, 8
      %v3203 = vmul.u32.u64.compose %v3202, %v3201
      %v3204 = vextract.low.u32 %v3203
      %v3205 = vextract.high.u32 %v3203
      %v3206 = vmul.u32.u64.compose %v3202, %v3197
      %v3207 = vextract.low.u32 %v3206
      %v3208 = vextract.high.u32 %v3206
      %v3209 = vmul.u32 %v3202, %v3193
      %v3210 = vadd.s32 %v3205, %v3207
      %vm3211 = vc.u32 %v3205, %v3207
      %v3212 = vadd.s32 %v3208, 1
      %v3213 = vsel %vm3211, %v3212, %v3208
      %v3214 = vadd.s32 %v3209, %v3213
      %v3215 = vadd.s32 %v3214, 536870912
      %v3216 = vshrl.u32 %v3215, 30
      %v3217 = vshll.u32 %v3216, 30
      %v3218 = vsub.s32 %v3214, %v3217
      %vm3219 = vcmp.lt.s32.totalorder %v3218, 0
      %v3220 = vsub.s32 0, %v3218
      %v3221 = vsel %vm3219, %v3220, %v3218
      %v3222 = vclz %v3221
      %v3223 = vsub.s32 %v3222, 2
      %vm3224 = vcmp.gt.s32.totalorder 0, %v3223
      %v3225 = vsel %vm3224, 0, %v3223
      %v3226 = vsub.s32 32, %v3225
      %v3227 = vshll.u32 %v3218, %v3225
      %v3228 = vshrl.u32 %v3210, %v3226
      %v3229 = vor.u32 %v3227, %v3228
      %v3230 = vsub.s32 4294967266, %v3225
      %v3231 = vadd.s32 %v3230, 127
      %v3232 = vshll.u32 %v3231, 23
      %v3233 = vor.u32 4788187, %v3232
      %v3234 = vand.u32 2147483647, %v3233
      %v3236 = vcvt.s32.f32 %v3229
      %v3237 = vmul.f32 %v3236, %v3234
      %v3238 = vxor.u32 %v3237, 2147483648
      %v3239 = vsel %vm3156, %v3238, %v3237
      %v3240 = vsub.s32 4, %v3216
      %v3241 = vsel %vm3156, %v3240, %v3216
      %v3242 = vsel %vm3155, %v2211, %v3239
      %v3243 = vsel %vm3155, 0, %v3241
      %v3244 = vcosq.f32.pop %v3242
      %v3245 = vsinq.f32.pop %v3242
      %vm3246 = vweird.f32 %v2211
      %v3247 = vadd.s32 %v3243, 3
      %v3248 = vand.u32 %v3247, 3
      %vm3249 = vcmp.lt.s32.totalorder %v3248, 2
      %vm3250 = vcmp.eq.s32.totalorder %v3248, 0
      %v3251 = vxor.u32 %v3245, 2147483648
      %v3252 = vsel %vm3250, %v3244, %v3251
      %vm3253 = vcmp.eq.s32.totalorder %v3248, 2
      %v3254 = vxor.u32 %v3244, 2147483648
      %v3255 = vsel %vm3253, %v3254, %v3245
      %v3256 = vsel %vm3249, %v3252, %v3255
      %v3257 = vsel %vm3246, nan, %v3256
      %v3258 = vand.u32 2147483647, %v2212
      %vm3259 = vcmp.le.f32.partialorder %v3258, 0.7853982
      %vm3260 = vcmp.lt.s32.totalorder %v2212, 0
      %v3261 = vand.u32 %v2212, 2139095040
      %v3262 = vshrl.u32 %v3261, 23
      %v3263 = vsub.s32 %v3262, 127
      %v3264 = vand.u32 2147483647, %v2212
      %v3265 = vand.u32 %v3264, 8388607
      %v3266 = vor.u32 %v3265, 8388608
      %v3267 = vsub.s32 0, %v3266
      %v3268 = vadd.s32 %v3263, 1
      %vm3269 = vcmp.gt.s32.totalorder %v3268, 0
      %v3270 = vsel %vm3269, %v3268, 0
      %v3271 = vshrl.u32 %v3270, 5
      %v3272 = vand.u32 %v3270, 31
      %v3273 = vsub.s32 32, %v3272
      %v3274 = vshrl.u32 683565275, %v3273
      %v3275 = vshll.u32 683565275, %v3272
      %v3276 = vshrl.u32 2475754826, %v3273
      %v3277 = vor.u32 %v3275, %v3276
      %v3278 = vshll.u32 2475754826, %v3272
      %v3279 = vshrl.u32 2131351028, %v3273
      %v3280 = vor.u32 %v3278, %v3279
      %v3281 = vshll.u32 2131351028, %v3272
      %v3282 = vshrl.u32 2102212464, %v3273
      %v3283 = vor.u32 %v3281, %v3282
      %v3284 = vshll.u32 2102212464, %v3272
      %v3285 = vshrl.u32 920167782, %v3273
      %v3286 = vor.u32 %v3284, %v3285
      %v3287 = vshll.u32 920167782, %v3272
      %v3288 = vshrl.u32 1326507024, %v3273
      %v3289 = vor.u32 %v3287, %v3288
      %vm3290 = vcmp.lt.s32.totalorder %v3271, 1
      %vm3291 = vcmp.lt.s32.totalorder %v3271, 2
      %vm3292 = vcmp.lt.s32.totalorder %v3271, 3
      %vm3293 = vcmp.lt.s32.totalorder %v3271, 4
      %v3294 = vsel %vm3290, %v3274, %v3277
      %v3295 = vsel %vm3293, %v3283, 2102212464
      %v3296 = vsel %vm3292, %v3280, %v3295
      %v3297 = vsel %vm3291, %v3294, %v3296
      %v3298 = vsel %vm3290, %v3277, %v3280
      %v3299 = vsel %vm3293, %v3286, 920167782
      %v3300 = vsel %vm3292, %v3283, %v3299
      %v3301 = vsel %vm3291, %v3298, %v3300
      %v3302 = vsel %vm3290, %v3280, %v3283
      %v3303 = vsel %vm3293, %v3289, 1326507024
      %v3304 = vsel %vm3292, %v3286, %v3303
      %v3305 = vsel %vm3291, %v3302, %v3304
      %v3306 = vshll.u32 %v3266, 8
      %v3307 = vmul.u32.u64.compose %v3306, %v3305
      %v3308 = vextract.low.u32 %v3307
      %v3309 = vextract.high.u32 %v3307
      %v3310 = vmul.u32.u64.compose %v3306, %v3301
      %v3311 = vextract.low.u32 %v3310
      %v3312 = vextract.high.u32 %v3310
      %v3313 = vmul.u32 %v3306, %v3297
      %v3314 = vadd.s32 %v3309, %v3311
      %vm3315 = vc.u32 %v3309, %v3311
      %v3316 = vadd.s32 %v3312, 1
      %v3317 = vsel %vm3315, %v3316, %v3312
      %v3318 = vadd.s32 %v3313, %v3317
      %v3319 = vadd.s32 %v3318, 536870912
      %v3320 = vshrl.u32 %v3319, 30
      %v3321 = vshll.u32 %v3320, 30
      %v3322 = vsub.s32 %v3318, %v3321
      %vm3323 = vcmp.lt.s32.totalorder %v3322, 0
      %v3324 = vsub.s32 0, %v3322
      %v3325 = vsel %vm3323, %v3324, %v3322
      %v3326 = vclz %v3325
      %v3327 = vsub.s32 %v3326, 2
      %vm3328 = vcmp.gt.s32.totalorder 0, %v3327
      %v3329 = vsel %vm3328, 0, %v3327
      %v3330 = vsub.s32 32, %v3329
      %v3331 = vshll.u32 %v3322, %v3329
      %v3332 = vshrl.u32 %v3314, %v3330
      %v3333 = vor.u32 %v3331, %v3332
      %v3334 = vsub.s32 4294967266, %v3329
      %v3335 = vadd.s32 %v3334, 127
      %v3336 = vshll.u32 %v3335, 23
      %v3337 = vor.u32 4788187, %v3336
      %v3338 = vand.u32 2147483647, %v3337
      %v3340 = vcvt.s32.f32 %v3333
      %v3341 = vmul.f32 %v3340, %v3338
      %v3342 = vxor.u32 %v3341, 2147483648
      %v3343 = vsel %vm3260, %v3342, %v3341
      %v3344 = vsub.s32 4, %v3320
      %v3345 = vsel %vm3260, %v3344, %v3320
      %v3346 = vsel %vm3259, %v2212, %v3343
      %v3347 = vsel %vm3259, 0, %v3345
      %v3348 = vcosq.f32.pop %v3346
      %v3349 = vsinq.f32.pop %v3346
      %vm3350 = vweird.f32 %v2212
      %v3351 = vadd.s32 %v3347, 3
      %v3352 = vand.u32 %v3351, 3
      %vm3353 = vcmp.lt.s32.totalorder %v3352, 2
      %vm3354 = vcmp.eq.s32.totalorder %v3352, 0
      %v3355 = vxor.u32 %v3349, 2147483648
      %v3356 = vsel %vm3354, %v3348, %v3355
      %vm3357 = vcmp.eq.s32.totalorder %v3352, 2
      %v3358 = vxor.u32 %v3348, 2147483648
      %v3359 = vsel %vm3357, %v3358, %v3349
      %v3360 = vsel %vm3353, %v3356, %v3359
      %v3361 = vsel %vm3350, nan, %v3360
      %v3362 = vand.u32 2147483647, %v2213
      %vm3363 = vcmp.le.f32.partialorder %v3362, 0.7853982
      %vm3364 = vcmp.lt.s32.totalorder %v2213, 0
      %v3365 = vand.u32 %v2213, 2139095040
      %v3366 = vshrl.u32 %v3365, 23
      %v3367 = vsub.s32 %v3366, 127
      %v3368 = vand.u32 2147483647, %v2213
      %v3369 = vand.u32 %v3368, 8388607
      %v3370 = vor.u32 %v3369, 8388608
      %v3371 = vsub.s32 0, %v3370
      %v3372 = vadd.s32 %v3367, 1
      %vm3373 = vcmp.gt.s32.totalorder %v3372, 0
      %v3374 = vsel %vm3373, %v3372, 0
      %v3375 = vshrl.u32 %v3374, 5
      %v3376 = vand.u32 %v3374, 31
      %v3377 = vsub.s32 32, %v3376
      %v3378 = vshrl.u32 683565275, %v3377
      %v3379 = vshll.u32 683565275, %v3376
      %v3380 = vshrl.u32 2475754826, %v3377
      %v3381 = vor.u32 %v3379, %v3380
      %v3382 = vshll.u32 2475754826, %v3376
      %v3383 = vshrl.u32 2131351028, %v3377
      %v3384 = vor.u32 %v3382, %v3383
      %v3385 = vshll.u32 2131351028, %v3376
      %v3386 = vshrl.u32 2102212464, %v3377
      %v3387 = vor.u32 %v3385, %v3386
      %v3388 = vshll.u32 2102212464, %v3376
      %v3389 = vshrl.u32 920167782, %v3377
      %v3390 = vor.u32 %v3388, %v3389
      %v3391 = vshll.u32 920167782, %v3376
      %v3392 = vshrl.u32 1326507024, %v3377
      %v3393 = vor.u32 %v3391, %v3392
      %vm3394 = vcmp.lt.s32.totalorder %v3375, 1
      %vm3395 = vcmp.lt.s32.totalorder %v3375, 2
      %vm3396 = vcmp.lt.s32.totalorder %v3375, 3
      %vm3397 = vcmp.lt.s32.totalorder %v3375, 4
      %v3398 = vsel %vm3394, %v3378, %v3381
      %v3399 = vsel %vm3397, %v3387, 2102212464
      %v3400 = vsel %vm3396, %v3384, %v3399
      %v3401 = vsel %vm3395, %v3398, %v3400
      %v3402 = vsel %vm3394, %v3381, %v3384
      %v3403 = vsel %vm3397, %v3390, 920167782
      %v3404 = vsel %vm3396, %v3387, %v3403
      %v3405 = vsel %vm3395, %v3402, %v3404
      %v3406 = vsel %vm3394, %v3384, %v3387
      %v3407 = vsel %vm3397, %v3393, 1326507024
      %v3408 = vsel %vm3396, %v3390, %v3407
      %v3409 = vsel %vm3395, %v3406, %v3408
      %v3410 = vshll.u32 %v3370, 8
      %v3411 = vmul.u32.u64.compose %v3410, %v3409
      %v3412 = vextract.low.u32 %v3411
      %v3413 = vextract.high.u32 %v3411
      %v3414 = vmul.u32.u64.compose %v3410, %v3405
      %v3415 = vextract.low.u32 %v3414
      %v3416 = vextract.high.u32 %v3414
      %v3417 = vmul.u32 %v3410, %v3401
      %v3418 = vadd.s32 %v3413, %v3415
      %vm3419 = vc.u32 %v3413, %v3415
      %v3420 = vadd.s32 %v3416, 1
      %v3421 = vsel %vm3419, %v3420, %v3416
      %v3422 = vadd.s32 %v3417, %v3421
      %v3423 = vadd.s32 %v3422, 536870912
      %v3424 = vshrl.u32 %v3423, 30
      %v3425 = vshll.u32 %v3424, 30
      %v3426 = vsub.s32 %v3422, %v3425
      %vm3427 = vcmp.lt.s32.totalorder %v3426, 0
      %v3428 = vsub.s32 0, %v3426
      %v3429 = vsel %vm3427, %v3428, %v3426
      %v3430 = vclz %v3429
      %v3431 = vsub.s32 %v3430, 2
      %vm3432 = vcmp.gt.s32.totalorder 0, %v3431
      %v3433 = vsel %vm3432, 0, %v3431
      %v3434 = vsub.s32 32, %v3433
      %v3435 = vshll.u32 %v3426, %v3433
      %v3436 = vshrl.u32 %v3418, %v3434
      %v3437 = vor.u32 %v3435, %v3436
      %v3438 = vsub.s32 4294967266, %v3433
      %v3439 = vadd.s32 %v3438, 127
      %v3440 = vshll.u32 %v3439, 23
      %v3441 = vor.u32 4788187, %v3440
      %v3442 = vand.u32 2147483647, %v3441
      %v3444 = vcvt.s32.f32 %v3437
      %v3445 = vmul.f32 %v3444, %v3442
      %v3446 = vxor.u32 %v3445, 2147483648
      %v3447 = vsel %vm3364, %v3446, %v3445
      %v3448 = vsub.s32 4, %v3424
      %v3449 = vsel %vm3364, %v3448, %v3424
      %v3450 = vsel %vm3363, %v2213, %v3447
      %v3451 = vsel %vm3363, 0, %v3449
      %v3452 = vcosq.f32.pop %v3450
      %v3453 = vsinq.f32.pop %v3450
      %vm3454 = vweird.f32 %v2213
      %v3455 = vadd.s32 %v3451, 3
      %v3456 = vand.u32 %v3455, 3
      %vm3457 = vcmp.lt.s32.totalorder %v3456, 2
      %vm3458 = vcmp.eq.s32.totalorder %v3456, 0
      %v3459 = vxor.u32 %v3453, 2147483648
      %v3460 = vsel %vm3458, %v3452, %v3459
      %vm3461 = vcmp.eq.s32.totalorder %v3456, 2
      %v3462 = vxor.u32 %v3452, 2147483648
      %v3463 = vsel %vm3461, %v3462, %v3453
      %v3464 = vsel %vm3457, %v3460, %v3463
      %v3465 = vsel %vm3454, nan, %v3464
      %v3466 = vand.u32 2147483647, %v2214
      %vm3467 = vcmp.le.f32.partialorder %v3466, 0.7853982
      %vm3468 = vcmp.lt.s32.totalorder %v2214, 0
      %v3469 = vand.u32 %v2214, 2139095040
      %v3470 = vshrl.u32 %v3469, 23
      %v3471 = vsub.s32 %v3470, 127
      %v3472 = vand.u32 2147483647, %v2214
      %v3473 = vand.u32 %v3472, 8388607
      %v3474 = vor.u32 %v3473, 8388608
      %v3475 = vsub.s32 0, %v3474
      %v3476 = vadd.s32 %v3471, 1
      %vm3477 = vcmp.gt.s32.totalorder %v3476, 0
      %v3478 = vsel %vm3477, %v3476, 0
      %v3479 = vshrl.u32 %v3478, 5
      %v3480 = vand.u32 %v3478, 31
      %v3481 = vsub.s32 32, %v3480
      %v3482 = vshrl.u32 683565275, %v3481
      %v3483 = vshll.u32 683565275, %v3480
      %v3484 = vshrl.u32 2475754826, %v3481
      %v3485 = vor.u32 %v3483, %v3484
      %v3486 = vshll.u32 2475754826, %v3480
      %v3487 = vshrl.u32 2131351028, %v3481
      %v3488 = vor.u32 %v3486, %v3487
      %v3489 = vshll.u32 2131351028, %v3480
      %v3490 = vshrl.u32 2102212464, %v3481
      %v3491 = vor.u32 %v3489, %v3490
      %v3492 = vshll.u32 2102212464, %v3480
      %v3493 = vshrl.u32 920167782, %v3481
      %v3494 = vor.u32 %v3492, %v3493
      %v3495 = vshll.u32 920167782, %v3480
      %v3496 = vshrl.u32 1326507024, %v3481
      %v3497 = vor.u32 %v3495, %v3496
      %vm3498 = vcmp.lt.s32.totalorder %v3479, 1
      %vm3499 = vcmp.lt.s32.totalorder %v3479, 2
      %vm3500 = vcmp.lt.s32.totalorder %v3479, 3
      %vm3501 = vcmp.lt.s32.totalorder %v3479, 4
      %v3502 = vsel %vm3498, %v3482, %v3485
      %v3503 = vsel %vm3501, %v3491, 2102212464
      %v3504 = vsel %vm3500, %v3488, %v3503
      %v3505 = vsel %vm3499, %v3502, %v3504
      %v3506 = vsel %vm3498, %v3485, %v3488
      %v3507 = vsel %vm3501, %v3494, 920167782
      %v3508 = vsel %vm3500, %v3491, %v3507
      %v3509 = vsel %vm3499, %v3506, %v3508
      %v3510 = vsel %vm3498, %v3488, %v3491
      %v3511 = vsel %vm3501, %v3497, 1326507024
      %v3512 = vsel %vm3500, %v3494, %v3511
      %v3513 = vsel %vm3499, %v3510, %v3512
      %v3514 = vshll.u32 %v3474, 8
      %v3515 = vmul.u32.u64.compose %v3514, %v3513
      %v3516 = vextract.low.u32 %v3515
      %v3517 = vextract.high.u32 %v3515
      %v3518 = vmul.u32.u64.compose %v3514, %v3509
      %v3519 = vextract.low.u32 %v3518
      %v3520 = vextract.high.u32 %v3518
      %v3521 = vmul.u32 %v3514, %v3505
      %v3522 = vadd.s32 %v3517, %v3519
      %vm3523 = vc.u32 %v3517, %v3519
      %v3524 = vadd.s32 %v3520, 1
      %v3525 = vsel %vm3523, %v3524, %v3520
      %v3526 = vadd.s32 %v3521, %v3525
      %v3527 = vadd.s32 %v3526, 536870912
      %v3528 = vshrl.u32 %v3527, 30
      %v3529 = vshll.u32 %v3528, 30
      %v3530 = vsub.s32 %v3526, %v3529
      %vm3531 = vcmp.lt.s32.totalorder %v3530, 0
      %v3532 = vsub.s32 0, %v3530
      %v3533 = vsel %vm3531, %v3532, %v3530
      %v3534 = vclz %v3533
      %v3535 = vsub.s32 %v3534, 2
      %vm3536 = vcmp.gt.s32.totalorder 0, %v3535
      %v3537 = vsel %vm3536, 0, %v3535
      %v3538 = vsub.s32 32, %v3537
      %v3539 = vshll.u32 %v3530, %v3537
      %v3540 = vshrl.u32 %v3522, %v3538
      %v3541 = vor.u32 %v3539, %v3540
      %v3542 = vsub.s32 4294967266, %v3537
      %v3543 = vadd.s32 %v3542, 127
      %v3544 = vshll.u32 %v3543, 23
      %v3545 = vor.u32 4788187, %v3544
      %v3546 = vand.u32 2147483647, %v3545
      %v3548 = vcvt.s32.f32 %v3541
      %v3549 = vmul.f32 %v3548, %v3546
      %v3550 = vxor.u32 %v3549, 2147483648
      %v3551 = vsel %vm3468, %v3550, %v3549
      %v3552 = vsub.s32 4, %v3528
      %v3553 = vsel %vm3468, %v3552, %v3528
      %v3554 = vsel %vm3467, %v2214, %v3551
      %v3555 = vsel %vm3467, 0, %v3553
      %v3556 = vcosq.f32.pop %v3554
      %v3557 = vsinq.f32.pop %v3554
      %vm3558 = vweird.f32 %v2214
      %v3559 = vadd.s32 %v3555, 3
      %v3560 = vand.u32 %v3559, 3
      %vm3561 = vcmp.lt.s32.totalorder %v3560, 2
      %vm3562 = vcmp.eq.s32.totalorder %v3560, 0
      %v3563 = vxor.u32 %v3557, 2147483648
      %v3564 = vsel %vm3562, %v3556, %v3563
      %vm3565 = vcmp.eq.s32.totalorder %v3560, 2
      %v3566 = vxor.u32 %v3556, 2147483648
      %v3567 = vsel %vm3565, %v3566, %v3557
      %v3568 = vsel %vm3561, %v3564, %v3567
      %v3569 = vsel %vm3558, nan, %v3568
      %v3570 = vand.u32 2147483647, %v2215
      %vm3571 = vcmp.le.f32.partialorder %v3570, 0.7853982
      %vm3572 = vcmp.lt.s32.totalorder %v2215, 0
      %v3573 = vand.u32 %v2215, 2139095040
      %v3574 = vshrl.u32 %v3573, 23
      %v3575 = vsub.s32 %v3574, 127
      %v3576 = vand.u32 2147483647, %v2215
      %v3577 = vand.u32 %v3576, 8388607
      %v3578 = vor.u32 %v3577, 8388608
      %v3579 = vsub.s32 0, %v3578
      %v3580 = vadd.s32 %v3575, 1
      %vm3581 = vcmp.gt.s32.totalorder %v3580, 0
      %v3582 = vsel %vm3581, %v3580, 0
      %v3583 = vshrl.u32 %v3582, 5
      %v3584 = vand.u32 %v3582, 31
      %v3585 = vsub.s32 32, %v3584
      %v3586 = vshrl.u32 683565275, %v3585
      %v3587 = vshll.u32 683565275, %v3584
      %v3588 = vshrl.u32 2475754826, %v3585
      %v3589 = vor.u32 %v3587, %v3588
      %v3590 = vshll.u32 2475754826, %v3584
      %v3591 = vshrl.u32 2131351028, %v3585
      %v3592 = vor.u32 %v3590, %v3591
      %v3593 = vshll.u32 2131351028, %v3584
      %v3594 = vshrl.u32 2102212464, %v3585
      %v3595 = vor.u32 %v3593, %v3594
      %v3596 = vshll.u32 2102212464, %v3584
      %v3597 = vshrl.u32 920167782, %v3585
      %v3598 = vor.u32 %v3596, %v3597
      %v3599 = vshll.u32 920167782, %v3584
      %v3600 = vshrl.u32 1326507024, %v3585
      %v3601 = vor.u32 %v3599, %v3600
      %vm3602 = vcmp.lt.s32.totalorder %v3583, 1
      %vm3603 = vcmp.lt.s32.totalorder %v3583, 2
      %vm3604 = vcmp.lt.s32.totalorder %v3583, 3
      %vm3605 = vcmp.lt.s32.totalorder %v3583, 4
      %v3606 = vsel %vm3602, %v3586, %v3589
      %v3607 = vsel %vm3605, %v3595, 2102212464
      %v3608 = vsel %vm3604, %v3592, %v3607
      %v3609 = vsel %vm3603, %v3606, %v3608
      %v3610 = vsel %vm3602, %v3589, %v3592
      %v3611 = vsel %vm3605, %v3598, 920167782
      %v3612 = vsel %vm3604, %v3595, %v3611
      %v3613 = vsel %vm3603, %v3610, %v3612
      %v3614 = vsel %vm3602, %v3592, %v3595
      %v3615 = vsel %vm3605, %v3601, 1326507024
      %v3616 = vsel %vm3604, %v3598, %v3615
      %v3617 = vsel %vm3603, %v3614, %v3616
      %v3618 = vshll.u32 %v3578, 8
      %v3619 = vmul.u32.u64.compose %v3618, %v3617
      %v3620 = vextract.low.u32 %v3619
      %v3621 = vextract.high.u32 %v3619
      %v3622 = vmul.u32.u64.compose %v3618, %v3613
      %v3623 = vextract.low.u32 %v3622
      %v3624 = vextract.high.u32 %v3622
      %v3625 = vmul.u32 %v3618, %v3609
      %v3626 = vadd.s32 %v3621, %v3623
      %vm3627 = vc.u32 %v3621, %v3623
      %v3628 = vadd.s32 %v3624, 1
      %v3629 = vsel %vm3627, %v3628, %v3624
      %v3630 = vadd.s32 %v3625, %v3629
      %v3631 = vadd.s32 %v3630, 536870912
      %v3632 = vshrl.u32 %v3631, 30
      %v3633 = vshll.u32 %v3632, 30
      %v3634 = vsub.s32 %v3630, %v3633
      %vm3635 = vcmp.lt.s32.totalorder %v3634, 0
      %v3636 = vsub.s32 0, %v3634
      %v3637 = vsel %vm3635, %v3636, %v3634
      %v3638 = vclz %v3637
      %v3639 = vsub.s32 %v3638, 2
      %vm3640 = vcmp.gt.s32.totalorder 0, %v3639
      %v3641 = vsel %vm3640, 0, %v3639
      %v3642 = vsub.s32 32, %v3641
      %v3643 = vshll.u32 %v3634, %v3641
      %v3644 = vshrl.u32 %v3626, %v3642
      %v3645 = vor.u32 %v3643, %v3644
      %v3646 = vsub.s32 4294967266, %v3641
      %v3647 = vadd.s32 %v3646, 127
      %v3648 = vshll.u32 %v3647, 23
      %v3649 = vor.u32 4788187, %v3648
      %v3650 = vand.u32 2147483647, %v3649
      %v3652 = vcvt.s32.f32 %v3645
      %v3653 = vmul.f32 %v3652, %v3650
      %v3654 = vxor.u32 %v3653, 2147483648
      %v3655 = vsel %vm3572, %v3654, %v3653
      %v3656 = vsub.s32 4, %v3632
      %v3657 = vsel %vm3572, %v3656, %v3632
      %v3658 = vsel %vm3571, %v2215, %v3655
      %v3659 = vsel %vm3571, 0, %v3657
      %v3660 = vcosq.f32.pop %v3658
      %v3661 = vsinq.f32.pop %v3658
      %vm3662 = vweird.f32 %v2215
      %v3663 = vadd.s32 %v3659, 3
      %v3664 = vand.u32 %v3663, 3
      %vm3665 = vcmp.lt.s32.totalorder %v3664, 2
      %vm3666 = vcmp.eq.s32.totalorder %v3664, 0
      %v3667 = vxor.u32 %v3661, 2147483648
      %v3668 = vsel %vm3666, %v3660, %v3667
      %vm3669 = vcmp.eq.s32.totalorder %v3664, 2
      %v3670 = vxor.u32 %v3660, 2147483648
      %v3671 = vsel %vm3669, %v3670, %v3661
      %v3672 = vsel %vm3665, %v3668, %v3671
      %v3673 = vsel %vm3662, nan, %v3672
      %v3674 = vand.u32 2147483647, %v2216
      %vm3675 = vcmp.le.f32.partialorder %v3674, 0.7853982
      %vm3676 = vcmp.lt.s32.totalorder %v2216, 0
      %v3677 = vand.u32 %v2216, 2139095040
      %v3678 = vshrl.u32 %v3677, 23
      %v3679 = vsub.s32 %v3678, 127
      %v3680 = vand.u32 2147483647, %v2216
      %v3681 = vand.u32 %v3680, 8388607
      %v3682 = vor.u32 %v3681, 8388608
      %v3683 = vsub.s32 0, %v3682
      %v3684 = vadd.s32 %v3679, 1
      %vm3685 = vcmp.gt.s32.totalorder %v3684, 0
      %v3686 = vsel %vm3685, %v3684, 0
      %v3687 = vshrl.u32 %v3686, 5
      %v3688 = vand.u32 %v3686, 31
      %v3689 = vsub.s32 32, %v3688
      %v3690 = vshrl.u32 683565275, %v3689
      %v3691 = vshll.u32 683565275, %v3688
      %v3692 = vshrl.u32 2475754826, %v3689
      %v3693 = vor.u32 %v3691, %v3692
      %v3694 = vshll.u32 2475754826, %v3688
      %v3695 = vshrl.u32 2131351028, %v3689
      %v3696 = vor.u32 %v3694, %v3695
      %v3697 = vshll.u32 2131351028, %v3688
      %v3698 = vshrl.u32 2102212464, %v3689
      %v3699 = vor.u32 %v3697, %v3698
      %v3700 = vshll.u32 2102212464, %v3688
      %v3701 = vshrl.u32 920167782, %v3689
      %v3702 = vor.u32 %v3700, %v3701
      %v3703 = vshll.u32 920167782, %v3688
      %v3704 = vshrl.u32 1326507024, %v3689
      %v3705 = vor.u32 %v3703, %v3704
      %vm3706 = vcmp.lt.s32.totalorder %v3687, 1
      %vm3707 = vcmp.lt.s32.totalorder %v3687, 2
      %vm3708 = vcmp.lt.s32.totalorder %v3687, 3
      %vm3709 = vcmp.lt.s32.totalorder %v3687, 4
      %v3710 = vsel %vm3706, %v3690, %v3693
      %v3711 = vsel %vm3709, %v3699, 2102212464
      %v3712 = vsel %vm3708, %v3696, %v3711
      %v3713 = vsel %vm3707, %v3710, %v3712
      %v3714 = vsel %vm3706, %v3693, %v3696
      %v3715 = vsel %vm3709, %v3702, 920167782
      %v3716 = vsel %vm3708, %v3699, %v3715
      %v3717 = vsel %vm3707, %v3714, %v3716
      %v3718 = vsel %vm3706, %v3696, %v3699
      %v3719 = vsel %vm3709, %v3705, 1326507024
      %v3720 = vsel %vm3708, %v3702, %v3719
      %v3721 = vsel %vm3707, %v3718, %v3720
      %v3722 = vshll.u32 %v3682, 8
      %v3723 = vmul.u32.u64.compose %v3722, %v3721
      %v3724 = vextract.low.u32 %v3723
      %v3725 = vextract.high.u32 %v3723
      %v3726 = vmul.u32.u64.compose %v3722, %v3717
      %v3727 = vextract.low.u32 %v3726
      %v3728 = vextract.high.u32 %v3726
      %v3729 = vmul.u32 %v3722, %v3713
      %v3730 = vadd.s32 %v3725, %v3727
      %vm3731 = vc.u32 %v3725, %v3727
      %v3732 = vadd.s32 %v3728, 1
      %v3733 = vsel %vm3731, %v3732, %v3728
      %v3734 = vadd.s32 %v3729, %v3733
      %v3735 = vadd.s32 %v3734, 536870912
      %v3736 = vshrl.u32 %v3735, 30
      %v3737 = vshll.u32 %v3736, 30
      %v3738 = vsub.s32 %v3734, %v3737
      %vm3739 = vcmp.lt.s32.totalorder %v3738, 0
      %v3740 = vsub.s32 0, %v3738
      %v3741 = vsel %vm3739, %v3740, %v3738
      %v3742 = vclz %v3741
      %v3743 = vsub.s32 %v3742, 2
      %vm3744 = vcmp.gt.s32.totalorder 0, %v3743
      %v3745 = vsel %vm3744, 0, %v3743
      %v3746 = vsub.s32 32, %v3745
      %v3747 = vshll.u32 %v3738, %v3745
      %v3748 = vshrl.u32 %v3730, %v3746
      %v3749 = vor.u32 %v3747, %v3748
      %v3750 = vsub.s32 4294967266, %v3745
      %v3751 = vadd.s32 %v3750, 127
      %v3752 = vshll.u32 %v3751, 23
      %v3753 = vor.u32 4788187, %v3752
      %v3754 = vand.u32 2147483647, %v3753
      %v3756 = vcvt.s32.f32 %v3749
      %v3757 = vmul.f32 %v3756, %v3754
      %v3758 = vxor.u32 %v3757, 2147483648
      %v3759 = vsel %vm3676, %v3758, %v3757
      %v3760 = vsub.s32 4, %v3736
      %v3761 = vsel %vm3676, %v3760, %v3736
      %v3762 = vsel %vm3675, %v2216, %v3759
      %v3763 = vsel %vm3675, 0, %v3761
      %v3764 = vcosq.f32.pop %v3762
      %v3765 = vsinq.f32.pop %v3762
      %vm3766 = vweird.f32 %v2216
      %v3767 = vadd.s32 %v3763, 3
      %v3768 = vand.u32 %v3767, 3
      %vm3769 = vcmp.lt.s32.totalorder %v3768, 2
      %vm3770 = vcmp.eq.s32.totalorder %v3768, 0
      %v3771 = vxor.u32 %v3765, 2147483648
      %v3772 = vsel %vm3770, %v3764, %v3771
      %vm3773 = vcmp.eq.s32.totalorder %v3768, 2
      %v3774 = vxor.u32 %v3764, 2147483648
      %v3775 = vsel %vm3773, %v3774, %v3765
      %v3776 = vsel %vm3769, %v3772, %v3775
      %v3777 = vsel %vm3766, nan, %v3776
      %v3778 = vand.u32 2147483647, %v2217
      %vm3779 = vcmp.le.f32.partialorder %v3778, 0.7853982
      %vm3780 = vcmp.lt.s32.totalorder %v2217, 0
      %v3781 = vand.u32 %v2217, 2139095040
      %v3782 = vshrl.u32 %v3781, 23
      %v3783 = vsub.s32 %v3782, 127
      %v3784 = vand.u32 2147483647, %v2217
      %v3785 = vand.u32 %v3784, 8388607
      %v3786 = vor.u32 %v3785, 8388608
      %v3787 = vsub.s32 0, %v3786
      %v3788 = vadd.s32 %v3783, 1
      %vm3789 = vcmp.gt.s32.totalorder %v3788, 0
      %v3790 = vsel %vm3789, %v3788, 0
      %v3791 = vshrl.u32 %v3790, 5
      %v3792 = vand.u32 %v3790, 31
      %v3793 = vsub.s32 32, %v3792
      %v3794 = vshrl.u32 683565275, %v3793
      %v3795 = vshll.u32 683565275, %v3792
      %v3796 = vshrl.u32 2475754826, %v3793
      %v3797 = vor.u32 %v3795, %v3796
      %v3798 = vshll.u32 2475754826, %v3792
      %v3799 = vshrl.u32 2131351028, %v3793
      %v3800 = vor.u32 %v3798, %v3799
      %v3801 = vshll.u32 2131351028, %v3792
      %v3802 = vshrl.u32 2102212464, %v3793
      %v3803 = vor.u32 %v3801, %v3802
      %v3804 = vshll.u32 2102212464, %v3792
      %v3805 = vshrl.u32 920167782, %v3793
      %v3806 = vor.u32 %v3804, %v3805
      %v3807 = vshll.u32 920167782, %v3792
      %v3808 = vshrl.u32 1326507024, %v3793
      %v3809 = vor.u32 %v3807, %v3808
      %vm3810 = vcmp.lt.s32.totalorder %v3791, 1
      %vm3811 = vcmp.lt.s32.totalorder %v3791, 2
      %vm3812 = vcmp.lt.s32.totalorder %v3791, 3
      %vm3813 = vcmp.lt.s32.totalorder %v3791, 4
      %v3814 = vsel %vm3810, %v3794, %v3797
      %v3815 = vsel %vm3813, %v3803, 2102212464
      %v3816 = vsel %vm3812, %v3800, %v3815
      %v3817 = vsel %vm3811, %v3814, %v3816
      %v3818 = vsel %vm3810, %v3797, %v3800
      %v3819 = vsel %vm3813, %v3806, 920167782
      %v3820 = vsel %vm3812, %v3803, %v3819
      %v3821 = vsel %vm3811, %v3818, %v3820
      %v3822 = vsel %vm3810, %v3800, %v3803
      %v3823 = vsel %vm3813, %v3809, 1326507024
      %v3824 = vsel %vm3812, %v3806, %v3823
      %v3825 = vsel %vm3811, %v3822, %v3824
      %v3826 = vshll.u32 %v3786, 8
      %v3827 = vmul.u32.u64.compose %v3826, %v3825
      %v3828 = vextract.low.u32 %v3827
      %v3829 = vextract.high.u32 %v3827
      %v3830 = vmul.u32.u64.compose %v3826, %v3821
      %v3831 = vextract.low.u32 %v3830
      %v3832 = vextract.high.u32 %v3830
      %v3833 = vmul.u32 %v3826, %v3817
      %v3834 = vadd.s32 %v3829, %v3831
      %vm3835 = vc.u32 %v3829, %v3831
      %v3836 = vadd.s32 %v3832, 1
      %v3837 = vsel %vm3835, %v3836, %v3832
      %v3838 = vadd.s32 %v3833, %v3837
      %v3839 = vadd.s32 %v3838, 536870912
      %v3840 = vshrl.u32 %v3839, 30
      %v3841 = vshll.u32 %v3840, 30
      %v3842 = vsub.s32 %v3838, %v3841
      %vm3843 = vcmp.lt.s32.totalorder %v3842, 0
      %v3844 = vsub.s32 0, %v3842
      %v3845 = vsel %vm3843, %v3844, %v3842
      %v3846 = vclz %v3845
      %v3847 = vsub.s32 %v3846, 2
      %vm3848 = vcmp.gt.s32.totalorder 0, %v3847
      %v3849 = vsel %vm3848, 0, %v3847
      %v3850 = vsub.s32 32, %v3849
      %v3851 = vshll.u32 %v3842, %v3849
      %v3852 = vshrl.u32 %v3834, %v3850
      %v3853 = vor.u32 %v3851, %v3852
      %v3854 = vsub.s32 4294967266, %v3849
      %v3855 = vadd.s32 %v3854, 127
      %v3856 = vshll.u32 %v3855, 23
      %v3857 = vor.u32 4788187, %v3856
      %v3858 = vand.u32 2147483647, %v3857
      %v3860 = vcvt.s32.f32 %v3853
      %v3861 = vmul.f32 %v3860, %v3858
      %v3862 = vxor.u32 %v3861, 2147483648
      %v3863 = vsel %vm3780, %v3862, %v3861
      %v3864 = vsub.s32 4, %v3840
      %v3865 = vsel %vm3780, %v3864, %v3840
      %v3866 = vsel %vm3779, %v2217, %v3863
      %v3867 = vsel %vm3779, 0, %v3865
      %v3868 = vcosq.f32.pop %v3866
      %v3869 = vsinq.f32.pop %v3866
      %vm3870 = vweird.f32 %v2217
      %v3871 = vadd.s32 %v3867, 3
      %v3872 = vand.u32 %v3871, 3
      %vm3873 = vcmp.lt.s32.totalorder %v3872, 2
      %vm3874 = vcmp.eq.s32.totalorder %v3872, 0
      %v3875 = vxor.u32 %v3869, 2147483648
      %v3876 = vsel %vm3874, %v3868, %v3875
      %vm3877 = vcmp.eq.s32.totalorder %v3872, 2
      %v3878 = vxor.u32 %v3868, 2147483648
      %v3879 = vsel %vm3877, %v3878, %v3869
      %v3880 = vsel %vm3873, %v3876, %v3879
      %v3881 = vsel %vm3870, nan, %v3880
      %3882 = vst.msk [vmem:[%s213] sm:$0xff] %vm2119, %v2321
      %3883 = vst.msk [vmem:[%s213 + $0x8] sm:$0xff] %vm2119, %v2425
      %3884 = vst.msk [vmem:[%s213 + $0x10] sm:$0xff] %vm2119, %v2529
      %3885 = vst.msk [vmem:[%s213 + $0x18] sm:$0xff] %vm2119, %v2633
      %3886 = vst.msk [vmem:[%s213 + $0x20] sm:$0xff] %vm2119, %v2737
      %3887 = vst.msk [vmem:[%s213 + $0x28] sm:$0xff] %vm2119, %v2841
      %3888 = vst.msk [vmem:[%s213 + $0x30] sm:$0xff] %vm2119, %v2945
      %3889 = vst.msk [vmem:[%s213 + $0x38] sm:$0xff] %vm2119, %v3049
      %3890 = vst.msk [vmem:[%s213 + $0x40] sm:$0xff] %vm2119, %v3153
      %3891 = vst.msk [vmem:[%s213 + $0x48] sm:$0xff] %vm2119, %v3257
      %3892 = vst.msk [vmem:[%s213 + $0x50] sm:$0xff] %vm2119, %v3361
      %3893 = vst.msk [vmem:[%s213 + $0x58] sm:$0xff] %vm2119, %v3465
      %3894 = vst.msk [vmem:[%s213 + $0x60] sm:$0xff] %vm2119, %v3569
      %3895 = vst.msk [vmem:[%s213 + $0x68] sm:$0xff] %vm2119, %v3673
      %3896 = vst.msk [vmem:[%s213 + $0x70] sm:$0xff] %vm2119, %v3777
      %3897 = vst.msk [vmem:[%s213 + $0x78] sm:$0xff] %vm2119, %v3881
      %s3898 = smul.u32 16, %s16
      %p3899 = scmp.lt.s32.totalorder %s3898, 63
      %s3900 = scalar_select %p3899, %s3898, 63
      %s3901 = smul.addr %s3900, 8
      %s3902 = scalar_lea.vmem %s3, %s3901
      %s3903 = smul.u32 16, %s16
      %p3904 = scmp.lt.s32.totalorder %s3903, 63
      %s3905 = scalar_select %p3904, %s3903, 63
      %s3906 = smul.addr %s3905, 8
      %s3907 = scalar_lea.vmem %s4, %s3906
      // Predicated region
      $region33: #{tpu_custom_call.1} parent=31 // pred_check
        %p3908 = pneg %p102
      $region34: #{tpu_custom_call.1} parent=31 // pred_check_branch
        %3910 = sbr.rel (%p3908) target = $region36
      $region35: #{tpu_custom_call.1} parent=31 // pred_region
        %s3911 = smul.u32 16, %s16
      $region36: #{tpu_custom_call.1} parent=31 // pred_fallthru
        _
      // Predicated region
      $region37: #{tpu_custom_call.1} parent=31 // pred_check
        %p3912 = pneg %p128
      $region38: #{tpu_custom_call.1} parent=31 // pred_check_branch
        %3914 = sbr.rel (%p3912) target = $region40
      $region39: #{tpu_custom_call.1} parent=31 // pred_region
        %s3915 = smul.u32 16, %s16
      $region40: #{tpu_custom_call.1} parent=31 // pred_fallthru
        _
    $region32: #{tpu_custom_call.1} parent=5 // pred_fallthru
      _
    %p3916 = scmp.le.s32.totalorder 2, %s11
    // Predicated region
    $region41: #{tpu_custom_call.1} parent=5 // pred_check
      %p3917 = pneg %p3916
    $region42: #{tpu_custom_call.1} parent=5 // pred_check_branch
      %3919 = sbr.rel (%p3917) target = $region44
    $region43: #{tpu_custom_call.1} parent=5 // pred_region
      %s3920 = ssub.s32 %s11, 2
      // Predicated region
      $region45: #{tpu_custom_call.1} parent=43 // pred_check
        %p3921 = pneg %p108
      $region46: #{tpu_custom_call.1} parent=43 // pred_check_branch
        %3923 = sbr.rel (%p3921) target = $region48
      $region47: #{tpu_custom_call.1} parent=43 // pred_region
        %s3924 = smul.u32 16, %s17
        %p3925 = scmp.lt.s32.totalorder %s3924, 63
        %s3926 = scalar_select %p3925, %s3924, 63
        %s3927 = smul.addr %s3926, 8
        %s3928 = scalar_lea.vmem %s3, %s3927
      $region48: #{tpu_custom_call.1} parent=43 // pred_fallthru
        _
      // Predicated region
      $region49: #{tpu_custom_call.1} parent=43 // pred_check
        %p3929 = pneg %p134
      $region50: #{tpu_custom_call.1} parent=43 // pred_check_branch
        %3931 = sbr.rel (%p3929) target = $region52
      $region51: #{tpu_custom_call.1} parent=43 // pred_region
        %s3932 = smul.u32 16, %s17
        %p3933 = scmp.lt.s32.totalorder %s3932, 63
        %s3934 = scalar_select %p3933, %s3932, 63
        %s3935 = smul.addr %s3934, 8
        %s3936 = scalar_lea.vmem %s4, %s3935
      $region52: #{tpu_custom_call.1} parent=43 // pred_fallthru
        _
    $region44: #{tpu_custom_call.1} parent=5 // pred_fallthru
      _
  $region6: #{tpu_custom_call.1} parent=0 // loop_footer
    %s15 = sadd.s32 1, %s11
  $region7: #{tpu_custom_call.1} parent=0 // loop_footer_branch
    %10 = sbr.rel target = $region3
  $region8: #{tpu_custom_call.1} parent=0 // loop_exit
    _

</llo_original>
